<compile_context>
chip_gen: v7x
topology: tpu7x:2x2x1
jax: 0.10.0
libtpu: 0.0.40
codegen_flags: <defaults>
</compile_context>

<pallas_src>
import functools

import numpy as np
import jax
import jax.numpy as jnp
from jax.experimental import pallas as pl
from jax.experimental.pallas import tpu as pltpu

EPS = 1e-6          # TODO(synk): confirm EPS matches the reference VN activation.
NEG_SLOPE = 0.2
LANE = 128


# --------------------------------------------------------------------------- #
# In-kernel helpers (operate on an xyz-stacked (3*TB, C) vector stream).
# --------------------------------------------------------------------------- #
def _mm(a, b):
    """MXU matmul: bf16 operands (weights already bf16), f32 accumulate."""
    return jnp.dot(a.astype(jnp.bfloat16), b.astype(jnp.bfloat16),
                   preferred_element_type=jnp.float32)


def _leaky(x):
    return jnp.where(x >= 0, x, NEG_SLOPE * x)


def _vec_linear(v, s, wv_cat, ws_cat, b_cat):
    """VecLinear(mode='so3') with column-packed weights.

    v: (3*TB, C) rows [0:TB)=x, [TB:2TB)=y, [2TB:3TB)=z (padded lanes are exactly 0)
    s: (TB, C)
    wv_cat: (C, 3C) = [W_v | W_a | W_d]   ws_cat: (C, 2C) = [W_sv | W_ss]   b_cat: (1, 2C)
      v' = (W_v v) * (W_sv s + b_sv);   s' = <W_a v, W_d v>_xyz + W_ss s + b_ss
    """
    tb, c = s.shape
    vm = _mm(v, wv_cat)                            # (3TB, 3C): [W_v v | W_a v | W_d v]
    sm = _mm(s, ws_cat) + b_cat                    # (TB, 2C):  [gate | W_ss s + b_ss]
    gate = sm[:, :c]
    ad = vm[:, c:2 * c] * vm[:, 2 * c:]            # per-axis a*d (elementwise)
    s2 = ad[:tb] + ad[tb:2 * tb] + ad[2 * tb:] + sm[:, c:]
    v2 = vm[:, :c] * jnp.tile(gate, (3, 1))
    return v2, s2


def _vn_act(v, s, wdir):
    """VN LeakyReLU along a learned direction (direction never normalized/materialized)."""
    tb, c = s.shape
    q = _mm(v, wdir)                               # (3TB, C) learned (unnormalized) direction
    qx, qy, qz = q[:tb], q[tb:2 * tb], q[2 * tb:]
    vx, vy, vz = v[:tb], v[tb:2 * tb], v[2 * tb:]
    inv = jax.lax.rsqrt(qx * qx + qy * qy + qz * qz + EPS)   # 1/|q|
    proj = (vx * qx + vy * qy + vz * qz) * inv               # <v, q/|q|>
    scale = (_leaky(proj) - proj) * inv                      # (act(p) - p) / |q|
    return v + jnp.tile(scale, (3, 1)) * q, _leaky(s)


# --------------------------------------------------------------------------- #
# The single fused kernel: Fourier embed + concat + all VecLNA layers + head.
# --------------------------------------------------------------------------- #
def _fused_kernel(n_hidden, skips, latent_dim, num_bands,
                  v_ref, s_ref, t_ref, freq_ref, *rest):
    n_w = 4 * n_hidden + 3                  # per hidden layer: Wv_cat, Ws_cat, b_cat, W_dir; head: 3
    v_out_ref = rest[n_w]
    s_out_ref = rest[n_w + 1]

    _, tb, cpad = v_ref.shape
    v = v_ref[...].reshape(3 * tb, cpad)    # free sublane-major merge (tb % 8 == 0)
    s = s_ref[...]                          # (TB, cpad)
    t = t_ref[...]                          # (TB, 1)
    freq = freq_ref[...]                    # (1, cpad): 2*pi*[w, w] pre-placed at lanes [L, L+2nb)

    # FourierFeatures written directly into their lanes: emb = [cos(2pi t w), sin(2pi t w)].
    ang = t * freq                          # broadcasted outer product on the VPU
    lane = jax.lax.broadcasted_iota(jnp.int32, ang.shape, 1)
    emb = jnp.where(lane < latent_dim + num_bands, jnp.cos(ang), jnp.sin(ang))
    emb = jnp.where(jnp.logical_and(lane >= latent_dim,
                                    lane < latent_dim + 2 * num_bands), emb, 0.0)

    # cat([z, t_emb]): the t_emb lanes of the padded inputs are zero, so a plain add realizes the
    # concat.  Matches the reference: t_emb_x = t_emb.unsqueeze(2).repeat(1,1,3) (same emb per axis).
    s = s + emb
    v = v + jnp.tile(emb, (3, 1))

    widx = 0
    for li in range(n_hidden):              # static unroll; weights stay VMEM-resident
        wv_cat = rest[widx][...]
        ws_cat = rest[widx + 1][...]
        b_cat = rest[widx + 2][...]
        wdir = rest[widx + 3][...]
        widx += 4
        nv, ns = _vec_linear(v, s, wv_cat, ws_cat, b_cat)
        nv, ns = _vn_act(nv, ns, wdir)
        if skips[li]:
            nv, ns = nv + v, ns + s
        v, s = nv, ns

    ov, os_ = _vec_linear(v, s, rest[widx][...], rest[widx + 1][...], rest[widx + 2][...])

    # Lane-dense 128-wide stores; bf16 halves the padded output HBM traffic.
    v_out_ref[...] = ov.reshape(3, tb, cpad).astype(v_out_ref.dtype)
    s_out_ref[...] = os_.astype(s_out_ref.dtype)


# --------------------------------------------------------------------------- #
# Deterministic parameter initialization (synthetic weights, no checkpoint),
# pre-packed / pre-padded for the fused kernel.
# --------------------------------------------------------------------------- #
def init_latent_diffusion_params(key, latent_dim, hidden_dims, scalar_hidden_dims,
                                 max_freq, num_bands, std=0.2):
    del max_freq  # TODO(synk): see FourierFeatures note at top.
    t_emb_dim = 2 * num_bands
    d0 = latent_dim + t_emb_dim
    max_dim = max([d0, latent_dim] + list(hidden_dims) + list(scalar_hidden_dims))
    cpad = LANE * int(np.ceil(max_dim / LANE))

    n_hidden = len(hidden_dims)
    keys = jax.random.split(key, n_hidden + 2)

    def w(k, shape, fan_in):
        return jax.random.normal(k, shape, jnp.float32) / np.sqrt(float(fan_in))

    def pack_cols(blocks):
        """Column-pack blocks into a zero-padded (cpad, len*cpad) bf16 matrix.

        Zero padding keeps padded lanes of every activation exactly 0 through all layers.
        """
        out = jnp.zeros((cpad, cpad * len(blocks)), jnp.float32)
        for j, blk in enumerate(blocks):
            out = out.at[:blk.shape[0], j * cpad:j * cpad + blk.shape[1]].set(blk)
        return out.astype(jnp.bfloat16)

    flat, skips = [], []
    for i in range(n_hidden):
        if i == 0:
            v_in = s_in = d0
        else:
            v_in, s_in = hidden_dims[i - 1], scalar_hidden_dims[i - 1]
        v_out, s_out = hidden_dims[i], scalar_hidden_dims[i]
        skips.append(v_in == v_out and s_in == s_out)
        ks = jax.random.split(keys[i], 6)
        flat += [
            pack_cols([w(ks[0], (v_in, v_out), v_in),          # W_v
                       w(ks[1], (v_in, s_out), v_in),          # W_a
                       w(ks[2], (v_in, s_out), v_in)]),        # W_d
            pack_cols([w(ks[3], (s_in, v_out), s_in),          # W_sv (invariant gate)
                       w(ks[4], (s_in, s_out), s_in)]),        # W_ss
            jnp.zeros((1, 2 * cpad), jnp.float32),              # [b_sv | b_ss]
            pack_cols([w(ks[5], (v_out, v_out), v_out)]),       # W_dir (VN activation direction)
        ]

    # Head: VecLinear (no activation).
    kh = jax.random.split(keys[n_hidden], 5)
    v_in, s_in = hidden_dims[-1], scalar_hidden_dims[-1]
    flat += [
        pack_cols([w(kh[0], (v_in, latent_dim), v_in),
                   w(kh[1], (v_in, latent_dim), v_in),
                   w(kh[2], (v_in, latent_dim), v_in)]),
        pack_cols([w(kh[3], (s_in, latent_dim), s_in),
                   w(kh[4], (s_in, latent_dim), s_in)]),
        jnp.zeros((1, 2 * cpad), jnp.float32),
    ]

    # Gaussian Fourier frequencies, 2*pi*[w, w], pre-placed at lanes [latent, latent+2nb).
    fw = jax.random.normal(keys[-1], (num_bands,), jnp.float32) * std
    freq_row = jnp.zeros((1, cpad), jnp.float32).at[
        0, latent_dim:latent_dim + t_emb_dim].set((2.0 * np.pi) * jnp.concatenate([fw, fw]))

    return dict(flat_weights=flat, skips=tuple(skips), freq_row=freq_row,
                num_bands=num_bands, latent_dim=latent_dim, cpad=cpad)


def _choose_tb(batch):
    """Batch tile: multiple of 16 (bf16-store friendly), capped at 256, aiming at >= 2 grid steps."""
    tb = 256
    while tb > 16 and tb * 2 > batch:
        tb //= 2
    return tb


# --------------------------------------------------------------------------- #
# Forward pass: everything except tiny layout plumbing runs in the fused kernel.
# --------------------------------------------------------------------------- #
def latent_diffusion_forward(params, z_so3, z_inv, t):
    """z_so3: (B, latent, 3), z_inv: (B, latent), t: (B,) -> same-shaped predictions."""
    B, L, _ = z_so3.shape
    cpad = params["cpad"]
    nb = params["num_bands"]
    skips = params["skips"]
    n_hidden = len(skips)
    flat_w = params["flat_weights"]

    TB = _choose_tb(B)
    n_blocks = max((B + TB - 1) // TB, 2)   # >= 2 parallel steps so v7x's second TC isn't idle
    B_pad = n_blocks * TB

    # Batch-pad to B_pad rows, zero-pad channels to cpad lanes (padding survives all layers as 0).
    v_in = jnp.zeros((3, B_pad, cpad), jnp.float32)
    v_in = v_in.at[:, :B, :L].set(jnp.transpose(z_so3, (2, 0, 1)).astype(jnp.float32))
    s_in = jnp.zeros((B_pad, cpad), jnp.float32).at[:B, :L].set(z_inv.astype(jnp.float32))
    t_in = jnp.zeros((B_pad, 1), jnp.float32).at[:B, 0].set(t.astype(jnp.float32))

    kern = functools.partial(_fused_kernel, n_hidden, skips, L, nb)

    in_specs = [
        pl.BlockSpec((3, TB, cpad), lambda b: (0, b, 0)),
        pl.BlockSpec((TB, cpad), lambda b: (b, 0)),
        pl.BlockSpec((TB, 1), lambda b: (b, 0)),
        pl.BlockSpec((1, cpad), lambda b: (0, 0)),
    ]
    # Weights: constant index_map -> same VMEM block reused for every (parallel) grid step.
    # TODO(synk): mark pipeline_mode=pl.Buffered(1) / stream weights per-layer when cpad or depth
    # grows enough to pressure v7x's 64 MiB VMEM; footprint here is < 1 MiB so it is left default.
    in_specs += [pl.BlockSpec(wa.shape, lambda b, nd=wa.ndim: (0,) * nd) for wa in flat_w]

    out_specs = (
        pl.BlockSpec((3, TB, cpad), lambda b: (0, b, 0)),     # lane-dense 128-wide stores
        pl.BlockSpec((TB, cpad), lambda b: (b, 0)),
    )
    out_shape = (
        jax.ShapeDtypeStruct((3, B_pad, cpad), jnp.bfloat16),
        jax.ShapeDtypeStruct((B_pad, cpad), jnp.bfloat16),
    )

    # VMEM budget: double-buffered weights + IO blocks + live full-tile temporaries, with headroom.
    weight_b = sum(int(np.prod(wa.shape)) * wa.dtype.itemsize for wa in flat_w)
    io_b = 4 * (3 * TB * cpad + TB * cpad + TB + cpad) + 2 * (3 * TB * cpad + TB * cpad)
    tmp_b = 4 * 24 * TB * cpad
    vmem_limit = int(min(48 * 2 ** 20, max(2 * (2 * weight_b + 2 * io_b + tmp_b), 32 * 2 ** 20)))

    v_pad, s_pad = pl.pallas_call(
        kern,
        grid=(n_blocks,),
        in_specs=in_specs,
        out_specs=out_specs,
        out_shape=out_shape,
        compiler_params=pltpu.CompilerParams(
            dimension_semantics=("parallel",),
            vmem_limit_bytes=vmem_limit),
    )(v_in, s_in, t_in, params["freq_row"], *flat_w)

    # TODO(synk): downstream consumers could take the xyz-major bf16 slab directly and skip this
    # slice+transpose pass; kept here to honor the module's (B, latent, 3)/(B, latent) contract.
    pred_z_so3 = jnp.transpose(v_pad[:, :B, :L], (1, 2, 0)).astype(jnp.float32)
    pred_z_inv = s_pad[:B, :L].astype(jnp.float32)
    return pred_z_so3, pred_z_inv


if __name__ == "__main__":
    # Small, deterministic example shapes consistent with the module.
    latent_dim = 24
    hidden_dims = [32, 32]
    scalar_hidden_dims = [32, 32]
    max_freq, num_bands, std = 4, 4, 0.2   # t_emb_dim = 8 -> 24 + 8 = 32 (skip connections active)
    B = 2

    key = jax.random.PRNGKey(0)
    kp, kz, ki, kt = jax.random.split(key, 4)

    params = init_latent_diffusion_params(kp, latent_dim, hidden_dims,
                                          scalar_hidden_dims, max_freq, num_bands, std)

    z_so3 = jax.random.normal(kz, (B, latent_dim, 3), jnp.float32)
    z_inv = jax.random.normal(ki, (B, latent_dim), jnp.float32)
    t = jax.random.uniform(kt, (B,), jnp.float32)

    @jax.jit
    def fwd(a, b, c):
        return latent_diffusion_forward(params, a, b, c)

    pred_z_so3, pred_z_inv = fwd(z_so3, z_inv, t)
    jax.block_until_ready((pred_z_so3, pred_z_inv))

    assert pred_z_so3.shape == (B, latent_dim, 3)
    assert pred_z_inv.shape == (B, latent_dim)
    assert bool(jnp.all(jnp.isfinite(pred_z_so3))) and bool(jnp.all(jnp.isfinite(pred_z_inv)))
    print("KERNEL_OK")
</pallas_src>

<mosaic_0001>
module attributes {stable_mosaic.version = 11 : i64} {
  func.func @_fused_kernel(%arg0: i32, %arg1: memref<3x16x128xf32, #tpu.memory_space<vmem>>, %arg2: memref<16x128xf32, #tpu.memory_space<vmem>>, %arg3: memref<16x1xf32, #tpu.memory_space<vmem>>, %arg4: memref<1x128xf32, #tpu.memory_space<vmem>>, %arg5: memref<128x384xbf16, #tpu.memory_space<vmem>>, %arg6: memref<128x256xbf16, #tpu.memory_space<vmem>>, %arg7: memref<1x256xf32, #tpu.memory_space<vmem>>, %arg8: memref<128x128xbf16, #tpu.memory_space<vmem>>, %arg9: memref<128x384xbf16, #tpu.memory_space<vmem>>, %arg10: memref<128x256xbf16, #tpu.memory_space<vmem>>, %arg11: memref<1x256xf32, #tpu.memory_space<vmem>>, %arg12: memref<128x128xbf16, #tpu.memory_space<vmem>>, %arg13: memref<128x384xbf16, #tpu.memory_space<vmem>>, %arg14: memref<128x256xbf16, #tpu.memory_space<vmem>>, %arg15: memref<1x256xf32, #tpu.memory_space<vmem>>, %arg16: memref<3x16x128xbf16, #tpu.memory_space<vmem>>, %arg17: memref<16x128xbf16, #tpu.memory_space<vmem>>) attributes {dimension_semantics = [#tpu.dimension_semantics<parallel>], iteration_bounds = array<i64: 2>, scalar_prefetch = 0 : i64, scratch_operands = 0 : i64, tpu.core_type = #tpu.core_type<tc>, window_params = [{transform_indices = @transform_0, window_bounds = array<i64: 3, 16, 128>}, {transform_indices = @transform_1, window_bounds = array<i64: 16, 128>}, {transform_indices = @transform_2, window_bounds = array<i64: 16, 1>}, {pipeline_mode = #tpu.pipeline_mode<synchronous>, transform_indices = @transform_3, window_bounds = array<i64: 1, 128>}, {pipeline_mode = #tpu.pipeline_mode<synchronous>, transform_indices = @transform_4, window_bounds = array<i64: 128, 384>}, {pipeline_mode = #tpu.pipeline_mode<synchronous>, transform_indices = @transform_5, window_bounds = array<i64: 128, 256>}, {pipeline_mode = #tpu.pipeline_mode<synchronous>, transform_indices = @transform_6, window_bounds = array<i64: 1, 256>}, {pipeline_mode = #tpu.pipeline_mode<synchronous>, transform_indices = @transform_7, window_bounds = array<i64: 128, 128>}, {pipeline_mode = #tpu.pipeline_mode<synchronous>, transform_indices = @transform_8, window_bounds = array<i64: 128, 384>}, {pipeline_mode = #tpu.pipeline_mode<synchronous>, transform_indices = @transform_9, window_bounds = array<i64: 128, 256>}, {pipeline_mode = #tpu.pipeline_mode<synchronous>, transform_indices = @transform_10, window_bounds = array<i64: 1, 256>}, {pipeline_mode = #tpu.pipeline_mode<synchronous>, transform_indices = @transform_11, window_bounds = array<i64: 128, 128>}, {pipeline_mode = #tpu.pipeline_mode<synchronous>, transform_indices = @transform_12, window_bounds = array<i64: 128, 384>}, {pipeline_mode = #tpu.pipeline_mode<synchronous>, transform_indices = @transform_13, window_bounds = array<i64: 128, 256>}, {pipeline_mode = #tpu.pipeline_mode<synchronous>, transform_indices = @transform_14, window_bounds = array<i64: 1, 256>}, {transform_indices = @transform_15, window_bounds = array<i64: 3, 16, 128>}, {transform_indices = @transform_16, window_bounds = array<i64: 16, 128>}]} {
    %c0 = arith.constant 0 : index
    %c0_0 = arith.constant 0 : index
    %c0_1 = arith.constant 0 : index
    %0 = vector.load %arg1[%c0, %c0_0, %c0_1] : memref<3x16x128xf32, #tpu.memory_space<vmem>>, vector<3x16x128xf32>
    %1 = vector.shape_cast %0 : vector<3x16x128xf32> to vector<48x128xf32>
    %c0_2 = arith.constant 0 : index
    %c0_3 = arith.constant 0 : index
    %2 = vector.load %arg2[%c0_2, %c0_3] : memref<16x128xf32, #tpu.memory_space<vmem>>, vector<16x128xf32>
    %c0_4 = arith.constant 0 : index
    %c0_5 = arith.constant 0 : index
    %3 = vector.load %arg3[%c0_4, %c0_5] : memref<16x1xf32, #tpu.memory_space<vmem>>, vector<16x1xf32>
    %c0_6 = arith.constant 0 : index
    %c0_7 = arith.constant 0 : index
    %4 = vector.load %arg4[%c0_6, %c0_7] : memref<1x128xf32, #tpu.memory_space<vmem>>, vector<1x128xf32>
    %5 = vector.broadcast %3 : vector<16x1xf32> to vector<16x128xf32>
    %6 = vector.broadcast %4 : vector<1x128xf32> to vector<16x128xf32>
    %7 = arith.mulf %5, %6 : vector<16x128xf32>
    %8 = tpu.iota {dimensions = array<i32: 1>} : vector<16x128xi32>
    %c28_i32 = arith.constant 28 : i32
    %9 = vector.broadcast %c28_i32 : i32 to vector<16x128xi32>
    %10 = arith.cmpi slt, %8, %9 : vector<16x128xi32>
    %11 = math.cos %7 : vector<16x128xf32>
    %12 = math.sin %7 : vector<16x128xf32>
    %13 = arith.select %10, %11, %12 : vector<16x128xi1>, vector<16x128xf32>
    %c24_i32 = arith.constant 24 : i32
    %14 = vector.broadcast %c24_i32 : i32 to vector<16x128xi32>
    %15 = arith.cmpi sge, %8, %14 : vector<16x128xi32>
    %c32_i32 = arith.constant 32 : i32
    %16 = vector.broadcast %c32_i32 : i32 to vector<16x128xi32>
    %17 = arith.cmpi slt, %8, %16 : vector<16x128xi32>
    %18 = arith.andi %15, %17 : vector<16x128xi1>
    %cst = arith.constant 0.000000e+00 : f32
    %19 = vector.broadcast %cst : f32 to vector<16x128xf32>
    %20 = arith.select %18, %13, %19 : vector<16x128xi1>, vector<16x128xf32>
    %21 = arith.addf %2, %20 : vector<16x128xf32>
    %22 = tpu.concatenate %20, %20, %20 in 0 : vector<16x128xf32>, vector<16x128xf32>, vector<16x128xf32> -> vector<48x128xf32>
    %23 = arith.addf %1, %22 : vector<48x128xf32>
    %c0_8 = arith.constant 0 : index
    %c0_9 = arith.constant 0 : index
    %24 = vector.load %arg5[%c0_8, %c0_9] : memref<128x384xbf16, #tpu.memory_space<vmem>>, vector<128x384xbf16>
    %c0_10 = arith.constant 0 : index
    %c0_11 = arith.constant 0 : index
    %25 = vector.load %arg6[%c0_10, %c0_11] : memref<128x256xbf16, #tpu.memory_space<vmem>>, vector<128x256xbf16>
    %c0_12 = arith.constant 0 : index
    %c0_13 = arith.constant 0 : index
    %26 = vector.load %arg7[%c0_12, %c0_13] : memref<1x256xf32, #tpu.memory_space<vmem>>, vector<1x256xf32>
    %c0_14 = arith.constant 0 : index
    %c0_15 = arith.constant 0 : index
    %27 = vector.load %arg8[%c0_14, %c0_15] : memref<128x128xbf16, #tpu.memory_space<vmem>>, vector<128x128xbf16>
    %28 = arith.truncf %23 : vector<48x128xf32> to vector<48x128xbf16>
    %cst_16 = arith.constant dense<0.000000e+00> : vector<48x384xf32>
    %29 = tpu.matmul %28, %24, %cst_16 {dimension_numbers = #tpu.dot_dimension_numbers<[1], [0], [0], [1], [0, 0, 1, 1], [], []>} : vector<48x128xbf16>, vector<128x384xbf16>, vector<48x384xf32> -> vector<48x384xf32>
    %30 = arith.truncf %21 : vector<16x128xf32> to vector<16x128xbf16>
    %cst_17 = arith.constant dense<0.000000e+00> : vector<16x256xf32>
    %31 = tpu.matmul %30, %25, %cst_17 {dimension_numbers = #tpu.dot_dimension_numbers<[1], [0], [0], [1], [0, 0, 1, 1], [], []>} : vector<16x128xbf16>, vector<128x256xbf16>, vector<16x256xf32> -> vector<16x256xf32>
    %32 = vector.broadcast %26 : vector<1x256xf32> to vector<16x256xf32>
    %33 = arith.addf %31, %32 : vector<16x256xf32>
    %34 = vector.extract_strided_slice %33 {offsets = [0, 0], sizes = [16, 128], strides = [1, 1]} : vector<16x256xf32> to vector<16x128xf32>
    %35 = vector.extract_strided_slice %29 {offsets = [0, 128], sizes = [48, 128], strides = [1, 1]} : vector<48x384xf32> to vector<48x128xf32>
    %36 = vector.extract_strided_slice %29 {offsets = [0, 256], sizes = [48, 128], strides = [1, 1]} : vector<48x384xf32> to vector<48x128xf32>
    %37 = arith.mulf %35, %36 : vector<48x128xf32>
    %38 = vector.extract_strided_slice %37 {offsets = [0, 0], sizes = [16, 128], strides = [1, 1]} : vector<48x128xf32> to vector<16x128xf32>
    %39 = vector.extract_strided_slice %37 {offsets = [16, 0], sizes = [16, 128], strides = [1, 1]} : vector<48x128xf32> to vector<16x128xf32>
    %40 = arith.addf %38, %39 : vector<16x128xf32>
    %41 = vector.extract_strided_slice %37 {offsets = [32, 0], sizes = [16, 128], strides = [1, 1]} : vector<48x128xf32> to vector<16x128xf32>
    %42 = arith.addf %40, %41 : vector<16x128xf32>
    %43 = vector.extract_strided_slice %33 {offsets = [0, 128], sizes = [16, 128], strides = [1, 1]} : vector<16x256xf32> to vector<16x128xf32>
    %44 = arith.addf %42, %43 : vector<16x128xf32>
    %45 = vector.extract_strided_slice %29 {offsets = [0, 0], sizes = [48, 128], strides = [1, 1]} : vector<48x384xf32> to vector<48x128xf32>
    %46 = tpu.concatenate %34, %34, %34 in 0 : vector<16x128xf32>, vector<16x128xf32>, vector<16x128xf32> -> vector<48x128xf32>
    %47 = arith.mulf %45, %46 : vector<48x128xf32>
    %48 = arith.truncf %47 : vector<48x128xf32> to vector<48x128xbf16>
    %cst_18 = arith.constant dense<0.000000e+00> : vector<48x128xf32>
    %49 = tpu.matmul %48, %27, %cst_18 {dimension_numbers = #tpu.dot_dimension_numbers<[1], [0], [0], [1], [0, 0, 1, 1], [], []>} : vector<48x128xbf16>, vector<128x128xbf16>, vector<48x128xf32> -> vector<48x128xf32>
    %50 = vector.extract_strided_slice %49 {offsets = [0, 0], sizes = [16, 128], strides = [1, 1]} : vector<48x128xf32> to vector<16x128xf32>
    %51 = vector.extract_strided_slice %49 {offsets = [16, 0], sizes = [16, 128], strides = [1, 1]} : vector<48x128xf32> to vector<16x128xf32>
    %52 = vector.extract_strided_slice %49 {offsets = [32, 0], sizes = [16, 128], strides = [1, 1]} : vector<48x128xf32> to vector<16x128xf32>
    %53 = vector.extract_strided_slice %47 {offsets = [0, 0], sizes = [16, 128], strides = [1, 1]} : vector<48x128xf32> to vector<16x128xf32>
    %54 = vector.extract_strided_slice %47 {offsets = [16, 0], sizes = [16, 128], strides = [1, 1]} : vector<48x128xf32> to vector<16x128xf32>
    %55 = vector.extract_strided_slice %47 {offsets = [32, 0], sizes = [16, 128], strides = [1, 1]} : vector<48x128xf32> to vector<16x128xf32>
    %56 = arith.mulf %50, %50 : vector<16x128xf32>
    %57 = arith.mulf %51, %51 : vector<16x128xf32>
    %58 = arith.addf %56, %57 : vector<16x128xf32>
    %59 = arith.mulf %52, %52 : vector<16x128xf32>
    %60 = arith.addf %58, %59 : vector<16x128xf32>
    %cst_19 = arith.constant 9.99999997E-7 : f32
    %61 = vector.broadcast %cst_19 : f32 to vector<16x128xf32>
    %62 = arith.addf %60, %61 : vector<16x128xf32>
    %63 = math.rsqrt %62 : vector<16x128xf32>
    %64 = arith.mulf %53, %50 : vector<16x128xf32>
    %65 = arith.mulf %54, %51 : vector<16x128xf32>
    %66 = arith.addf %64, %65 : vector<16x128xf32>
    %67 = arith.mulf %55, %52 : vector<16x128xf32>
    %68 = arith.addf %66, %67 : vector<16x128xf32>
    %69 = arith.mulf %68, %63 : vector<16x128xf32>
    %cst_20 = arith.constant 0.000000e+00 : f32
    %70 = vector.broadcast %cst_20 : f32 to vector<16x128xf32>
    %71 = arith.cmpf oge, %69, %70 : vector<16x128xf32>
    %cst_21 = arith.constant 2.000000e-01 : f32
    %72 = vector.broadcast %cst_21 : f32 to vector<16x128xf32>
    %73 = arith.mulf %72, %69 : vector<16x128xf32>
    %74 = arith.select %71, %69, %73 : vector<16x128xi1>, vector<16x128xf32>
    %75 = arith.subf %74, %69 : vector<16x128xf32>
    %76 = arith.mulf %75, %63 : vector<16x128xf32>
    %77 = tpu.concatenate %76, %76, %76 in 0 : vector<16x128xf32>, vector<16x128xf32>, vector<16x128xf32> -> vector<48x128xf32>
    %78 = arith.mulf %77, %49 : vector<48x128xf32>
    %79 = arith.addf %47, %78 : vector<48x128xf32>
    %cst_22 = arith.constant 0.000000e+00 : f32
    %80 = vector.broadcast %cst_22 : f32 to vector<16x128xf32>
    %81 = arith.cmpf oge, %44, %80 : vector<16x128xf32>
    %cst_23 = arith.constant 2.000000e-01 : f32
    %82 = vector.broadcast %cst_23 : f32 to vector<16x128xf32>
    %83 = arith.mulf %82, %44 : vector<16x128xf32>
    %84 = arith.select %81, %44, %83 : vector<16x128xi1>, vector<16x128xf32>
    %85 = arith.addf %79, %23 : vector<48x128xf32>
    %86 = arith.addf %84, %21 : vector<16x128xf32>
    %c0_24 = arith.constant 0 : index
    %c0_25 = arith.constant 0 : index
    %87 = vector.load %arg9[%c0_24, %c0_25] : memref<128x384xbf16, #tpu.memory_space<vmem>>, vector<128x384xbf16>
    %c0_26 = arith.constant 0 : index
    %c0_27 = arith.constant 0 : index
    %88 = vector.load %arg10[%c0_26, %c0_27] : memref<128x256xbf16, #tpu.memory_space<vmem>>, vector<128x256xbf16>
    %c0_28 = arith.constant 0 : index
    %c0_29 = arith.constant 0 : index
    %89 = vector.load %arg11[%c0_28, %c0_29] : memref<1x256xf32, #tpu.memory_space<vmem>>, vector<1x256xf32>
    %c0_30 = arith.constant 0 : index
    %c0_31 = arith.constant 0 : index
    %90 = vector.load %arg12[%c0_30, %c0_31] : memref<128x128xbf16, #tpu.memory_space<vmem>>, vector<128x128xbf16>
    %91 = arith.truncf %85 : vector<48x128xf32> to vector<48x128xbf16>
    %cst_32 = arith.constant dense<0.000000e+00> : vector<48x384xf32>
    %92 = tpu.matmul %91, %87, %cst_32 {dimension_numbers = #tpu.dot_dimension_numbers<[1], [0], [0], [1], [0, 0, 1, 1], [], []>} : vector<48x128xbf16>, vector<128x384xbf16>, vector<48x384xf32> -> vector<48x384xf32>
    %93 = arith.truncf %86 : vector<16x128xf32> to vector<16x128xbf16>
    %cst_33 = arith.constant dense<0.000000e+00> : vector<16x256xf32>
    %94 = tpu.matmul %93, %88, %cst_33 {dimension_numbers = #tpu.dot_dimension_numbers<[1], [0], [0], [1], [0, 0, 1, 1], [], []>} : vector<16x128xbf16>, vector<128x256xbf16>, vector<16x256xf32> -> vector<16x256xf32>
    %95 = vector.broadcast %89 : vector<1x256xf32> to vector<16x256xf32>
    %96 = arith.addf %94, %95 : vector<16x256xf32>
    %97 = vector.extract_strided_slice %96 {offsets = [0, 0], sizes = [16, 128], strides = [1, 1]} : vector<16x256xf32> to vector<16x128xf32>
    %98 = vector.extract_strided_slice %92 {offsets = [0, 128], sizes = [48, 128], strides = [1, 1]} : vector<48x384xf32> to vector<48x128xf32>
    %99 = vector.extract_strided_slice %92 {offsets = [0, 256], sizes = [48, 128], strides = [1, 1]} : vector<48x384xf32> to vector<48x128xf32>
    %100 = arith.mulf %98, %99 : vector<48x128xf32>
    %101 = vector.extract_strided_slice %100 {offsets = [0, 0], sizes = [16, 128], strides = [1, 1]} : vector<48x128xf32> to vector<16x128xf32>
    %102 = vector.extract_strided_slice %100 {offsets = [16, 0], sizes = [16, 128], strides = [1, 1]} : vector<48x128xf32> to vector<16x128xf32>
    %103 = arith.addf %101, %102 : vector<16x128xf32>
    %104 = vector.extract_strided_slice %100 {offsets = [32, 0], sizes = [16, 128], strides = [1, 1]} : vector<48x128xf32> to vector<16x128xf32>
    %105 = arith.addf %103, %104 : vector<16x128xf32>
    %106 = vector.extract_strided_slice %96 {offsets = [0, 128], sizes = [16, 128], strides = [1, 1]} : vector<16x256xf32> to vector<16x128xf32>
    %107 = arith.addf %105, %106 : vector<16x128xf32>
    %108 = vector.extract_strided_slice %92 {offsets = [0, 0], sizes = [48, 128], strides = [1, 1]} : vector<48x384xf32> to vector<48x128xf32>
    %109 = tpu.concatenate %97, %97, %97 in 0 : vector<16x128xf32>, vector<16x128xf32>, vector<16x128xf32> -> vector<48x128xf32>
    %110 = arith.mulf %108, %109 : vector<48x128xf32>
    %111 = arith.truncf %110 : vector<48x128xf32> to vector<48x128xbf16>
    %cst_34 = arith.constant dense<0.000000e+00> : vector<48x128xf32>
    %112 = tpu.matmul %111, %90, %cst_34 {dimension_numbers = #tpu.dot_dimension_numbers<[1], [0], [0], [1], [0, 0, 1, 1], [], []>} : vector<48x128xbf16>, vector<128x128xbf16>, vector<48x128xf32> -> vector<48x128xf32>
    %113 = vector.extract_strided_slice %112 {offsets = [0, 0], sizes = [16, 128], strides = [1, 1]} : vector<48x128xf32> to vector<16x128xf32>
    %114 = vector.extract_strided_slice %112 {offsets = [16, 0], sizes = [16, 128], strides = [1, 1]} : vector<48x128xf32> to vector<16x128xf32>
    %115 = vector.extract_strided_slice %112 {offsets = [32, 0], sizes = [16, 128], strides = [1, 1]} : vector<48x128xf32> to vector<16x128xf32>
    %116 = vector.extract_strided_slice %110 {offsets = [0, 0], sizes = [16, 128], strides = [1, 1]} : vector<48x128xf32> to vector<16x128xf32>
    %117 = vector.extract_strided_slice %110 {offsets = [16, 0], sizes = [16, 128], strides = [1, 1]} : vector<48x128xf32> to vector<16x128xf32>
    %118 = vector.extract_strided_slice %110 {offsets = [32, 0], sizes = [16, 128], strides = [1, 1]} : vector<48x128xf32> to vector<16x128xf32>
    %119 = arith.mulf %113, %113 : vector<16x128xf32>
    %120 = arith.mulf %114, %114 : vector<16x128xf32>
    %121 = arith.addf %119, %120 : vector<16x128xf32>
    %122 = arith.mulf %115, %115 : vector<16x128xf32>
    %123 = arith.addf %121, %122 : vector<16x128xf32>
    %cst_35 = arith.constant 9.99999997E-7 : f32
    %124 = vector.broadcast %cst_35 : f32 to vector<16x128xf32>
    %125 = arith.addf %123, %124 : vector<16x128xf32>
    %126 = math.rsqrt %125 : vector<16x128xf32>
    %127 = arith.mulf %116, %113 : vector<16x128xf32>
    %128 = arith.mulf %117, %114 : vector<16x128xf32>
    %129 = arith.addf %127, %128 : vector<16x128xf32>
    %130 = arith.mulf %118, %115 : vector<16x128xf32>
    %131 = arith.addf %129, %130 : vector<16x128xf32>
    %132 = arith.mulf %131, %126 : vector<16x128xf32>
    %cst_36 = arith.constant 0.000000e+00 : f32
    %133 = vector.broadcast %cst_36 : f32 to vector<16x128xf32>
    %134 = arith.cmpf oge, %132, %133 : vector<16x128xf32>
    %cst_37 = arith.constant 2.000000e-01 : f32
    %135 = vector.broadcast %cst_37 : f32 to vector<16x128xf32>
    %136 = arith.mulf %135, %132 : vector<16x128xf32>
    %137 = arith.select %134, %132, %136 : vector<16x128xi1>, vector<16x128xf32>
    %138 = arith.subf %137, %132 : vector<16x128xf32>
    %139 = arith.mulf %138, %126 : vector<16x128xf32>
    %140 = tpu.concatenate %139, %139, %139 in 0 : vector<16x128xf32>, vector<16x128xf32>, vector<16x128xf32> -> vector<48x128xf32>
    %141 = arith.mulf %140, %112 : vector<48x128xf32>
    %142 = arith.addf %110, %141 : vector<48x128xf32>
    %cst_38 = arith.constant 0.000000e+00 : f32
    %143 = vector.broadcast %cst_38 : f32 to vector<16x128xf32>
    %144 = arith.cmpf oge, %107, %143 : vector<16x128xf32>
    %cst_39 = arith.constant 2.000000e-01 : f32
    %145 = vector.broadcast %cst_39 : f32 to vector<16x128xf32>
    %146 = arith.mulf %145, %107 : vector<16x128xf32>
    %147 = arith.select %144, %107, %146 : vector<16x128xi1>, vector<16x128xf32>
    %148 = arith.addf %142, %85 : vector<48x128xf32>
    %149 = arith.addf %147, %86 : vector<16x128xf32>
    %c0_40 = arith.constant 0 : index
    %c0_41 = arith.constant 0 : index
    %150 = vector.load %arg13[%c0_40, %c0_41] : memref<128x384xbf16, #tpu.memory_space<vmem>>, vector<128x384xbf16>
    %c0_42 = arith.constant 0 : index
    %c0_43 = arith.constant 0 : index
    %151 = vector.load %arg14[%c0_42, %c0_43] : memref<128x256xbf16, #tpu.memory_space<vmem>>, vector<128x256xbf16>
    %c0_44 = arith.constant 0 : index
    %c0_45 = arith.constant 0 : index
    %152 = vector.load %arg15[%c0_44, %c0_45] : memref<1x256xf32, #tpu.memory_space<vmem>>, vector<1x256xf32>
    %153 = arith.truncf %148 : vector<48x128xf32> to vector<48x128xbf16>
    %cst_46 = arith.constant dense<0.000000e+00> : vector<48x384xf32>
    %154 = tpu.matmul %153, %150, %cst_46 {dimension_numbers = #tpu.dot_dimension_numbers<[1], [0], [0], [1], [0, 0, 1, 1], [], []>} : vector<48x128xbf16>, vector<128x384xbf16>, vector<48x384xf32> -> vector<48x384xf32>
    %155 = arith.truncf %149 : vector<16x128xf32> to vector<16x128xbf16>
    %cst_47 = arith.constant dense<0.000000e+00> : vector<16x256xf32>
    %156 = tpu.matmul %155, %151, %cst_47 {dimension_numbers = #tpu.dot_dimension_numbers<[1], [0], [0], [1], [0, 0, 1, 1], [], []>} : vector<16x128xbf16>, vector<128x256xbf16>, vector<16x256xf32> -> vector<16x256xf32>
    %157 = vector.broadcast %152 : vector<1x256xf32> to vector<16x256xf32>
    %158 = arith.addf %156, %157 : vector<16x256xf32>
    %159 = vector.extract_strided_slice %158 {offsets = [0, 0], sizes = [16, 128], strides = [1, 1]} : vector<16x256xf32> to vector<16x128xf32>
    %160 = vector.extract_strided_slice %154 {offsets = [0, 128], sizes = [48, 128], strides = [1, 1]} : vector<48x384xf32> to vector<48x128xf32>
    %161 = vector.extract_strided_slice %154 {offsets = [0, 256], sizes = [48, 128], strides = [1, 1]} : vector<48x384xf32> to vector<48x128xf32>
    %162 = arith.mulf %160, %161 : vector<48x128xf32>
    %163 = vector.extract_strided_slice %162 {offsets = [0, 0], sizes = [16, 128], strides = [1, 1]} : vector<48x128xf32> to vector<16x128xf32>
    %164 = vector.extract_strided_slice %162 {offsets = [16, 0], sizes = [16, 128], strides = [1, 1]} : vector<48x128xf32> to vector<16x128xf32>
    %165 = arith.addf %163, %164 : vector<16x128xf32>
    %166 = vector.extract_strided_slice %162 {offsets = [32, 0], sizes = [16, 128], strides = [1, 1]} : vector<48x128xf32> to vector<16x128xf32>
    %167 = arith.addf %165, %166 : vector<16x128xf32>
    %168 = vector.extract_strided_slice %158 {offsets = [0, 128], sizes = [16, 128], strides = [1, 1]} : vector<16x256xf32> to vector<16x128xf32>
    %169 = arith.addf %167, %168 : vector<16x128xf32>
    %170 = vector.extract_strided_slice %154 {offsets = [0, 0], sizes = [48, 128], strides = [1, 1]} : vector<48x384xf32> to vector<48x128xf32>
    %171 = tpu.concatenate %159, %159, %159 in 0 : vector<16x128xf32>, vector<16x128xf32>, vector<16x128xf32> -> vector<48x128xf32>
    %172 = arith.mulf %170, %171 : vector<48x128xf32>
    %173 = vector.shape_cast %172 : vector<48x128xf32> to vector<3x16x128xf32>
    %174 = arith.truncf %173 : vector<3x16x128xf32> to vector<3x16x128xbf16>
    %c0_48 = arith.constant 0 : index
    %c0_49 = arith.constant 0 : index
    %c0_50 = arith.constant 0 : index
    %175 = vector.load %arg16[%c0_48, %c0_49, %c0_50] : memref<3x16x128xbf16, #tpu.memory_space<vmem>>, vector<3x16x128xbf16>
    tpu.vector_store %arg16[%c0_48, %c0_49, %c0_50], %174 {strides = array<i32>} : memref<3x16x128xbf16, #tpu.memory_space<vmem>>, vector<3x16x128xbf16>,
    %176 = arith.truncf %169 : vector<16x128xf32> to vector<16x128xbf16>
    %c0_51 = arith.constant 0 : index
    %c0_52 = arith.constant 0 : index
    %177 = vector.load %arg17[%c0_51, %c0_52] : memref<16x128xbf16, #tpu.memory_space<vmem>>, vector<16x128xbf16>
    tpu.vector_store %arg17[%c0_51, %c0_52], %176 {strides = array<i32>} : memref<16x128xbf16, #tpu.memory_space<vmem>>, vector<16x128xbf16>,
    return
  }
  func.func @transform_0(%arg0: i32) -> (i32, i32, i32) {
    %c0_i32 = arith.constant 0 : i32
    %c0_i32_0 = arith.constant 0 : i32
    %c0_i32_1 = arith.constant 0 : i32
    return %c0_i32, %arg0, %c0_i32_0 : i32, i32, i32
  }
  func.func @transform_1(%arg0: i32) -> (i32, i32) {
    %c0_i32 = arith.constant 0 : i32
    %c0_i32_0 = arith.constant 0 : i32
    return %arg0, %c0_i32 : i32, i32
  }
  func.func @transform_2(%arg0: i32) -> (i32, i32) {
    %c0_i32 = arith.constant 0 : i32
    %c0_i32_0 = arith.constant 0 : i32
    return %arg0, %c0_i32 : i32, i32
  }
  func.func @transform_3(%arg0: i32) -> (i32, i32) {
    %c0_i32 = arith.constant 0 : i32
    %c0_i32_0 = arith.constant 0 : i32
    %c0_i32_1 = arith.constant 0 : i32
    return %c0_i32, %c0_i32_0 : i32, i32
  }
  func.func @transform_4(%arg0: i32) -> (i32, i32) {
    %c0_i32 = arith.constant 0 : i32
    %c0_i32_0 = arith.constant 0 : i32
    %c0_i32_1 = arith.constant 0 : i32
    return %c0_i32, %c0_i32_0 : i32, i32
  }
  func.func @transform_5(%arg0: i32) -> (i32, i32) {
    %c0_i32 = arith.constant 0 : i32
    %c0_i32_0 = arith.constant 0 : i32
    %c0_i32_1 = arith.constant 0 : i32
    return %c0_i32, %c0_i32_0 : i32, i32
  }
  func.func @transform_6(%arg0: i32) -> (i32, i32) {
    %c0_i32 = arith.constant 0 : i32
    %c0_i32_0 = arith.constant 0 : i32
    %c0_i32_1 = arith.constant 0 : i32
    return %c0_i32, %c0_i32_0 : i32, i32
  }
  func.func @transform_7(%arg0: i32) -> (i32, i32) {
    %c0_i32 = arith.constant 0 : i32
    %c0_i32_0 = arith.constant 0 : i32
    %c0_i32_1 = arith.constant 0 : i32
    return %c0_i32, %c0_i32_0 : i32, i32
  }
  func.func @transform_8(%arg0: i32) -> (i32, i32) {
    %c0_i32 = arith.constant 0 : i32
    %c0_i32_0 = arith.constant 0 : i32
    %c0_i32_1 = arith.constant 0 : i32
    return %c0_i32, %c0_i32_0 : i32, i32
  }
  func.func @transform_9(%arg0: i32) -> (i32, i32) {
    %c0_i32 = arith.constant 0 : i32
    %c0_i32_0 = arith.constant 0 : i32
    %c0_i32_1 = arith.constant 0 : i32
    return %c0_i32, %c0_i32_0 : i32, i32
  }
  func.func @transform_10(%arg0: i32) -> (i32, i32) {
    %c0_i32 = arith.constant 0 : i32
    %c0_i32_0 = arith.constant 0 : i32
    %c0_i32_1 = arith.constant 0 : i32
    return %c0_i32, %c0_i32_0 : i32, i32
  }
  func.func @transform_11(%arg0: i32) -> (i32, i32) {
    %c0_i32 = arith.constant 0 : i32
    %c0_i32_0 = arith.constant 0 : i32
    %c0_i32_1 = arith.constant 0 : i32
    return %c0_i32, %c0_i32_0 : i32, i32
  }
  func.func @transform_12(%arg0: i32) -> (i32, i32) {
    %c0_i32 = arith.constant 0 : i32
    %c0_i32_0 = arith.constant 0 : i32
    %c0_i32_1 = arith.constant 0 : i32
    return %c0_i32, %c0_i32_0 : i32, i32
  }
  func.func @transform_13(%arg0: i32) -> (i32, i32) {
    %c0_i32 = arith.constant 0 : i32
    %c0_i32_0 = arith.constant 0 : i32
    %c0_i32_1 = arith.constant 0 : i32
    return %c0_i32, %c0_i32_0 : i32, i32
  }
  func.func @transform_14(%arg0: i32) -> (i32, i32) {
    %c0_i32 = arith.constant 0 : i32
    %c0_i32_0 = arith.constant 0 : i32
    %c0_i32_1 = arith.constant 0 : i32
    return %c0_i32, %c0_i32_0 : i32, i32
  }
  func.func @transform_15(%arg0: i32) -> (i32, i32, i32) {
    %c0_i32 = arith.constant 0 : i32
    %c0_i32_0 = arith.constant 0 : i32
    %c0_i32_1 = arith.constant 0 : i32
    return %c0_i32, %arg0, %c0_i32_0 : i32, i32, i32
  }
  func.func @transform_16(%arg0: i32) -> (i32, i32) {
    %c0_i32 = arith.constant 0 : i32
    %c0_i32_0 = arith.constant 0 : i32
    return %arg0, %c0_i32 : i32, i32
  }
}

</mosaic_0001>

<llo_original>
// kernel: fwd.1
$region0: #{fwd.1}
  #allocation0 [shape = 'u32[]', space=smem, size = 0x4, offset = 0x4, fixed_abs, tag = 'smem constant byte address 0x4 - core index']
  #allocation1 [shape = 'u32[144,128]{1,0:T(1,128)}', space=vmem, size = 0x12000, scoped, tag = 'internal scratch']
  %s0 = inlined_call_operand.vmem [shape: f32[3,32,128], index: 0, kind: input, shape index: {}]
  %s1 = inlined_call_operand.vmem [shape: f32[32,128], index: 1, kind: input, shape index: {}]
  %s2 = inlined_call_operand.vmem [shape: f32[32,1], index: 2, kind: input, shape index: {}]
  %s3 = inlined_call_operand.vmem [shape: f32[1,128], index: 3, kind: input, shape index: {}]
  %s4 = inlined_call_operand.vmem [shape: bf16[128,384], index: 4, kind: input, shape index: {}]
  %s5 = inlined_call_operand.vmem [shape: bf16[128,256], index: 5, kind: input, shape index: {}]
  %s6 = inlined_call_operand.vmem [shape: f32[1,256], index: 6, kind: input, shape index: {}, may-alias: {6,10,14}]
  %s7 = inlined_call_operand.vmem [shape: bf16[128,128], index: 7, kind: input, shape index: {}]
  %s8 = inlined_call_operand.vmem [shape: bf16[128,384], index: 8, kind: input, shape index: {}]
  %s9 = inlined_call_operand.vmem [shape: bf16[128,256], index: 9, kind: input, shape index: {}]
  %s10 = inlined_call_operand.vmem [shape: f32[1,256], index: 10, kind: input, shape index: {}, may-alias: {6,10,14}]
  %s11 = inlined_call_operand.vmem [shape: bf16[128,128], index: 11, kind: input, shape index: {}]
  %s12 = inlined_call_operand.vmem [shape: bf16[128,384], index: 12, kind: input, shape index: {}]
  %s13 = inlined_call_operand.vmem [shape: bf16[128,256], index: 13, kind: input, shape index: {}]
  %s14 = inlined_call_operand.vmem [shape: f32[1,256], index: 14, kind: input, shape index: {}, may-alias: {6,10,14}]
  %s15 = inlined_call_operand.vmem [shape: bf16[3,32,128], index: 15, kind: output, shape index: {0}]
  %s16 = inlined_call_operand.vmem [shape: bf16[32,128], index: 16, kind: output, shape index: {1}]
  %17 = xla_tuple %s15, %s16
  %s18 = sld [smem:[#allocation0]]
  $region176: #{fwd.1} parent=0
    _
  %s20 = ssub.s32 1, %s18
  %s21 = scalar_select 0, %s20, %s18
  $region1: #{fwd.1} parent=0
    #allocation2 [shape = 'u8[49152]{0}', space=vmem, size = 0xc000, scoped, tag = 'input window, operand 0']
    #allocation3 [shape = 'u8[24576]{0}', space=vmem, size = 0x6000, scoped, tag = 'output window, operand 0']
    loop: start=0, step=1, limit=4
    $region2: #{fwd.1} parent=1 // loop_pre_header
      _
    $region3: #{fwd.1} parent=1 // loop_header
      %s23 = sphi 0, %s27
      %p24 = scmp.ge.s32.totalorder %s23, 4
      %s33 = sphi 0, %s35
      %s36 = sphi 0, %s33
      %s37 = sphi 0, %s36
      %s53 = sphi 0, %s37
      %s59 = sphi 0, %s61
      %s62 = sphi 0, %s59
      %s63 = sphi 0, %s62
      %s79 = sphi 0, %s63
      %s85 = sphi 0, %s87
      %s88 = sphi 0, %s85
      %s89 = sphi 0, %s88
      %s105 = sphi 0, %s89
      %s109 = sphi 0, %s109
      %s111 = sphi 0, %s109
      %s112 = sphi 0, %s111
      %s126 = sphi 0, %s112
      %s130 = sphi 0, %s130
      %s132 = sphi 0, %s130
      %s133 = sphi 0, %s132
      %s147 = sphi 0, %s133
      %s151 = sphi 0, %s151
      %s153 = sphi 0, %s151
      %s154 = sphi 0, %s153
      %s168 = sphi 0, %s154
      %s172 = sphi 0, %s172
      %s174 = sphi 0, %s172
      %s175 = sphi 0, %s174
      %s189 = sphi 0, %s175
      %s193 = sphi 0, %s193
      %s195 = sphi 0, %s193
      %s196 = sphi 0, %s195
      %s210 = sphi 0, %s196
      %s214 = sphi 0, %s214
      %s216 = sphi 0, %s214
      %s217 = sphi 0, %s216
      %s231 = sphi 0, %s217
      %s235 = sphi 0, %s235
      %s237 = sphi 0, %s235
      %s238 = sphi 0, %s237
      %s252 = sphi 0, %s238
      %s256 = sphi 0, %s256
      %s258 = sphi 0, %s256
      %s259 = sphi 0, %s258
      %s273 = sphi 0, %s259
      %s277 = sphi 0, %s277
      %s279 = sphi 0, %s277
      %s280 = sphi 0, %s279
      %s294 = sphi 0, %s280
      %s298 = sphi 0, %s298
      %s300 = sphi 0, %s298
      %s301 = sphi 0, %s300
      %s315 = sphi 0, %s301
      %s319 = sphi 0, %s319
      %s321 = sphi 0, %s319
      %s322 = sphi 0, %s321
      %s336 = sphi 0, %s322
      %s340 = sphi 0, %s340
      %s342 = sphi 0, %s340
      %s343 = sphi 0, %s342
      %s357 = sphi 0, %s343
      %s363 = sphi 0, %s365
      %s366 = sphi 0, %s363
      %s367 = sphi 0, %s366
      %s383 = sphi 0, %s367
      %s389 = sphi 0, %s391
      %s392 = sphi 0, %s389
      %s393 = sphi 0, %s392
      %s409 = sphi 0, %s393
    $region4: #{fwd.1} parent=1 // loop_header_branch
      %26 = sbr.rel (%p24) target = $region8
    $region5: #{fwd.1} parent=1 // loop_body
      %s28 = ssub.s32 %s23, 1
      %s29 = ssub.s32 %s23, 2
      %s30 = sadd.s32 %s23, 1
      %s31 = ssub.s32 %s23, %s30
      %p32 = scmp.eq.s32.totalorder %s31, 0
      %s34 = sadd.s32 %s33, 1
      %s35 = scalar_select %p32, %s33, %s34
      %p38 = pneg %p32
      %p39 = scmp.eq.s32.totalorder %s23, 1
      %p40 = por %p38, %p39
      %p41 = scmp.ne.s32.totalorder %s33, %s36
      %p42 = scmp.eq.s32.totalorder %s23, 0
      %p43 = por %p41, %p42
      %p44 = scmp.ne.s32.totalorder %s33, %s36
      %p45 = scmp.eq.s32.totalorder %s28, 1
      %p46 = por %p44, %p45
      %p47 = scmp.ne.s32.totalorder %s36, %s37
      %p48 = scmp.eq.s32.totalorder %s28, 0
      %p49 = por %p47, %p48
      %p50 = scmp.ne.s32.totalorder %s36, %s37
      %p51 = scmp.eq.s32.totalorder %s29, 1
      %p52 = por %p50, %p51
      %p54 = scmp.ne.s32.totalorder %s37, %s53
      %p55 = scmp.eq.s32.totalorder %s29, 0
      %p56 = por %p54, %p55
      %s57 = ssub.s32 %s23, %s30
      %p58 = scmp.eq.s32.totalorder %s57, 0
      %s60 = sadd.s32 %s59, 1
      %s61 = scalar_select %p58, %s59, %s60
      %p64 = pneg %p58
      %p65 = scmp.eq.s32.totalorder %s23, 1
      %p66 = por %p64, %p65
      %p67 = scmp.ne.s32.totalorder %s59, %s62
      %p68 = scmp.eq.s32.totalorder %s23, 0
      %p69 = por %p67, %p68
      %p70 = scmp.ne.s32.totalorder %s59, %s62
      %p71 = scmp.eq.s32.totalorder %s28, 1
      %p72 = por %p70, %p71
      %p73 = scmp.ne.s32.totalorder %s62, %s63
      %p74 = scmp.eq.s32.totalorder %s28, 0
      %p75 = por %p73, %p74
      %p76 = scmp.ne.s32.totalorder %s62, %s63
      %p77 = scmp.eq.s32.totalorder %s29, 1
      %p78 = por %p76, %p77
      %p80 = scmp.ne.s32.totalorder %s63, %s79
      %p81 = scmp.eq.s32.totalorder %s29, 0
      %p82 = por %p80, %p81
      %s83 = ssub.s32 %s23, %s30
      %p84 = scmp.eq.s32.totalorder %s83, 0
      %s86 = sadd.s32 %s85, 1
      %s87 = scalar_select %p84, %s85, %s86
      %p90 = pneg %p84
      %p91 = scmp.eq.s32.totalorder %s23, 1
      %p92 = por %p90, %p91
      %p93 = scmp.ne.s32.totalorder %s85, %s88
      %p94 = scmp.eq.s32.totalorder %s23, 0
      %p95 = por %p93, %p94
      %p96 = scmp.ne.s32.totalorder %s85, %s88
      %p97 = scmp.eq.s32.totalorder %s28, 1
      %p98 = por %p96, %p97
      %p99 = scmp.ne.s32.totalorder %s88, %s89
      %p100 = scmp.eq.s32.totalorder %s28, 0
      %p101 = por %p99, %p100
      %p102 = scmp.ne.s32.totalorder %s88, %s89
      %p103 = scmp.eq.s32.totalorder %s29, 1
      %p104 = por %p102, %p103
      %p106 = scmp.ne.s32.totalorder %s89, %s105
      %p107 = scmp.eq.s32.totalorder %s29, 0
      %p108 = por %p106, %p107
      %s110 = sadd.s32 %s109, 1
      %p113 = scmp.eq.s32.totalorder %s23, 1
      %p114 = scmp.ne.s32.totalorder %s109, %s111
      %p115 = scmp.eq.s32.totalorder %s23, 0
      %p116 = por %p114, %p115
      %p117 = scmp.ne.s32.totalorder %s109, %s111
      %p118 = scmp.eq.s32.totalorder %s28, 1
      %p119 = por %p117, %p118
      %p120 = scmp.ne.s32.totalorder %s111, %s112
      %p121 = scmp.eq.s32.totalorder %s28, 0
      %p122 = por %p120, %p121
      %p123 = scmp.ne.s32.totalorder %s111, %s112
      %p124 = scmp.eq.s32.totalorder %s29, 1
      %p125 = por %p123, %p124
      %p127 = scmp.ne.s32.totalorder %s112, %s126
      %p128 = scmp.eq.s32.totalorder %s29, 0
      %p129 = por %p127, %p128
      %s131 = sadd.s32 %s130, 1
      %p134 = scmp.eq.s32.totalorder %s23, 1
      %p135 = scmp.ne.s32.totalorder %s130, %s132
      %p136 = scmp.eq.s32.totalorder %s23, 0
      %p137 = por %p135, %p136
      %p138 = scmp.ne.s32.totalorder %s130, %s132
      %p139 = scmp.eq.s32.totalorder %s28, 1
      %p140 = por %p138, %p139
      %p141 = scmp.ne.s32.totalorder %s132, %s133
      %p142 = scmp.eq.s32.totalorder %s28, 0
      %p143 = por %p141, %p142
      %p144 = scmp.ne.s32.totalorder %s132, %s133
      %p145 = scmp.eq.s32.totalorder %s29, 1
      %p146 = por %p144, %p145
      %p148 = scmp.ne.s32.totalorder %s133, %s147
      %p149 = scmp.eq.s32.totalorder %s29, 0
      %p150 = por %p148, %p149
      %s152 = sadd.s32 %s151, 1
      %p155 = scmp.eq.s32.totalorder %s23, 1
      %p156 = scmp.ne.s32.totalorder %s151, %s153
      %p157 = scmp.eq.s32.totalorder %s23, 0
      %p158 = por %p156, %p157
      %p159 = scmp.ne.s32.totalorder %s151, %s153
      %p160 = scmp.eq.s32.totalorder %s28, 1
      %p161 = por %p159, %p160
      %p162 = scmp.ne.s32.totalorder %s153, %s154
      %p163 = scmp.eq.s32.totalorder %s28, 0
      %p164 = por %p162, %p163
      %p165 = scmp.ne.s32.totalorder %s153, %s154
      %p166 = scmp.eq.s32.totalorder %s29, 1
      %p167 = por %p165, %p166
      %p169 = scmp.ne.s32.totalorder %s154, %s168
      %p170 = scmp.eq.s32.totalorder %s29, 0
      %p171 = por %p169, %p170
      %s173 = sadd.s32 %s172, 1
      %p176 = scmp.eq.s32.totalorder %s23, 1
      %p177 = scmp.ne.s32.totalorder %s172, %s174
      %p178 = scmp.eq.s32.totalorder %s23, 0
      %p179 = por %p177, %p178
      %p180 = scmp.ne.s32.totalorder %s172, %s174
      %p181 = scmp.eq.s32.totalorder %s28, 1
      %p182 = por %p180, %p181
      %p183 = scmp.ne.s32.totalorder %s174, %s175
      %p184 = scmp.eq.s32.totalorder %s28, 0
      %p185 = por %p183, %p184
      %p186 = scmp.ne.s32.totalorder %s174, %s175
      %p187 = scmp.eq.s32.totalorder %s29, 1
      %p188 = por %p186, %p187
      %p190 = scmp.ne.s32.totalorder %s175, %s189
      %p191 = scmp.eq.s32.totalorder %s29, 0
      %p192 = por %p190, %p191
      %s194 = sadd.s32 %s193, 1
      %p197 = scmp.eq.s32.totalorder %s23, 1
      %p198 = scmp.ne.s32.totalorder %s193, %s195
      %p199 = scmp.eq.s32.totalorder %s23, 0
      %p200 = por %p198, %p199
      %p201 = scmp.ne.s32.totalorder %s193, %s195
      %p202 = scmp.eq.s32.totalorder %s28, 1
      %p203 = por %p201, %p202
      %p204 = scmp.ne.s32.totalorder %s195, %s196
      %p205 = scmp.eq.s32.totalorder %s28, 0
      %p206 = por %p204, %p205
      %p207 = scmp.ne.s32.totalorder %s195, %s196
      %p208 = scmp.eq.s32.totalorder %s29, 1
      %p209 = por %p207, %p208
      %p211 = scmp.ne.s32.totalorder %s196, %s210
      %p212 = scmp.eq.s32.totalorder %s29, 0
      %p213 = por %p211, %p212
      %s215 = sadd.s32 %s214, 1
      %p218 = scmp.eq.s32.totalorder %s23, 1
      %p219 = scmp.ne.s32.totalorder %s214, %s216
      %p220 = scmp.eq.s32.totalorder %s23, 0
      %p221 = por %p219, %p220
      %p222 = scmp.ne.s32.totalorder %s214, %s216
      %p223 = scmp.eq.s32.totalorder %s28, 1
      %p224 = por %p222, %p223
      %p225 = scmp.ne.s32.totalorder %s216, %s217
      %p226 = scmp.eq.s32.totalorder %s28, 0
      %p227 = por %p225, %p226
      %p228 = scmp.ne.s32.totalorder %s216, %s217
      %p229 = scmp.eq.s32.totalorder %s29, 1
      %p230 = por %p228, %p229
      %p232 = scmp.ne.s32.totalorder %s217, %s231
      %p233 = scmp.eq.s32.totalorder %s29, 0
      %p234 = por %p232, %p233
      %s236 = sadd.s32 %s235, 1
      %p239 = scmp.eq.s32.totalorder %s23, 1
      %p240 = scmp.ne.s32.totalorder %s235, %s237
      %p241 = scmp.eq.s32.totalorder %s23, 0
      %p242 = por %p240, %p241
      %p243 = scmp.ne.s32.totalorder %s235, %s237
      %p244 = scmp.eq.s32.totalorder %s28, 1
      %p245 = por %p243, %p244
      %p246 = scmp.ne.s32.totalorder %s237, %s238
      %p247 = scmp.eq.s32.totalorder %s28, 0
      %p248 = por %p246, %p247
      %p249 = scmp.ne.s32.totalorder %s237, %s238
      %p250 = scmp.eq.s32.totalorder %s29, 1
      %p251 = por %p249, %p250
      %p253 = scmp.ne.s32.totalorder %s238, %s252
      %p254 = scmp.eq.s32.totalorder %s29, 0
      %p255 = por %p253, %p254
      %s257 = sadd.s32 %s256, 1
      %p260 = scmp.eq.s32.totalorder %s23, 1
      %p261 = scmp.ne.s32.totalorder %s256, %s258
      %p262 = scmp.eq.s32.totalorder %s23, 0
      %p263 = por %p261, %p262
      %p264 = scmp.ne.s32.totalorder %s256, %s258
      %p265 = scmp.eq.s32.totalorder %s28, 1
      %p266 = por %p264, %p265
      %p267 = scmp.ne.s32.totalorder %s258, %s259
      %p268 = scmp.eq.s32.totalorder %s28, 0
      %p269 = por %p267, %p268
      %p270 = scmp.ne.s32.totalorder %s258, %s259
      %p271 = scmp.eq.s32.totalorder %s29, 1
      %p272 = por %p270, %p271
      %p274 = scmp.ne.s32.totalorder %s259, %s273
      %p275 = scmp.eq.s32.totalorder %s29, 0
      %p276 = por %p274, %p275
      %s278 = sadd.s32 %s277, 1
      %p281 = scmp.eq.s32.totalorder %s23, 1
      %p282 = scmp.ne.s32.totalorder %s277, %s279
      %p283 = scmp.eq.s32.totalorder %s23, 0
      %p284 = por %p282, %p283
      %p285 = scmp.ne.s32.totalorder %s277, %s279
      %p286 = scmp.eq.s32.totalorder %s28, 1
      %p287 = por %p285, %p286
      %p288 = scmp.ne.s32.totalorder %s279, %s280
      %p289 = scmp.eq.s32.totalorder %s28, 0
      %p290 = por %p288, %p289
      %p291 = scmp.ne.s32.totalorder %s279, %s280
      %p292 = scmp.eq.s32.totalorder %s29, 1
      %p293 = por %p291, %p292
      %p295 = scmp.ne.s32.totalorder %s280, %s294
      %p296 = scmp.eq.s32.totalorder %s29, 0
      %p297 = por %p295, %p296
      %s299 = sadd.s32 %s298, 1
      %p302 = scmp.eq.s32.totalorder %s23, 1
      %p303 = scmp.ne.s32.totalorder %s298, %s300
      %p304 = scmp.eq.s32.totalorder %s23, 0
      %p305 = por %p303, %p304
      %p306 = scmp.ne.s32.totalorder %s298, %s300
      %p307 = scmp.eq.s32.totalorder %s28, 1
      %p308 = por %p306, %p307
      %p309 = scmp.ne.s32.totalorder %s300, %s301
      %p310 = scmp.eq.s32.totalorder %s28, 0
      %p311 = por %p309, %p310
      %p312 = scmp.ne.s32.totalorder %s300, %s301
      %p313 = scmp.eq.s32.totalorder %s29, 1
      %p314 = por %p312, %p313
      %p316 = scmp.ne.s32.totalorder %s301, %s315
      %p317 = scmp.eq.s32.totalorder %s29, 0
      %p318 = por %p316, %p317
      %s320 = sadd.s32 %s319, 1
      %p323 = scmp.eq.s32.totalorder %s23, 1
      %p324 = scmp.ne.s32.totalorder %s319, %s321
      %p325 = scmp.eq.s32.totalorder %s23, 0
      %p326 = por %p324, %p325
      %p327 = scmp.ne.s32.totalorder %s319, %s321
      %p328 = scmp.eq.s32.totalorder %s28, 1
      %p329 = por %p327, %p328
      %p330 = scmp.ne.s32.totalorder %s321, %s322
      %p331 = scmp.eq.s32.totalorder %s28, 0
      %p332 = por %p330, %p331
      %p333 = scmp.ne.s32.totalorder %s321, %s322
      %p334 = scmp.eq.s32.totalorder %s29, 1
      %p335 = por %p333, %p334
      %p337 = scmp.ne.s32.totalorder %s322, %s336
      %p338 = scmp.eq.s32.totalorder %s29, 0
      %p339 = por %p337, %p338
      %s341 = sadd.s32 %s340, 1
      %p344 = scmp.eq.s32.totalorder %s23, 1
      %p345 = scmp.ne.s32.totalorder %s340, %s342
      %p346 = scmp.eq.s32.totalorder %s23, 0
      %p347 = por %p345, %p346
      %p348 = scmp.ne.s32.totalorder %s340, %s342
      %p349 = scmp.eq.s32.totalorder %s28, 1
      %p350 = por %p348, %p349
      %p351 = scmp.ne.s32.totalorder %s342, %s343
      %p352 = scmp.eq.s32.totalorder %s28, 0
      %p353 = por %p351, %p352
      %p354 = scmp.ne.s32.totalorder %s342, %s343
      %p355 = scmp.eq.s32.totalorder %s29, 1
      %p356 = por %p354, %p355
      %p358 = scmp.ne.s32.totalorder %s343, %s357
      %p359 = scmp.eq.s32.totalorder %s29, 0
      %p360 = por %p358, %p359
      %s361 = ssub.s32 %s23, %s30
      %p362 = scmp.eq.s32.totalorder %s361, 0
      %s364 = sadd.s32 %s363, 1
      %s365 = scalar_select %p362, %s363, %s364
      %p368 = pneg %p362
      %p369 = scmp.eq.s32.totalorder %s23, 1
      %p370 = por %p368, %p369
      %p371 = scmp.ne.s32.totalorder %s363, %s366
      %p372 = scmp.eq.s32.totalorder %s23, 0
      %p373 = por %p371, %p372
      %p374 = scmp.ne.s32.totalorder %s363, %s366
      %p375 = scmp.eq.s32.totalorder %s28, 1
      %p376 = por %p374, %p375
      %p377 = scmp.ne.s32.totalorder %s366, %s367
      %p378 = scmp.eq.s32.totalorder %s28, 0
      %p379 = por %p377, %p378
      %p380 = scmp.ne.s32.totalorder %s366, %s367
      %p381 = scmp.eq.s32.totalorder %s29, 1
      %p382 = por %p380, %p381
      %p384 = scmp.ne.s32.totalorder %s367, %s383
      %p385 = scmp.eq.s32.totalorder %s29, 0
      %p386 = por %p384, %p385
      %s387 = ssub.s32 %s23, %s30
      %p388 = scmp.eq.s32.totalorder %s387, 0
      %s390 = sadd.s32 %s389, 1
      %s391 = scalar_select %p388, %s389, %s390
      %p394 = pneg %p388
      %p395 = scmp.eq.s32.totalorder %s23, 1
      %p396 = por %p394, %p395
      %p397 = scmp.ne.s32.totalorder %s389, %s392
      %p398 = scmp.eq.s32.totalorder %s23, 0
      %p399 = por %p397, %p398
      %p400 = scmp.ne.s32.totalorder %s389, %s392
      %p401 = scmp.eq.s32.totalorder %s28, 1
      %p402 = por %p400, %p401
      %p403 = scmp.ne.s32.totalorder %s392, %s393
      %p404 = scmp.eq.s32.totalorder %s28, 0
      %p405 = por %p403, %p404
      %p406 = scmp.ne.s32.totalorder %s392, %s393
      %p407 = scmp.eq.s32.totalorder %s29, 1
      %p408 = por %p406, %p407
      %p410 = scmp.ne.s32.totalorder %s393, %s409
      %p411 = scmp.eq.s32.totalorder %s29, 0
      %p412 = por %p410, %p411
      %p413 = scmp.le.s32.totalorder 1, %s23
      %p414 = scmp.lt.s32.totalorder %s23, 3
      %p415 = pnand %p413, %p414
      %p416 = pneg %p415
      // Predicated region
      $region9: #{fwd.1} parent=5 // pred_check
        _
      $region10: #{fwd.1} parent=5 // pred_check_branch
        %418 = sbr.rel (%p415) target = $region12
      $region11: #{fwd.1} parent=5 // pred_region
        %s419 = ssub.s32 %s23, 1
        // Predicated region
        $region13: #{fwd.1} parent=11 // pred_check
          %p420 = pneg %p122
        $region14: #{fwd.1} parent=11 // pred_check_branch
          %422 = sbr.rel (%p420) target = $region16
        $region15: #{fwd.1} parent=11 // pred_region
          _
        $region16: #{fwd.1} parent=11 // pred_fallthru
          _
        // Predicated region
        $region17: #{fwd.1} parent=11 // pred_check
          %p423 = pneg %p143
        $region18: #{fwd.1} parent=11 // pred_check_branch
          %425 = sbr.rel (%p423) target = $region20
        $region19: #{fwd.1} parent=11 // pred_region
          _
        $region20: #{fwd.1} parent=11 // pred_fallthru
          _
        // Predicated region
        $region21: #{fwd.1} parent=11 // pred_check
          %p426 = pneg %p164
        $region22: #{fwd.1} parent=11 // pred_check_branch
          %428 = sbr.rel (%p426) target = $region24
        $region23: #{fwd.1} parent=11 // pred_region
          _
        $region24: #{fwd.1} parent=11 // pred_fallthru
          _
        // Predicated region
        $region25: #{fwd.1} parent=11 // pred_check
          %p429 = pneg %p185
        $region26: #{fwd.1} parent=11 // pred_check_branch
          %431 = sbr.rel (%p429) target = $region28
        $region27: #{fwd.1} parent=11 // pred_region
          _
        $region28: #{fwd.1} parent=11 // pred_fallthru
          _
        // Predicated region
        $region29: #{fwd.1} parent=11 // pred_check
          %p432 = pneg %p206
        $region30: #{fwd.1} parent=11 // pred_check_branch
          %434 = sbr.rel (%p432) target = $region32
        $region31: #{fwd.1} parent=11 // pred_region
          _
        $region32: #{fwd.1} parent=11 // pred_fallthru
          _
        // Predicated region
        $region33: #{fwd.1} parent=11 // pred_check
          %p435 = pneg %p227
        $region34: #{fwd.1} parent=11 // pred_check_branch
          %437 = sbr.rel (%p435) target = $region36
        $region35: #{fwd.1} parent=11 // pred_region
          _
        $region36: #{fwd.1} parent=11 // pred_fallthru
          _
        // Predicated region
        $region37: #{fwd.1} parent=11 // pred_check
          %p438 = pneg %p248
        $region38: #{fwd.1} parent=11 // pred_check_branch
          %440 = sbr.rel (%p438) target = $region40
        $region39: #{fwd.1} parent=11 // pred_region
          _
        $region40: #{fwd.1} parent=11 // pred_fallthru
          _
        // Predicated region
        $region41: #{fwd.1} parent=11 // pred_check
          %p441 = pneg %p269
        $region42: #{fwd.1} parent=11 // pred_check_branch
          %443 = sbr.rel (%p441) target = $region44
        $region43: #{fwd.1} parent=11 // pred_region
          _
        $region44: #{fwd.1} parent=11 // pred_fallthru
          _
        // Predicated region
        $region45: #{fwd.1} parent=11 // pred_check
          %p444 = pneg %p290
        $region46: #{fwd.1} parent=11 // pred_check_branch
          %446 = sbr.rel (%p444) target = $region48
        $region47: #{fwd.1} parent=11 // pred_region
          _
        $region48: #{fwd.1} parent=11 // pred_fallthru
          _
        // Predicated region
        $region49: #{fwd.1} parent=11 // pred_check
          %p447 = pneg %p311
        $region50: #{fwd.1} parent=11 // pred_check_branch
          %449 = sbr.rel (%p447) target = $region52
        $region51: #{fwd.1} parent=11 // pred_region
          _
        $region52: #{fwd.1} parent=11 // pred_fallthru
          _
        // Predicated region
        $region53: #{fwd.1} parent=11 // pred_check
          %p450 = pneg %p332
        $region54: #{fwd.1} parent=11 // pred_check_branch
          %452 = sbr.rel (%p450) target = $region56
        $region55: #{fwd.1} parent=11 // pred_region
          _
        $region56: #{fwd.1} parent=11 // pred_fallthru
          _
        // Predicated region
        $region57: #{fwd.1} parent=11 // pred_check
          %p453 = pneg %p353
        $region58: #{fwd.1} parent=11 // pred_check_branch
          %455 = sbr.rel (%p453) target = $region60
        $region59: #{fwd.1} parent=11 // pred_region
          _
        $region60: #{fwd.1} parent=11 // pred_fallthru
          _
      $region12: #{fwd.1} parent=5 // pred_fallthru
        _
      %p456 = scmp.lt.s32.totalorder %s23, 2
      // Predicated region
      $region61: #{fwd.1} parent=5 // pred_check
        %p457 = pneg %p456
      $region62: #{fwd.1} parent=5 // pred_check_branch
        %459 = sbr.rel (%p457) target = $region64
      $region63: #{fwd.1} parent=5 // pred_region
        // Predicated region
        $region65: #{fwd.1} parent=63 // pred_check
          %p460 = pneg %p43
        $region66: #{fwd.1} parent=63 // pred_check_branch
          %462 = sbr.rel (%p460) target = $region68
        $region67: #{fwd.1} parent=63 // pred_region
          %s463 = sand.u32 %s33, 1
          %s464 = sand.u32 %s33, 1
          %s465 = smul.addr %s464, 48
          %s466 = scalar_lea.vmem [#allocation2], %s465
          %s467 = smul.u32 2, %s23
          %s468 = smul.addr %s467, 8
          %s469 = scalar_lea.vmem %s0, %s468
          // Predicated region
          $region69: #{fwd.1} parent=67 // pred_check
            _
          $region70: #{fwd.1} parent=67 // pred_check_branch
            %471 = sbr.rel (0) target = $region72
          $region71: #{fwd.1} parent=67 // pred_region
            // Predicated region
            $region73: #{fwd.1} parent=71 // pred_check
              _
            $region74: #{fwd.1} parent=71 // pred_check_branch
              %473 = sbr.rel (0) target = $region76
            $region75: #{fwd.1} parent=71 // pred_region
              // Predicated region
              $region88: #{fwd.1} parent=75 // pred_check
                _
              $region89: #{fwd.1} parent=75 // pred_check_branch
                %498 = sbr.rel (0) target = $region91
              $region90: #{fwd.1} parent=75 // pred_region
                loop: start=0, step=1, limit=1
                $region92: #{fwd.1} parent=90 // loop_pre_header
                  _
                $region93: #{fwd.1} parent=90 // loop_header
                  %s500 = sphi 0, %s504
                  %p501 = scmp.ge.s32.totalorder %s500, 1
                  %s505 = sphi %s469, %s469
                  %s506 = sphi %s466, %s466
                $region94: #{fwd.1} parent=90 // loop_header_branch
                  %503 = sbr.rel (%p501) target = $region98
                $region95: #{fwd.1} parent=90 // loop_body
                  %v507 = vld [vmem:[%s505] sm:$0xff]
                  %508 = vst [vmem:[%s506] sm:$0xff] %v507
                  %v509 = vld [vmem:[%s505 + $0x8] sm:$0xff]
                  %510 = vst [vmem:[%s506 + $0x8] sm:$0xff] %v509
                  %v511 = vld [vmem:[%s505 + $0x20] sm:$0xff]
                  %512 = vst [vmem:[%s506 + $0x10] sm:$0xff] %v511
                  %v513 = vld [vmem:[%s505 + $0x28] sm:$0xff]
                  %514 = vst [vmem:[%s506 + $0x18] sm:$0xff] %v513
                  %v515 = vld [vmem:[%s505 + $0x40] sm:$0xff]
                  %516 = vst [vmem:[%s506 + $0x20] sm:$0xff] %v515
                  %v517 = vld [vmem:[%s505 + $0x48] sm:$0xff]
                  %518 = vst [vmem:[%s506 + $0x28] sm:$0xff] %v517
                $region96: #{fwd.1} parent=90 // loop_footer
                  %s504 = sadd.s32 1, %s500
                $region97: #{fwd.1} parent=90 // loop_footer_branch
                  %499 = sbr.rel target = $region93
                $region98: #{fwd.1} parent=90 // loop_exit
                  _
              $region91: #{fwd.1} parent=75 // pred_fallthru
                _
              // Predicated region
              $region99: #{fwd.1} parent=75 // pred_check
                _
              $region100: #{fwd.1} parent=75 // pred_check_branch
                %520 = sbr.rel target = $region102
              $region101: #{fwd.1} parent=75 // pred_region
                _
              $region102: #{fwd.1} parent=75 // pred_fallthru
                _
            $region76: #{fwd.1} parent=71 // pred_fallthru
              _
            // Predicated region
            $region77: #{fwd.1} parent=71 // pred_check
              _
            $region78: #{fwd.1} parent=71 // pred_check_branch
              %475 = sbr.rel target = $region80
            $region79: #{fwd.1} parent=71 // pred_region
              loop: start=0, step=1, limit=1
              $region81: #{fwd.1} parent=79 // loop_pre_header
                _
              $region82: #{fwd.1} parent=79 // loop_header
                %s478 = sphi 0, %s482
                %p479 = scmp.ge.s32.totalorder %s478, 1
                %s483 = sphi %s469, %s469
                %s484 = sphi %s466, %s466
              $region83: #{fwd.1} parent=79 // loop_header_branch
                %481 = sbr.rel (%p479) target = $region87
              $region84: #{fwd.1} parent=79 // loop_body
                %v485 = vld [vmem:[%s483] sm:$0xff]
                %486 = vst [vmem:[%s484] sm:$0xff] %v485
                %v487 = vld [vmem:[%s483 + $0x8] sm:$0xff]
                %488 = vst [vmem:[%s484 + $0x8] sm:$0xff] %v487
                %v489 = vld [vmem:[%s483 + $0x20] sm:$0xff]
                %490 = vst [vmem:[%s484 + $0x10] sm:$0xff] %v489
                %v491 = vld [vmem:[%s483 + $0x28] sm:$0xff]
                %492 = vst [vmem:[%s484 + $0x18] sm:$0xff] %v491
                %v493 = vld [vmem:[%s483 + $0x40] sm:$0xff]
                %494 = vst [vmem:[%s484 + $0x20] sm:$0xff] %v493
                %v495 = vld [vmem:[%s483 + $0x48] sm:$0xff]
                %496 = vst [vmem:[%s484 + $0x28] sm:$0xff] %v495
              $region85: #{fwd.1} parent=79 // loop_footer
                %s482 = sadd.s32 1, %s478
              $region86: #{fwd.1} parent=79 // loop_footer_branch
                %477 = sbr.rel target = $region82
              $region87: #{fwd.1} parent=79 // loop_exit
                _
            $region80: #{fwd.1} parent=71 // pred_fallthru
              _
          $region72: #{fwd.1} parent=67 // pred_fallthru
            _
          %521 = vnop
        $region68: #{fwd.1} parent=63 // pred_fallthru
          _
        // Predicated region
        $region103: #{fwd.1} parent=63 // pred_check
          %p522 = pneg %p69
        $region104: #{fwd.1} parent=63 // pred_check_branch
          %524 = sbr.rel (%p522) target = $region106
        $region105: #{fwd.1} parent=63 // pred_region
          %s525 = smul.u32 2, %s23
          %p526 = scmp.lt.s32.totalorder %s525, 3
          %s527 = scalar_select %p526, %s525, 3
          %s528 = smul.addr %s527, 8
          %s529 = scalar_lea.vmem %s1, %s528
          %s530 = smul.u32 2, %s23
        $region106: #{fwd.1} parent=63 // pred_fallthru
          _
        // Predicated region
        $region107: #{fwd.1} parent=63 // pred_check
          %p531 = pneg %p95
        $region108: #{fwd.1} parent=63 // pred_check_branch
          %533 = sbr.rel (%p531) target = $region110
        $region109: #{fwd.1} parent=63 // pred_region
          %s534 = smul.u32 2, %s23
          %p535 = scmp.lt.s32.totalorder %s534, 3
          %s536 = scalar_select %p535, %s534, 3
          %s537 = smul.addr %s536, 8
          %s538 = scalar_lea.vmem %s2, %s537
          %s539 = smul.u32 2, %s23
        $region110: #{fwd.1} parent=63 // pred_fallthru
          _
      $region64: #{fwd.1} parent=5 // pred_fallthru
        _
      %p540 = scmp.le.s32.totalorder 1, %s23
      %p541 = scmp.lt.s32.totalorder %s23, 3
      %p542 = pnand %p540, %p541
      %p543 = pneg %p542
      // Predicated region
      $region111: #{fwd.1} parent=5 // pred_check
        _
      $region112: #{fwd.1} parent=5 // pred_check_branch
        %545 = sbr.rel (%p542) target = $region114
      $region113: #{fwd.1} parent=5 // pred_region
        %s546 = ssub.s32 %s23, 1
        %s547 = sand.u32 %s36, 1
        %s548 = sand.u32 %s36, 1
        %s549 = smul.addr %s548, 48
        %s550 = scalar_lea.vmem [#allocation2], %s549
        // Predicated region
        $region115: #{fwd.1} parent=113 // pred_check
          %p551 = pneg %p49
        $region116: #{fwd.1} parent=113 // pred_check_branch
          %553 = sbr.rel (%p551) target = $region118
        $region117: #{fwd.1} parent=113 // pred_region
          _
        $region118: #{fwd.1} parent=113 // pred_fallthru
          _
        %s554 = sand.u32 %s36, 1
        %s555 = sand.u32 %s36, 1
        %s556 = smul.addr %s555, 48
        %s557 = scalar_lea.vmem [#allocation2], %s556
        %p558 = pneg %p49
        %p559 = pneg %p46
        %s560 = smul.u32 2, %s28
        %p561 = scmp.lt.s32.totalorder %s560, 3
        %s562 = scalar_select %p561, %s560, 3
        %s563 = smul.addr %s562, 8
        %s564 = scalar_lea.vmem %s1, %s563
        %p565 = pneg %p75
        %p566 = pneg %p72
        %s567 = smul.u32 2, %s28
        %p568 = scmp.lt.s32.totalorder %s567, 3
        %s569 = scalar_select %p568, %s567, 3
        %s570 = smul.addr %s569, 8
        %s571 = scalar_lea.vmem %s2, %s570
        %p572 = pneg %p101
        %p573 = pneg %p98
        %p574 = pneg %p122
        %p575 = pneg %p119
        %p576 = pneg %p143
        %p577 = pneg %p140
        %p578 = pneg %p164
        %p579 = pneg %p161
        %p580 = pneg %p185
        %p581 = pneg %p182
        %p582 = pneg %p206
        %p583 = pneg %p203
        %p584 = pneg %p227
        %p585 = pneg %p224
        %p586 = pneg %p248
        %p587 = pneg %p245
        %p588 = pneg %p269
        %p589 = pneg %p266
        %p590 = pneg %p290
        %p591 = pneg %p287
        %p592 = pneg %p311
        %p593 = pneg %p308
        %p594 = pneg %p332
        %p595 = pneg %p329
        %p596 = pneg %p353
        %p597 = pneg %p350
        %p598 = pneg %p379
        %p599 = pneg %p376
        %s600 = sand.u32 %s366, 1
        %s601 = sand.u32 %s366, 1
        %s602 = smul.addr %s601, 24
        %s603 = scalar_lea.vmem [#allocation3], %s602
        %p604 = pneg %p405
        %p605 = pneg %p402
        %s606 = smul.u32 2, %s28
        %p607 = scmp.lt.s32.totalorder %s606, 3
        %s608 = scalar_select %p607, %s606, 3
        %s609 = smul.addr %s608, 4
        %s610 = scalar_lea.vmem %s16, %s609
        %s611 = smul.u32 2, %s28
        %s612 = smul.u32 2, %s28
        %p613 = scmp.lt.s32.totalorder %s612, 3
        %s614 = scalar_select %p613, %s612, 3
        %s615 = smul.addr %s614, 8
        %s616 = scalar_lea.vmem %s1, %s615
        %s617 = smul.u32 2, %s28
        %s618 = smul.u32 2, %s28
        %p619 = scmp.lt.s32.totalorder %s618, 3
        %s620 = scalar_select %p619, %s618, 3
        %s621 = smul.addr %s620, 8
        %s622 = scalar_lea.vmem %s2, %s621
        %s623 = smul.u32 2, %s28
        %s624 = smul.u32 2, %s28
        %s625 = smul.u32 2, %s28
        %p626 = scmp.lt.s32.totalorder %s625, 3
        %s627 = scalar_select %p626, %s625, 3
        %s628 = smul.addr %s627, 4
        %s629 = scalar_lea.vmem %s16, %s628
        %s630 = smul.u32 2, %s28
        %v632 = vld [vmem:[%s550] sm:$0xff]
        %v633 = vld [vmem:[%s550 + $0x8] sm:$0xff]
        %v634 = vld [vmem:[%s550 + $0x10] sm:$0xff]
        %v635 = vld [vmem:[%s550 + $0x18] sm:$0xff]
        %v636 = vld [vmem:[%s550 + $0x20] sm:$0xff]
        %v637 = vld [vmem:[%s550 + $0x28] sm:$0xff]
        %v638 = vld [vmem:[%s616] sm:$0xff]
        %v639 = vld [vmem:[%s616 + $0x8] sm:$0xff]
        %v640 = vld [vmem:[%s622] sm:$0xff]
        %v641 = vld [vmem:[%s622 + $0x8] sm:$0xff]
        %v642 = vld [vmem:[%s3] sm:$0x1]
        %644 = vset.pattern.permute.xlu0 0
        %645 = vperm.xlu0 %644, %v640
        %v646 = vpop.permute.xlu0 %645
        %649 = vset.pattern.permute.xlu0 0
        %650 = vperm.xlu0 %649, %v641
        %v651 = vpop.permute.xlu0 %650
        %v654 = vlaneseq
        %v655 = vshrl.u32 %v654, 7
        %v656 = vsub.s32 0, %v655
        %v657 = vrot.slane %v642, %v656
        %v659 = vmul.f32 %v646, %v657
        %v660 = vmul.f32 %v651, %v657
        %v661 = vlaneseq
        %v662 = vand.u32 %v661, 127
        %vm663 = vcmp.lt.s32.totalorder %v662, 28
        %v664 = vand.u32 2147483647, %v659
        %vm665 = vcmp.le.f32.partialorder %v664, 0.7853982
        %vm666 = vcmp.lt.s32.totalorder %v659, 0
        %v667 = vand.u32 %v659, 2139095040
        %v668 = vshrl.u32 %v667, 23
        %v669 = vsub.s32 %v668, 127
        %v670 = vand.u32 2147483647, %v659
        %v671 = vand.u32 %v670, 8388607
        %v672 = vor.u32 %v671, 8388608
        %v673 = vsub.s32 0, %v672
        %v674 = vadd.s32 %v669, 1
        %vm675 = vcmp.gt.s32.totalorder %v674, 0
        %v676 = vsel %vm675, %v674, 0
        %v677 = vshrl.u32 %v676, 5
        %v678 = vand.u32 %v676, 31
        %v679 = vsub.s32 32, %v678
        %v680 = vshrl.u32 683565275, %v679
        %v681 = vshll.u32 683565275, %v678
        %v682 = vshrl.u32 2475754826, %v679
        %v683 = vor.u32 %v681, %v682
        %v684 = vshll.u32 2475754826, %v678
        %v685 = vshrl.u32 2131351028, %v679
        %v686 = vor.u32 %v684, %v685
        %v687 = vshll.u32 2131351028, %v678
        %v688 = vshrl.u32 2102212464, %v679
        %v689 = vor.u32 %v687, %v688
        %v690 = vshll.u32 2102212464, %v678
        %v691 = vshrl.u32 920167782, %v679
        %v692 = vor.u32 %v690, %v691
        %v693 = vshll.u32 920167782, %v678
        %v694 = vshrl.u32 1326507024, %v679
        %v695 = vor.u32 %v693, %v694
        %vm696 = vcmp.lt.s32.totalorder %v677, 1
        %vm697 = vcmp.lt.s32.totalorder %v677, 2
        %vm698 = vcmp.lt.s32.totalorder %v677, 3
        %vm699 = vcmp.lt.s32.totalorder %v677, 4
        %v700 = vsel %vm696, %v680, %v683
        %v701 = vsel %vm699, %v689, 2102212464
        %v702 = vsel %vm698, %v686, %v701
        %v703 = vsel %vm697, %v700, %v702
        %v704 = vsel %vm696, %v683, %v686
        %v705 = vsel %vm699, %v692, 920167782
        %v706 = vsel %vm698, %v689, %v705
        %v707 = vsel %vm697, %v704, %v706
        %v708 = vsel %vm696, %v686, %v689
        %v709 = vsel %vm699, %v695, 1326507024
        %v710 = vsel %vm698, %v692, %v709
        %v711 = vsel %vm697, %v708, %v710
        %v712 = vshll.u32 %v672, 8
        %v713 = vmul.u32.u64.compose %v712, %v711
        %v714 = vextract.low.u32 %v713
        %v715 = vextract.high.u32 %v713
        %v716 = vmul.u32.u64.compose %v712, %v707
        %v717 = vextract.low.u32 %v716
        %v718 = vextract.high.u32 %v716
        %v719 = vmul.u32 %v712, %v703
        %v720 = vadd.s32 %v715, %v717
        %vm721 = vc.u32 %v715, %v717
        %v722 = vadd.s32 %v718, 1
        %v723 = vsel %vm721, %v722, %v718
        %v724 = vadd.s32 %v719, %v723
        %v725 = vadd.s32 %v724, 536870912
        %v726 = vshrl.u32 %v725, 30
        %v727 = vshll.u32 %v726, 30
        %v728 = vsub.s32 %v724, %v727
        %vm729 = vcmp.lt.s32.totalorder %v728, 0
        %v730 = vsub.s32 0, %v728
        %v731 = vsel %vm729, %v730, %v728
        %v732 = vclz %v731
        %v733 = vsub.s32 %v732, 2
        %vm734 = vcmp.gt.s32.totalorder 0, %v733
        %v735 = vsel %vm734, 0, %v733
        %v736 = vsub.s32 32, %v735
        %v737 = vshll.u32 %v728, %v735
        %v738 = vshrl.u32 %v720, %v736
        %v739 = vor.u32 %v737, %v738
        %v740 = vsub.s32 4294967266, %v735
        %v741 = vadd.s32 %v740, 127
        %v742 = vshll.u32 %v741, 23
        %v743 = vor.u32 4788187, %v742
        %v744 = vand.u32 2147483647, %v743
        %v746 = vcvt.s32.f32 %v739
        %v747 = vmul.f32 %v746, %v744
        %v748 = vxor.u32 %v747, 2147483648
        %v749 = vsel %vm666, %v748, %v747
        %v750 = vsub.s32 4, %v726
        %v751 = vsel %vm666, %v750, %v726
        %v752 = vsel %vm665, %v659, %v749
        %v753 = vsel %vm665, 0, %v751
        %v754 = vcosq.f32.pop %v752
        %v755 = vsinq.f32.pop %v752
        %vm756 = vweird.f32 %v659
        %v757 = vand.u32 %v753, 3
        %vm758 = vcmp.lt.s32.totalorder %v757, 2
        %vm759 = vcmp.eq.s32.totalorder %v757, 0
        %v760 = vxor.u32 %v755, 2147483648
        %v761 = vsel %vm759, %v754, %v760
        %vm762 = vcmp.eq.s32.totalorder %v757, 2
        %v763 = vxor.u32 %v754, 2147483648
        %v764 = vsel %vm762, %v763, %v755
        %v765 = vsel %vm758, %v761, %v764
        %v766 = vsel %vm756, nan, %v765
        %v767 = vand.u32 2147483647, %v660
        %vm768 = vcmp.le.f32.partialorder %v767, 0.7853982
        %vm769 = vcmp.lt.s32.totalorder %v660, 0
        %v770 = vand.u32 %v660, 2139095040
        %v771 = vshrl.u32 %v770, 23
        %v772 = vsub.s32 %v771, 127
        %v773 = vand.u32 2147483647, %v660
        %v774 = vand.u32 %v773, 8388607
        %v775 = vor.u32 %v774, 8388608
        %v776 = vsub.s32 0, %v775
        %v777 = vadd.s32 %v772, 1
        %vm778 = vcmp.gt.s32.totalorder %v777, 0
        %v779 = vsel %vm778, %v777, 0
        %v780 = vshrl.u32 %v779, 5
        %v781 = vand.u32 %v779, 31
        %v782 = vsub.s32 32, %v781
        %v783 = vshrl.u32 683565275, %v782
        %v784 = vshll.u32 683565275, %v781
        %v785 = vshrl.u32 2475754826, %v782
        %v786 = vor.u32 %v784, %v785
        %v787 = vshll.u32 2475754826, %v781
        %v788 = vshrl.u32 2131351028, %v782
        %v789 = vor.u32 %v787, %v788
        %v790 = vshll.u32 2131351028, %v781
        %v791 = vshrl.u32 2102212464, %v782
        %v792 = vor.u32 %v790, %v791
        %v793 = vshll.u32 2102212464, %v781
        %v794 = vshrl.u32 920167782, %v782
        %v795 = vor.u32 %v793, %v794
        %v796 = vshll.u32 920167782, %v781
        %v797 = vshrl.u32 1326507024, %v782
        %v798 = vor.u32 %v796, %v797
        %vm799 = vcmp.lt.s32.totalorder %v780, 1
        %vm800 = vcmp.lt.s32.totalorder %v780, 2
        %vm801 = vcmp.lt.s32.totalorder %v780, 3
        %vm802 = vcmp.lt.s32.totalorder %v780, 4
        %v803 = vsel %vm799, %v783, %v786
        %v804 = vsel %vm802, %v792, 2102212464
        %v805 = vsel %vm801, %v789, %v804
        %v806 = vsel %vm800, %v803, %v805
        %v807 = vsel %vm799, %v786, %v789
        %v808 = vsel %vm802, %v795, 920167782
        %v809 = vsel %vm801, %v792, %v808
        %v810 = vsel %vm800, %v807, %v809
        %v811 = vsel %vm799, %v789, %v792
        %v812 = vsel %vm802, %v798, 1326507024
        %v813 = vsel %vm801, %v795, %v812
        %v814 = vsel %vm800, %v811, %v813
        %v815 = vshll.u32 %v775, 8
        %v816 = vmul.u32.u64.compose %v815, %v814
        %v817 = vextract.low.u32 %v816
        %v818 = vextract.high.u32 %v816
        %v819 = vmul.u32.u64.compose %v815, %v810
        %v820 = vextract.low.u32 %v819
        %v821 = vextract.high.u32 %v819
        %v822 = vmul.u32 %v815, %v806
        %v823 = vadd.s32 %v818, %v820
        %vm824 = vc.u32 %v818, %v820
        %v825 = vadd.s32 %v821, 1
        %v826 = vsel %vm824, %v825, %v821
        %v827 = vadd.s32 %v822, %v826
        %v828 = vadd.s32 %v827, 536870912
        %v829 = vshrl.u32 %v828, 30
        %v830 = vshll.u32 %v829, 30
        %v831 = vsub.s32 %v827, %v830
        %vm832 = vcmp.lt.s32.totalorder %v831, 0
        %v833 = vsub.s32 0, %v831
        %v834 = vsel %vm832, %v833, %v831
        %v835 = vclz %v834
        %v836 = vsub.s32 %v835, 2
        %vm837 = vcmp.gt.s32.totalorder 0, %v836
        %v838 = vsel %vm837, 0, %v836
        %v839 = vsub.s32 32, %v838
        %v840 = vshll.u32 %v831, %v838
        %v841 = vshrl.u32 %v823, %v839
        %v842 = vor.u32 %v840, %v841
        %v843 = vsub.s32 4294967266, %v838
        %v844 = vadd.s32 %v843, 127
        %v845 = vshll.u32 %v844, 23
        %v846 = vor.u32 4788187, %v845
        %v847 = vand.u32 2147483647, %v846
        %v849 = vcvt.s32.f32 %v842
        %v850 = vmul.f32 %v849, %v847
        %v851 = vxor.u32 %v850, 2147483648
        %v852 = vsel %vm769, %v851, %v850
        %v853 = vsub.s32 4, %v829
        %v854 = vsel %vm769, %v853, %v829
        %v855 = vsel %vm768, %v660, %v852
        %v856 = vsel %vm768, 0, %v854
        %v857 = vcosq.f32.pop %v855
        %v858 = vsinq.f32.pop %v855
        %vm859 = vweird.f32 %v660
        %v860 = vand.u32 %v856, 3
        %vm861 = vcmp.lt.s32.totalorder %v860, 2
        %vm862 = vcmp.eq.s32.totalorder %v860, 0
        %v863 = vxor.u32 %v858, 2147483648
        %v864 = vsel %vm862, %v857, %v863
        %vm865 = vcmp.eq.s32.totalorder %v860, 2
        %v866 = vxor.u32 %v857, 2147483648
        %v867 = vsel %vm865, %v866, %v858
        %v868 = vsel %vm861, %v864, %v867
        %v869 = vsel %vm859, nan, %v868
        %v870 = vand.u32 2147483647, %v659
        %vm871 = vcmp.le.f32.partialorder %v870, 0.7853982
        %vm872 = vcmp.lt.s32.totalorder %v659, 0
        %v873 = vand.u32 %v659, 2139095040
        %v874 = vshrl.u32 %v873, 23
        %v875 = vsub.s32 %v874, 127
        %v876 = vand.u32 2147483647, %v659
        %v877 = vand.u32 %v876, 8388607
        %v878 = vor.u32 %v877, 8388608
        %v879 = vsub.s32 0, %v878
        %v880 = vadd.s32 %v875, 1
        %vm881 = vcmp.gt.s32.totalorder %v880, 0
        %v882 = vsel %vm881, %v880, 0
        %v883 = vshrl.u32 %v882, 5
        %v884 = vand.u32 %v882, 31
        %v885 = vsub.s32 32, %v884
        %v886 = vshrl.u32 683565275, %v885
        %v887 = vshll.u32 683565275, %v884
        %v888 = vshrl.u32 2475754826, %v885
        %v889 = vor.u32 %v887, %v888
        %v890 = vshll.u32 2475754826, %v884
        %v891 = vshrl.u32 2131351028, %v885
        %v892 = vor.u32 %v890, %v891
        %v893 = vshll.u32 2131351028, %v884
        %v894 = vshrl.u32 2102212464, %v885
        %v895 = vor.u32 %v893, %v894
        %v896 = vshll.u32 2102212464, %v884
        %v897 = vshrl.u32 920167782, %v885
        %v898 = vor.u32 %v896, %v897
        %v899 = vshll.u32 920167782, %v884
        %v900 = vshrl.u32 1326507024, %v885
        %v901 = vor.u32 %v899, %v900
        %vm902 = vcmp.lt.s32.totalorder %v883, 1
        %vm903 = vcmp.lt.s32.totalorder %v883, 2
        %vm904 = vcmp.lt.s32.totalorder %v883, 3
        %vm905 = vcmp.lt.s32.totalorder %v883, 4
        %v906 = vsel %vm902, %v886, %v889
        %v907 = vsel %vm905, %v895, 2102212464
        %v908 = vsel %vm904, %v892, %v907
        %v909 = vsel %vm903, %v906, %v908
        %v910 = vsel %vm902, %v889, %v892
        %v911 = vsel %vm905, %v898, 920167782
        %v912 = vsel %vm904, %v895, %v911
        %v913 = vsel %vm903, %v910, %v912
        %v914 = vsel %vm902, %v892, %v895
        %v915 = vsel %vm905, %v901, 1326507024
        %v916 = vsel %vm904, %v898, %v915
        %v917 = vsel %vm903, %v914, %v916
        %v918 = vshll.u32 %v878, 8
        %v919 = vmul.u32.u64.compose %v918, %v917
        %v920 = vextract.low.u32 %v919
        %v921 = vextract.high.u32 %v919
        %v922 = vmul.u32.u64.compose %v918, %v913
        %v923 = vextract.low.u32 %v922
        %v924 = vextract.high.u32 %v922
        %v925 = vmul.u32 %v918, %v909
        %v926 = vadd.s32 %v921, %v923
        %vm927 = vc.u32 %v921, %v923
        %v928 = vadd.s32 %v924, 1
        %v929 = vsel %vm927, %v928, %v924
        %v930 = vadd.s32 %v925, %v929
        %v931 = vadd.s32 %v930, 536870912
        %v932 = vshrl.u32 %v931, 30
        %v933 = vshll.u32 %v932, 30
        %v934 = vsub.s32 %v930, %v933
        %vm935 = vcmp.lt.s32.totalorder %v934, 0
        %v936 = vsub.s32 0, %v934
        %v937 = vsel %vm935, %v936, %v934
        %v938 = vclz %v937
        %v939 = vsub.s32 %v938, 2
        %vm940 = vcmp.gt.s32.totalorder 0, %v939
        %v941 = vsel %vm940, 0, %v939
        %v942 = vsub.s32 32, %v941
        %v943 = vshll.u32 %v934, %v941
        %v944 = vshrl.u32 %v926, %v942
        %v945 = vor.u32 %v943, %v944
        %v946 = vsub.s32 4294967266, %v941
        %v947 = vadd.s32 %v946, 127
        %v948 = vshll.u32 %v947, 23
        %v949 = vor.u32 4788187, %v948
        %v950 = vand.u32 2147483647, %v949
        %v952 = vcvt.s32.f32 %v945
        %v953 = vmul.f32 %v952, %v950
        %v954 = vxor.u32 %v953, 2147483648
        %v955 = vsel %vm872, %v954, %v953
        %v956 = vsub.s32 4, %v932
        %v957 = vsel %vm872, %v956, %v932
        %v958 = vsel %vm871, %v659, %v955
        %v959 = vsel %vm871, 0, %v957
        %v960 = vcosq.f32.pop %v958
        %v961 = vsinq.f32.pop %v958
        %vm962 = vweird.f32 %v659
        %v963 = vadd.s32 %v959, 3
        %v964 = vand.u32 %v963, 3
        %vm965 = vcmp.lt.s32.totalorder %v964, 2
        %vm966 = vcmp.eq.s32.totalorder %v964, 0
        %v967 = vxor.u32 %v961, 2147483648
        %v968 = vsel %vm966, %v960, %v967
        %vm969 = vcmp.eq.s32.totalorder %v964, 2
        %v970 = vxor.u32 %v960, 2147483648
        %v971 = vsel %vm969, %v970, %v961
        %v972 = vsel %vm965, %v968, %v971
        %v973 = vsel %vm962, nan, %v972
        %v974 = vand.u32 2147483647, %v660
        %vm975 = vcmp.le.f32.partialorder %v974, 0.7853982
        %vm976 = vcmp.lt.s32.totalorder %v660, 0
        %v977 = vand.u32 %v660, 2139095040
        %v978 = vshrl.u32 %v977, 23
        %v979 = vsub.s32 %v978, 127
        %v980 = vand.u32 2147483647, %v660
        %v981 = vand.u32 %v980, 8388607
        %v982 = vor.u32 %v981, 8388608
        %v983 = vsub.s32 0, %v982
        %v984 = vadd.s32 %v979, 1
        %vm985 = vcmp.gt.s32.totalorder %v984, 0
        %v986 = vsel %vm985, %v984, 0
        %v987 = vshrl.u32 %v986, 5
        %v988 = vand.u32 %v986, 31
        %v989 = vsub.s32 32, %v988
        %v990 = vshrl.u32 683565275, %v989
        %v991 = vshll.u32 683565275, %v988
        %v992 = vshrl.u32 2475754826, %v989
        %v993 = vor.u32 %v991, %v992
        %v994 = vshll.u32 2475754826, %v988
        %v995 = vshrl.u32 2131351028, %v989
        %v996 = vor.u32 %v994, %v995
        %v997 = vshll.u32 2131351028, %v988
        %v998 = vshrl.u32 2102212464, %v989
        %v999 = vor.u32 %v997, %v998
        %v1000 = vshll.u32 2102212464, %v988
        %v1001 = vshrl.u32 920167782, %v989
        %v1002 = vor.u32 %v1000, %v1001
        %v1003 = vshll.u32 920167782, %v988
        %v1004 = vshrl.u32 1326507024, %v989
        %v1005 = vor.u32 %v1003, %v1004
        %vm1006 = vcmp.lt.s32.totalorder %v987, 1
        %vm1007 = vcmp.lt.s32.totalorder %v987, 2
        %vm1008 = vcmp.lt.s32.totalorder %v987, 3
        %vm1009 = vcmp.lt.s32.totalorder %v987, 4
        %v1010 = vsel %vm1006, %v990, %v993
        %v1011 = vsel %vm1009, %v999, 2102212464
        %v1012 = vsel %vm1008, %v996, %v1011
        %v1013 = vsel %vm1007, %v1010, %v1012
        %v1014 = vsel %vm1006, %v993, %v996
        %v1015 = vsel %vm1009, %v1002, 920167782
        %v1016 = vsel %vm1008, %v999, %v1015
        %v1017 = vsel %vm1007, %v1014, %v1016
        %v1018 = vsel %vm1006, %v996, %v999
        %v1019 = vsel %vm1009, %v1005, 1326507024
        %v1020 = vsel %vm1008, %v1002, %v1019
        %v1021 = vsel %vm1007, %v1018, %v1020
        %v1022 = vshll.u32 %v982, 8
        %v1023 = vmul.u32.u64.compose %v1022, %v1021
        %v1024 = vextract.low.u32 %v1023
        %v1025 = vextract.high.u32 %v1023
        %v1026 = vmul.u32.u64.compose %v1022, %v1017
        %v1027 = vextract.low.u32 %v1026
        %v1028 = vextract.high.u32 %v1026
        %v1029 = vmul.u32 %v1022, %v1013
        %v1030 = vadd.s32 %v1025, %v1027
        %vm1031 = vc.u32 %v1025, %v1027
        %v1032 = vadd.s32 %v1028, 1
        %v1033 = vsel %vm1031, %v1032, %v1028
        %v1034 = vadd.s32 %v1029, %v1033
        %v1035 = vadd.s32 %v1034, 536870912
        %v1036 = vshrl.u32 %v1035, 30
        %v1037 = vshll.u32 %v1036, 30
        %v1038 = vsub.s32 %v1034, %v1037
        %vm1039 = vcmp.lt.s32.totalorder %v1038, 0
        %v1040 = vsub.s32 0, %v1038
        %v1041 = vsel %vm1039, %v1040, %v1038
        %v1042 = vclz %v1041
        %v1043 = vsub.s32 %v1042, 2
        %vm1044 = vcmp.gt.s32.totalorder 0, %v1043
        %v1045 = vsel %vm1044, 0, %v1043
        %v1046 = vsub.s32 32, %v1045
        %v1047 = vshll.u32 %v1038, %v1045
        %v1048 = vshrl.u32 %v1030, %v1046
        %v1049 = vor.u32 %v1047, %v1048
        %v1050 = vsub.s32 4294967266, %v1045
        %v1051 = vadd.s32 %v1050, 127
        %v1052 = vshll.u32 %v1051, 23
        %v1053 = vor.u32 4788187, %v1052
        %v1054 = vand.u32 2147483647, %v1053
        %v1056 = vcvt.s32.f32 %v1049
        %v1057 = vmul.f32 %v1056, %v1054
        %v1058 = vxor.u32 %v1057, 2147483648
        %v1059 = vsel %vm976, %v1058, %v1057
        %v1060 = vsub.s32 4, %v1036
        %v1061 = vsel %vm976, %v1060, %v1036
        %v1062 = vsel %vm975, %v660, %v1059
        %v1063 = vsel %vm975, 0, %v1061
        %v1064 = vcosq.f32.pop %v1062
        %v1065 = vsinq.f32.pop %v1062
        %vm1066 = vweird.f32 %v660
        %v1067 = vadd.s32 %v1063, 3
        %v1068 = vand.u32 %v1067, 3
        %vm1069 = vcmp.lt.s32.totalorder %v1068, 2
        %vm1070 = vcmp.eq.s32.totalorder %v1068, 0
        %v1071 = vxor.u32 %v1065, 2147483648
        %v1072 = vsel %vm1070, %v1064, %v1071
        %vm1073 = vcmp.eq.s32.totalorder %v1068, 2
        %v1074 = vxor.u32 %v1064, 2147483648
        %v1075 = vsel %vm1073, %v1074, %v1065
        %v1076 = vsel %vm1069, %v1072, %v1075
        %v1077 = vsel %vm1066, nan, %v1076
        %v1078 = vsel %vm663, %v766, %v973
        %v1079 = vsel %vm663, %v869, %v1077
        %vm1080 = vcmp.ge.s32.totalorder %v662, 24
        %vm1081 = vcmp.lt.s32.totalorder %v662, 32
        %vm1082 = vmand %vm1080, %vm1081
        %v1083 = vsel %vm1082, %v1078, 0.0
        %v1084 = vsel %vm1082, %v1079, 0.0
        %v1085 = vadd.f32 %v638, %v1083
        %v1086 = vadd.f32 %v639, %v1084
        %v1087 = vadd.f32 %v632, %v1083
        %v1088 = vadd.f32 %v633, %v1084
        %v1089 = vadd.f32 %v634, %v1083
        %v1090 = vadd.f32 %v635, %v1084
        %v1091 = vadd.f32 %v636, %v1083
        %v1092 = vadd.f32 %v637, %v1084
        %v1093 = vld [vmem:[%s4] sm:$0xff]
        %v1094 = vld [vmem:[%s4 + $0x8] sm:$0xf]
        %v1095 = vld [vmem:[%s4 + $0xc] sm:$0xff]
        %v1096 = vld [vmem:[%s4 + $0x14] sm:$0xf]
        %v1097 = vld [vmem:[%s4 + $0x18] sm:$0xff]
        %v1098 = vld [vmem:[%s4 + $0x20] sm:$0xf]
        %v1099 = vld [vmem:[%s4 + $0x24] sm:$0xff]
        %v1100 = vld [vmem:[%s4 + $0x2c] sm:$0xf]
        %v1101 = vld [vmem:[%s4 + $0x30] sm:$0xff]
        %v1102 = vld [vmem:[%s4 + $0x38] sm:$0xf]
        %v1103 = vld [vmem:[%s4 + $0x3c] sm:$0xff]
        %v1104 = vld [vmem:[%s4 + $0x44] sm:$0xf]
        %v1105 = vld [vmem:[%s4 + $0x48] sm:$0xff]
        %v1106 = vld [vmem:[%s4 + $0x50] sm:$0xf]
        %v1107 = vld [vmem:[%s4 + $0x54] sm:$0xff]
        %v1108 = vld [vmem:[%s4 + $0x5c] sm:$0xf]
        %v1109 = vld [vmem:[%s4 + $0x60] sm:$0xff]
        %v1110 = vld [vmem:[%s4 + $0x68] sm:$0xf]
        %v1111 = vld [vmem:[%s4 + $0x6c] sm:$0xff]
        %v1112 = vld [vmem:[%s4 + $0x74] sm:$0xf]
        %v1113 = vld [vmem:[%s4 + $0x78] sm:$0xff]
        %v1114 = vld [vmem:[%s4 + $0x80] sm:$0xf]
        %v1115 = vld [vmem:[%s4 + $0x84] sm:$0xff]
        %v1116 = vld [vmem:[%s4 + $0x8c] sm:$0xf]
        %v1117 = vld [vmem:[%s4 + $0x90] sm:$0xff]
        %v1118 = vld [vmem:[%s4 + $0x98] sm:$0xf]
        %v1119 = vld [vmem:[%s4 + $0x9c] sm:$0xff]
        %v1120 = vld [vmem:[%s4 + $0xa4] sm:$0xf]
        %v1121 = vld [vmem:[%s4 + $0xa8] sm:$0xff]
        %v1122 = vld [vmem:[%s4 + $0xb0] sm:$0xf]
        %v1123 = vld [vmem:[%s4 + $0xb4] sm:$0xff]
        %v1124 = vld [vmem:[%s4 + $0xbc] sm:$0xf]
        %v1125 = vld [vmem:[%s5] sm:$0xff]
        %v1126 = vld [vmem:[%s5 + $0x8] sm:$0xff]
        %v1127 = vld [vmem:[%s5 + $0x10] sm:$0xff]
        %v1128 = vld [vmem:[%s5 + $0x18] sm:$0xff]
        %v1129 = vld [vmem:[%s5 + $0x20] sm:$0xff]
        %v1130 = vld [vmem:[%s5 + $0x28] sm:$0xff]
        %v1131 = vld [vmem:[%s5 + $0x30] sm:$0xff]
        %v1132 = vld [vmem:[%s5 + $0x38] sm:$0xff]
        %v1133 = vld [vmem:[%s5 + $0x40] sm:$0xff]
        %v1134 = vld [vmem:[%s5 + $0x48] sm:$0xff]
        %v1135 = vld [vmem:[%s5 + $0x50] sm:$0xff]
        %v1136 = vld [vmem:[%s5 + $0x58] sm:$0xff]
        %v1137 = vld [vmem:[%s5 + $0x60] sm:$0xff]
        %v1138 = vld [vmem:[%s5 + $0x68] sm:$0xff]
        %v1139 = vld [vmem:[%s5 + $0x70] sm:$0xff]
        %v1140 = vld [vmem:[%s5 + $0x78] sm:$0xff]
        %v1141 = vld [vmem:[%s6] sm:$0x3]
        %v1142 = vld [vmem:[%s7] sm:$0xf]
        %v1143 = vld [vmem:[%s7 + $0x4] sm:$0xf]
        %v1144 = vld [vmem:[%s7 + $0x8] sm:$0xf]
        %v1145 = vld [vmem:[%s7 + $0xc] sm:$0xf]
        %v1146 = vld [vmem:[%s7 + $0x10] sm:$0xf]
        %v1147 = vld [vmem:[%s7 + $0x14] sm:$0xf]
        %v1148 = vld [vmem:[%s7 + $0x18] sm:$0xf]
        %v1149 = vld [vmem:[%s7 + $0x1c] sm:$0xf]
        %v1150 = vld [vmem:[%s7 + $0x20] sm:$0xf]
        %v1151 = vld [vmem:[%s7 + $0x24] sm:$0xf]
        %v1152 = vld [vmem:[%s7 + $0x28] sm:$0xf]
        %v1153 = vld [vmem:[%s7 + $0x2c] sm:$0xf]
        %v1154 = vld [vmem:[%s7 + $0x30] sm:$0xf]
        %v1155 = vld [vmem:[%s7 + $0x34] sm:$0xf]
        %v1156 = vld [vmem:[%s7 + $0x38] sm:$0xf]
        %v1157 = vld [vmem:[%s7 + $0x3c] sm:$0xf]
        %v1158 = vpack.c.bf16 %v1088, %v1087
        %v1159 = vpack.c.bf16 %v1090, %v1089
        %v1160 = vpack.c.bf16 %v1092, %v1091
        %v1193 = vunpack.c.l.b16 %v1093
        %v1194 = vunpack.c.h.b16 %v1093
        %v1195 = vunpack.c.l.b16 %v1094
        %v1196 = vunpack.c.l.b16 %v1095
        %v1197 = vunpack.c.h.b16 %v1095
        %v1198 = vunpack.c.l.b16 %v1096
        %v1199 = vunpack.c.l.b16 %v1097
        %v1200 = vunpack.c.h.b16 %v1097
        %v1201 = vunpack.c.l.b16 %v1098
        %v1202 = vunpack.c.l.b16 %v1099
        %v1203 = vunpack.c.h.b16 %v1099
        %v1204 = vunpack.c.l.b16 %v1100
        %v1205 = vunpack.c.l.b16 %v1101
        %v1206 = vunpack.c.h.b16 %v1101
        %v1207 = vunpack.c.l.b16 %v1102
        %v1208 = vunpack.c.l.b16 %v1103
        %v1209 = vunpack.c.h.b16 %v1103
        %v1210 = vunpack.c.l.b16 %v1104
        %v1211 = vunpack.c.l.b16 %v1105
        %v1212 = vunpack.c.h.b16 %v1105
        %v1213 = vunpack.c.l.b16 %v1106
        %v1214 = vunpack.c.l.b16 %v1107
        %v1215 = vunpack.c.h.b16 %v1107
        %v1216 = vunpack.c.l.b16 %v1108
        %v1217 = vunpack.c.l.b16 %v1109
        %v1218 = vunpack.c.h.b16 %v1109
        %v1219 = vunpack.c.l.b16 %v1110
        %v1220 = vunpack.c.l.b16 %v1111
        %v1221 = vunpack.c.h.b16 %v1111
        %v1222 = vunpack.c.l.b16 %v1112
        %v1223 = vunpack.c.l.b16 %v1113
        %v1224 = vunpack.c.h.b16 %v1113
        %v1225 = vunpack.c.l.b16 %v1114
        %v1226 = vunpack.c.l.b16 %v1115
        %v1227 = vunpack.c.h.b16 %v1115
        %v1228 = vunpack.c.l.b16 %v1116
        %v1229 = vunpack.c.l.b16 %v1117
        %v1230 = vunpack.c.h.b16 %v1117
        %v1231 = vunpack.c.l.b16 %v1118
        %v1232 = vunpack.c.l.b16 %v1119
        %v1233 = vunpack.c.h.b16 %v1119
        %v1234 = vunpack.c.l.b16 %v1120
        %v1235 = vunpack.c.l.b16 %v1121
        %v1236 = vunpack.c.h.b16 %v1121
        %v1237 = vunpack.c.l.b16 %v1122
        %v1238 = vunpack.c.l.b16 %v1123
        %v1239 = vunpack.c.h.b16 %v1123
        %v1240 = vunpack.c.l.b16 %v1124
        %v1241 = vpack.c.b16 %v1196, %v1193
        %v1242 = vpack.c.b16 %v1197, %v1194
        %v1243 = vpack.c.b16 %v1198, %v1195
        %v1244 = vpack.c.b16 %v1202, %v1199
        %v1245 = vpack.c.b16 %v1203, %v1200
        %v1246 = vpack.c.b16 %v1204, %v1201
        %v1247 = vpack.c.b16 %v1208, %v1205
        %v1248 = vpack.c.b16 %v1209, %v1206
        %v1249 = vpack.c.b16 %v1210, %v1207
        %v1250 = vpack.c.b16 %v1214, %v1211
        %v1251 = vpack.c.b16 %v1215, %v1212
        %v1252 = vpack.c.b16 %v1216, %v1213
        %v1253 = vpack.c.b16 %v1220, %v1217
        %v1254 = vpack.c.b16 %v1221, %v1218
        %v1255 = vpack.c.b16 %v1222, %v1219
        %v1256 = vpack.c.b16 %v1226, %v1223
        %v1257 = vpack.c.b16 %v1227, %v1224
        %v1258 = vpack.c.b16 %v1228, %v1225
        %v1259 = vpack.c.b16 %v1232, %v1229
        %v1260 = vpack.c.b16 %v1233, %v1230
        %v1261 = vpack.c.b16 %v1234, %v1231
        %v1262 = vpack.c.b16 %v1238, %v1235
        %v1263 = vpack.c.b16 %v1239, %v1236
        %v1264 = vpack.c.b16 %v1240, %v1237
        %1289 = vmatprep.subr.bf16.mxu0 %v1242
        %1290 = vmatpush1.bf16.msra.mxu0 %v1241
        %1291 = vmatprep.subr.bf16.mxu0 %v1245
        %1292 = vmatpush1.bf16.msra.mxu0 %v1244
        %1293 = vmatprep.subr.bf16.mxu0 %v1248
        %1294 = vmatpush1.bf16.msra.mxu0 %v1247
        %1295 = vmatprep.subr.bf16.mxu0 %v1251
        %1296 = vmatpush1.bf16.msra.mxu0 %v1250
        %1297 = vmatprep.subr.bf16.mxu0 %v1254
        %1298 = vmatpush1.bf16.msra.mxu0 %v1253
        %1299 = vmatprep.subr.bf16.mxu0 %v1257
        %1300 = vmatpush1.bf16.msra.mxu0 %v1256
        %1301 = vmatprep.subr.bf16.mxu0 %v1260
        %1302 = vmatpush1.bf16.msra.mxu0 %v1259
        %1303 = vmatprep.subr.bf16.mxu0 %v1263
        %1304 = vmatpush1.bf16.msra.mxu0 %v1262
        %1305 = vmatprep.subr.bf16.mxu0 0
        %1306 = vmatpush1.bf16.msra.mxu0 0
        %1307 = vmatprep.subr.bf16.mxu0 0
        %1308 = vmatpush1.bf16.msra.mxu0 0
        %1309 = vmatprep.subr.bf16.mxu0 0
        %1310 = vmatpush1.bf16.msra.mxu0 0
        %1311 = vmatprep.subr.bf16.mxu0 0
        %1312 = vmatpush1.bf16.msra.mxu0 0
        %1313 = vmatprep.subr.bf16.mxu0 0
        %1314 = vmatpush1.bf16.msra.mxu0 0
        %1315 = vmatprep.subr.bf16.mxu0 0
        %1316 = vmatpush1.bf16.msra.mxu0 0
        %1317 = vmatprep.subr.bf16.mxu0 0
        %1318 = vmatpush1.bf16.msra.mxu0 0
        %1319 = vmatprep.subr.bf16.mxu0 0
        %1320 = vmatpush1.bf16.msra.mxu0 0
        %1321 = vmatprep.mubr.bf16.mxu0 0
        %1322 = vmatmul.mubr.bf16.gmra.mrb[0].mxu0 %v1158
        %v1323 = vpop.f32.mrb[0].mxu0
        %v1324 = vadd.f32 0.0, %v1323
        %v1325 = vpop.f32.mrb[0].mxu0
        %v1326 = vadd.f32 0.0, %v1325
        %v1327 = vpop.f32.mrb[0].mxu0
        %v1328 = vadd.f32 0.0, %v1327
        %v1329 = vpop.f32.mrb[0].mxu0
        %v1330 = vadd.f32 0.0, %v1329
        %1331 = vmatprep.mubr.bf16.mxu0 0
        %1332 = vmatmul.mubr.bf16.gmra.mrb[0].mxu0 %v1159
        %v1333 = vpop.f32.mrb[0].mxu0
        %v1334 = vadd.f32 0.0, %v1333
        %v1335 = vpop.f32.mrb[0].mxu0
        %v1336 = vadd.f32 0.0, %v1335
        %v1337 = vpop.f32.mrb[0].mxu0
        %v1338 = vadd.f32 0.0, %v1337
        %v1339 = vpop.f32.mrb[0].mxu0
        %v1340 = vadd.f32 0.0, %v1339
        %1341 = vmatprep.mubr.bf16.mxu0 0
        %1342 = vmatmul.mubr.bf16.gmra.mrb[0].mxu0 %v1160
        %v1343 = vpop.f32.mrb[0].mxu0
        %v1344 = vadd.f32 0.0, %v1343
        %v1345 = vpop.f32.mrb[0].mxu0
        %v1346 = vadd.f32 0.0, %v1345
        %v1347 = vpop.f32.mrb[0].mxu0
        %v1348 = vadd.f32 0.0, %v1347
        %v1349 = vpop.f32.mrb[0].mxu0
        %v1350 = vadd.f32 0.0, %v1349
        %1351 = vdwg.mxu0
        %1352 = vmatprep.subr.bf16.mxu0 0
        %1353 = vmatpush1.bf16.msra.mxu0 %v1243
        %1354 = vmatprep.subr.bf16.mxu0 0
        %1355 = vmatpush1.bf16.msra.mxu0 %v1246
        %1356 = vmatprep.subr.bf16.mxu0 0
        %1357 = vmatpush1.bf16.msra.mxu0 %v1249
        %1358 = vmatprep.subr.bf16.mxu0 0
        %1359 = vmatpush1.bf16.msra.mxu0 %v1252
        %1360 = vmatprep.subr.bf16.mxu0 0
        %1361 = vmatpush1.bf16.msra.mxu0 %v1255
        %1362 = vmatprep.subr.bf16.mxu0 0
        %1363 = vmatpush1.bf16.msra.mxu0 %v1258
        %1364 = vmatprep.subr.bf16.mxu0 0
        %1365 = vmatpush1.bf16.msra.mxu0 %v1261
        %1366 = vmatprep.subr.bf16.mxu0 0
        %1367 = vmatpush1.bf16.msra.mxu0 %v1264
        %1368 = vmatprep.subr.bf16.mxu0 0
        %1369 = vmatpush1.bf16.msra.mxu0 0
        %1370 = vmatprep.subr.bf16.mxu0 0
        %1371 = vmatpush1.bf16.msra.mxu0 0
        %1372 = vmatprep.subr.bf16.mxu0 0
        %1373 = vmatpush1.bf16.msra.mxu0 0
        %1374 = vmatprep.subr.bf16.mxu0 0
        %1375 = vmatpush1.bf16.msra.mxu0 0
        %1376 = vmatprep.subr.bf16.mxu0 0
        %1377 = vmatpush1.bf16.msra.mxu0 0
        %1378 = vmatprep.subr.bf16.mxu0 0
        %1379 = vmatpush1.bf16.msra.mxu0 0
        %1380 = vmatprep.subr.bf16.mxu0 0
        %1381 = vmatpush1.bf16.msra.mxu0 0
        %1382 = vmatprep.subr.bf16.mxu0 0
        %1383 = vmatpush1.bf16.msra.mxu0 0
        %1384 = vmatprep.mubr.bf16.mxu0 0
        %1385 = vmatmul.mubr.bf16.gmra.mrb[0].mxu0 %v1158
        %v1386 = vpop.f32.mrb[0].mxu0
        %v1387 = vadd.f32 0.0, %v1386
        %v1388 = vpop.f32.mrb[0].mxu0
        %v1389 = vpop.f32.mrb[0].mxu0
        %v1390 = vadd.f32 0.0, %v1389
        %v1391 = vpop.f32.mrb[0].mxu0
        %1392 = vmatprep.mubr.bf16.mxu0 0
        %1393 = vmatmul.mubr.bf16.gmra.mrb[0].mxu0 %v1159
        %v1394 = vpop.f32.mrb[0].mxu0
        %v1395 = vadd.f32 0.0, %v1394
        %v1396 = vpop.f32.mrb[0].mxu0
        %v1397 = vpop.f32.mrb[0].mxu0
        %v1398 = vadd.f32 0.0, %v1397
        %v1399 = vpop.f32.mrb[0].mxu0
        %1400 = vmatprep.mubr.bf16.mxu0 0
        %1401 = vmatmul.mubr.bf16.gmra.mrb[0].mxu0 %v1160
        %v1402 = vpop.f32.mrb[0].mxu0
        %v1403 = vadd.f32 0.0, %v1402
        %v1404 = vpop.f32.mrb[0].mxu0
        %v1405 = vpop.f32.mrb[0].mxu0
        %v1406 = vadd.f32 0.0, %v1405
        %v1407 = vpop.f32.mrb[0].mxu0
        %1408 = vdwg.mxu0
        %v1409 = vpack.c.bf16 %v1086, %v1085
        %v1411 = vlaneseq
        %v1412 = vshrl.u32 %v1411, 7
        %v1413 = vsub.s32 0, %v1412
        %v1414 = vrot.slane %v1141, %v1413
        %v1415 = vlaneseq
        %v1416 = vshrl.u32 %v1415, 7
        %v1417 = vsub.s32 1, %v1416
        %v1418 = vrot.slane %v1141, %v1417
        %v1437 = vunpack.c.l.b16 %v1125
        %v1438 = vunpack.c.h.b16 %v1125
        %v1439 = vunpack.c.l.b16 %v1126
        %v1440 = vunpack.c.h.b16 %v1126
        %v1441 = vunpack.c.l.b16 %v1127
        %v1442 = vunpack.c.h.b16 %v1127
        %v1443 = vunpack.c.l.b16 %v1128
        %v1444 = vunpack.c.h.b16 %v1128
        %v1445 = vunpack.c.l.b16 %v1129
        %v1446 = vunpack.c.h.b16 %v1129
        %v1447 = vunpack.c.l.b16 %v1130
        %v1448 = vunpack.c.h.b16 %v1130
        %v1449 = vunpack.c.l.b16 %v1131
        %v1450 = vunpack.c.h.b16 %v1131
        %v1451 = vunpack.c.l.b16 %v1132
        %v1452 = vunpack.c.h.b16 %v1132
        %v1453 = vunpack.c.l.b16 %v1133
        %v1454 = vunpack.c.h.b16 %v1133
        %v1455 = vunpack.c.l.b16 %v1134
        %v1456 = vunpack.c.h.b16 %v1134
        %v1457 = vunpack.c.l.b16 %v1135
        %v1458 = vunpack.c.h.b16 %v1135
        %v1459 = vunpack.c.l.b16 %v1136
        %v1460 = vunpack.c.h.b16 %v1136
        %v1461 = vunpack.c.l.b16 %v1137
        %v1462 = vunpack.c.h.b16 %v1137
        %v1463 = vunpack.c.l.b16 %v1138
        %v1464 = vunpack.c.h.b16 %v1138
        %v1465 = vunpack.c.l.b16 %v1139
        %v1466 = vunpack.c.h.b16 %v1139
        %v1467 = vunpack.c.l.b16 %v1140
        %v1468 = vunpack.c.h.b16 %v1140
        %v1469 = vpack.c.b16 %v1439, %v1437
        %v1470 = vpack.c.b16 %v1440, %v1438
        %v1471 = vpack.c.b16 %v1443, %v1441
        %v1472 = vpack.c.b16 %v1444, %v1442
        %v1473 = vpack.c.b16 %v1447, %v1445
        %v1474 = vpack.c.b16 %v1448, %v1446
        %v1475 = vpack.c.b16 %v1451, %v1449
        %v1476 = vpack.c.b16 %v1452, %v1450
        %v1477 = vpack.c.b16 %v1455, %v1453
        %v1478 = vpack.c.b16 %v1456, %v1454
        %v1479 = vpack.c.b16 %v1459, %v1457
        %v1480 = vpack.c.b16 %v1460, %v1458
        %v1481 = vpack.c.b16 %v1463, %v1461
        %v1482 = vpack.c.b16 %v1464, %v1462
        %v1483 = vpack.c.b16 %v1467, %v1465
        %v1484 = vpack.c.b16 %v1468, %v1466
        %1501 = vmatprep.subr.bf16.mxu0 %v1470
        %1502 = vmatpush1.bf16.msra.mxu0 %v1469
        %1503 = vmatprep.subr.bf16.mxu0 %v1472
        %1504 = vmatpush1.bf16.msra.mxu0 %v1471
        %1505 = vmatprep.subr.bf16.mxu0 %v1474
        %1506 = vmatpush1.bf16.msra.mxu0 %v1473
        %1507 = vmatprep.subr.bf16.mxu0 %v1476
        %1508 = vmatpush1.bf16.msra.mxu0 %v1475
        %1509 = vmatprep.subr.bf16.mxu0 %v1478
        %1510 = vmatpush1.bf16.msra.mxu0 %v1477
        %1511 = vmatprep.subr.bf16.mxu0 %v1480
        %1512 = vmatpush1.bf16.msra.mxu0 %v1479
        %1513 = vmatprep.subr.bf16.mxu0 %v1482
        %1514 = vmatpush1.bf16.msra.mxu0 %v1481
        %1515 = vmatprep.subr.bf16.mxu0 %v1484
        %1516 = vmatpush1.bf16.msra.mxu0 %v1483
        %1517 = vmatprep.subr.bf16.mxu0 0
        %1518 = vmatpush1.bf16.msra.mxu0 0
        %1519 = vmatprep.subr.bf16.mxu0 0
        %1520 = vmatpush1.bf16.msra.mxu0 0
        %1521 = vmatprep.subr.bf16.mxu0 0
        %1522 = vmatpush1.bf16.msra.mxu0 0
        %1523 = vmatprep.subr.bf16.mxu0 0
        %1524 = vmatpush1.bf16.msra.mxu0 0
        %1525 = vmatprep.subr.bf16.mxu0 0
        %1526 = vmatpush1.bf16.msra.mxu0 0
        %1527 = vmatprep.subr.bf16.mxu0 0
        %1528 = vmatpush1.bf16.msra.mxu0 0
        %1529 = vmatprep.subr.bf16.mxu0 0
        %1530 = vmatpush1.bf16.msra.mxu0 0
        %1531 = vmatprep.subr.bf16.mxu0 0
        %1532 = vmatpush1.bf16.msra.mxu0 0
        %1533 = vmatprep.mubr.bf16.mxu0 0
        %1534 = vmatmul.mubr.bf16.gmra.mrb[0].mxu0 %v1409
        %v1535 = vpop.f32.mrb[0].mxu0
        %v1536 = vadd.f32 %v1414, %v1535
        %v1537 = vpop.f32.mrb[0].mxu0
        %v1538 = vadd.f32 %v1418, %v1537
        %v1539 = vpop.f32.mrb[0].mxu0
        %v1540 = vadd.f32 %v1414, %v1539
        %v1541 = vpop.f32.mrb[0].mxu0
        %v1542 = vadd.f32 %v1418, %v1541
        %1543 = vdwg.mxu0
        %v1544 = vmul.f32 %v1326, %v1387
        %v1545 = vmul.f32 %v1330, %v1390
        %v1546 = vmul.f32 %v1336, %v1395
        %v1547 = vmul.f32 %v1340, %v1398
        %v1548 = vmul.f32 %v1346, %v1403
        %v1549 = vmul.f32 %v1350, %v1406
        %v1550 = vadd.f32 %v1544, %v1546
        %v1551 = vadd.f32 %v1545, %v1547
        %v1552 = vadd.f32 %v1550, %v1548
        %v1553 = vadd.f32 %v1551, %v1549
        %v1554 = vadd.f32 %v1552, %v1538
        %v1555 = vadd.f32 %v1553, %v1542
        %v1556 = vmul.f32 %v1324, %v1536
        %v1557 = vmul.f32 %v1328, %v1540
        %v1558 = vmul.f32 %v1334, %v1536
        %v1559 = vmul.f32 %v1338, %v1540
        %v1560 = vmul.f32 %v1344, %v1536
        %v1561 = vmul.f32 %v1348, %v1540
        %v1562 = vpack.c.bf16 %v1557, %v1556
        %v1563 = vpack.c.bf16 %v1559, %v1558
        %v1564 = vpack.c.bf16 %v1561, %v1560
        %v1581 = vunpack.c.l.b16 %v1142
        %v1582 = vunpack.c.l.b16 %v1143
        %v1583 = vunpack.c.l.b16 %v1144
        %v1584 = vunpack.c.l.b16 %v1145
        %v1585 = vunpack.c.l.b16 %v1146
        %v1586 = vunpack.c.l.b16 %v1147
        %v1587 = vunpack.c.l.b16 %v1148
        %v1588 = vunpack.c.l.b16 %v1149
        %v1589 = vunpack.c.l.b16 %v1150
        %v1590 = vunpack.c.l.b16 %v1151
        %v1591 = vunpack.c.l.b16 %v1152
        %v1592 = vunpack.c.l.b16 %v1153
        %v1593 = vunpack.c.l.b16 %v1154
        %v1594 = vunpack.c.l.b16 %v1155
        %v1595 = vunpack.c.l.b16 %v1156
        %v1596 = vunpack.c.l.b16 %v1157
        %v1597 = vpack.c.b16 %v1582, %v1581
        %v1598 = vpack.c.b16 %v1584, %v1583
        %v1599 = vpack.c.b16 %v1586, %v1585
        %v1600 = vpack.c.b16 %v1588, %v1587
        %v1601 = vpack.c.b16 %v1590, %v1589
        %v1602 = vpack.c.b16 %v1592, %v1591
        %v1603 = vpack.c.b16 %v1594, %v1593
        %v1604 = vpack.c.b16 %v1596, %v1595
        %1613 = vmatprep.subr.bf16.mxu0 0
        %1614 = vmatpush1.bf16.msra.mxu0 %v1597
        %1615 = vmatprep.subr.bf16.mxu0 0
        %1616 = vmatpush1.bf16.msra.mxu0 %v1598
        %1617 = vmatprep.subr.bf16.mxu0 0
        %1618 = vmatpush1.bf16.msra.mxu0 %v1599
        %1619 = vmatprep.subr.bf16.mxu0 0
        %1620 = vmatpush1.bf16.msra.mxu0 %v1600
        %1621 = vmatprep.subr.bf16.mxu0 0
        %1622 = vmatpush1.bf16.msra.mxu0 %v1601
        %1623 = vmatprep.subr.bf16.mxu0 0
        %1624 = vmatpush1.bf16.msra.mxu0 %v1602
        %1625 = vmatprep.subr.bf16.mxu0 0
        %1626 = vmatpush1.bf16.msra.mxu0 %v1603
        %1627 = vmatprep.subr.bf16.mxu0 0
        %1628 = vmatpush1.bf16.msra.mxu0 %v1604
        %1629 = vmatprep.subr.bf16.mxu0 0
        %1630 = vmatpush1.bf16.msra.mxu0 0
        %1631 = vmatprep.subr.bf16.mxu0 0
        %1632 = vmatpush1.bf16.msra.mxu0 0
        %1633 = vmatprep.subr.bf16.mxu0 0
        %1634 = vmatpush1.bf16.msra.mxu0 0
        %1635 = vmatprep.subr.bf16.mxu0 0
        %1636 = vmatpush1.bf16.msra.mxu0 0
        %1637 = vmatprep.subr.bf16.mxu0 0
        %1638 = vmatpush1.bf16.msra.mxu0 0
        %1639 = vmatprep.subr.bf16.mxu0 0
        %1640 = vmatpush1.bf16.msra.mxu0 0
        %1641 = vmatprep.subr.bf16.mxu0 0
        %1642 = vmatpush1.bf16.msra.mxu0 0
        %1643 = vmatprep.subr.bf16.mxu0 0
        %1644 = vmatpush1.bf16.msra.mxu0 0
        %1645 = vmatprep.mubr.bf16.mxu0 0
        %1646 = vmatmul.mubr.bf16.gmra.mrb[0].mxu0 %v1562
        %v1647 = vpop.f32.mrb[0].mxu0
        %v1648 = vadd.f32 0.0, %v1647
        %v1649 = vpop.f32.mrb[0].mxu0
        %v1650 = vpop.f32.mrb[0].mxu0
        %v1651 = vadd.f32 0.0, %v1650
        %v1652 = vpop.f32.mrb[0].mxu0
        %1653 = vmatprep.mubr.bf16.mxu0 0
        %1654 = vmatmul.mubr.bf16.gmra.mrb[0].mxu0 %v1563
        %v1655 = vpop.f32.mrb[0].mxu0
        %v1656 = vadd.f32 0.0, %v1655
        %v1657 = vpop.f32.mrb[0].mxu0
        %v1658 = vpop.f32.mrb[0].mxu0
        %v1659 = vadd.f32 0.0, %v1658
        %v1660 = vpop.f32.mrb[0].mxu0
        %1661 = vmatprep.mubr.bf16.mxu0 0
        %1662 = vmatmul.mubr.bf16.gmra.mrb[0].mxu0 %v1564
        %v1663 = vpop.f32.mrb[0].mxu0
        %v1664 = vadd.f32 0.0, %v1663
        %v1665 = vpop.f32.mrb[0].mxu0
        %v1666 = vpop.f32.mrb[0].mxu0
        %v1667 = vadd.f32 0.0, %v1666
        %v1668 = vpop.f32.mrb[0].mxu0
        %1669 = vdwg.mxu0
        %v1670 = vmul.f32 %v1648, %v1648
        %v1671 = vmul.f32 %v1651, %v1651
        %v1672 = vmul.f32 %v1656, %v1656
        %v1673 = vmul.f32 %v1659, %v1659
        %v1674 = vadd.f32 %v1670, %v1672
        %v1675 = vadd.f32 %v1671, %v1673
        %v1676 = vmul.f32 %v1664, %v1664
        %v1677 = vmul.f32 %v1667, %v1667
        %v1678 = vadd.f32 %v1674, %v1676
        %v1679 = vadd.f32 %v1675, %v1677
        %v1680 = vadd.f32 %v1678, 1e-06
        %v1681 = vadd.f32 %v1679, 1e-06
        %v1682 = vrsqrt.pop %v1680
        %v1683 = vrsqrt.pop %v1681
        %v1684 = vmul.f32 %v1556, %v1648
        %v1685 = vmul.f32 %v1557, %v1651
        %v1686 = vmul.f32 %v1558, %v1656
        %v1687 = vmul.f32 %v1559, %v1659
        %v1688 = vadd.f32 %v1684, %v1686
        %v1689 = vadd.f32 %v1685, %v1687
        %v1690 = vmul.f32 %v1560, %v1664
        %v1691 = vmul.f32 %v1561, %v1667
        %v1692 = vadd.f32 %v1688, %v1690
        %v1693 = vadd.f32 %v1689, %v1691
        %v1694 = vmul.f32 %v1692, %v1682
        %v1695 = vmul.f32 %v1693, %v1683
        %vm1696 = vcmp.ge.f32.partialorder %v1694, 0.0
        %vm1697 = vcmp.ge.f32.partialorder %v1695, 0.0
        %v1698 = vmul.f32 %v1694, 0.2
        %v1699 = vmul.f32 %v1695, 0.2
        %v1700 = vsel %vm1696, %v1694, %v1698
        %v1701 = vsel %vm1697, %v1695, %v1699
        %v1702 = vsub.f32 %v1700, %v1694
        %v1703 = vsub.f32 %v1701, %v1695
        %v1704 = vmul.f32 %v1702, %v1682
        %v1705 = vmul.f32 %v1703, %v1683
        %v1706 = vmul.f32 %v1704, %v1648
        %v1707 = vmul.f32 %v1705, %v1651
        %v1708 = vmul.f32 %v1704, %v1656
        %v1709 = vmul.f32 %v1705, %v1659
        %v1710 = vmul.f32 %v1704, %v1664
        %v1711 = vmul.f32 %v1705, %v1667
        %v1712 = vadd.f32 %v1556, %v1706
        %v1713 = vadd.f32 %v1557, %v1707
        %v1714 = vadd.f32 %v1558, %v1708
        %v1715 = vadd.f32 %v1559, %v1709
        %v1716 = vadd.f32 %v1560, %v1710
        %v1717 = vadd.f32 %v1561, %v1711
        %vm1718 = vcmp.ge.f32.partialorder %v1554, 0.0
        %vm1719 = vcmp.ge.f32.partialorder %v1555, 0.0
        %v1720 = vmul.f32 %v1554, 0.2
        %v1721 = vmul.f32 %v1555, 0.2
        %v1722 = vsel %vm1718, %v1554, %v1720
        %v1723 = vsel %vm1719, %v1555, %v1721
        %v1724 = vadd.f32 %v1712, %v1087
        %v1725 = vadd.f32 %v1713, %v1088
        %v1726 = vadd.f32 %v1714, %v1089
        %v1727 = vadd.f32 %v1715, %v1090
        %v1728 = vadd.f32 %v1716, %v1091
        %v1729 = vadd.f32 %v1717, %v1092
        %v1730 = vadd.f32 %v1722, %v1085
        %v1731 = vadd.f32 %v1723, %v1086
        %v1732 = vld [vmem:[%s8] sm:$0xff]
        %v1733 = vld [vmem:[%s8 + $0x8] sm:$0xf]
        %v1734 = vld [vmem:[%s8 + $0xc] sm:$0xff]
        %v1735 = vld [vmem:[%s8 + $0x14] sm:$0xf]
        %v1736 = vld [vmem:[%s8 + $0x18] sm:$0xff]
        %v1737 = vld [vmem:[%s8 + $0x20] sm:$0xf]
        %v1738 = vld [vmem:[%s8 + $0x24] sm:$0xff]
        %v1739 = vld [vmem:[%s8 + $0x2c] sm:$0xf]
        %v1740 = vld [vmem:[%s8 + $0x30] sm:$0xff]
        %v1741 = vld [vmem:[%s8 + $0x38] sm:$0xf]
        %v1742 = vld [vmem:[%s8 + $0x3c] sm:$0xff]
        %v1743 = vld [vmem:[%s8 + $0x44] sm:$0xf]
        %v1744 = vld [vmem:[%s8 + $0x48] sm:$0xff]
        %v1745 = vld [vmem:[%s8 + $0x50] sm:$0xf]
        %v1746 = vld [vmem:[%s8 + $0x54] sm:$0xff]
        %v1747 = vld [vmem:[%s8 + $0x5c] sm:$0xf]
        %v1748 = vld [vmem:[%s8 + $0x60] sm:$0xff]
        %v1749 = vld [vmem:[%s8 + $0x68] sm:$0xf]
        %v1750 = vld [vmem:[%s8 + $0x6c] sm:$0xff]
        %v1751 = vld [vmem:[%s8 + $0x74] sm:$0xf]
        %v1752 = vld [vmem:[%s8 + $0x78] sm:$0xff]
        %v1753 = vld [vmem:[%s8 + $0x80] sm:$0xf]
        %v1754 = vld [vmem:[%s8 + $0x84] sm:$0xff]
        %v1755 = vld [vmem:[%s8 + $0x8c] sm:$0xf]
        %v1756 = vld [vmem:[%s8 + $0x90] sm:$0xff]
        %v1757 = vld [vmem:[%s8 + $0x98] sm:$0xf]
        %v1758 = vld [vmem:[%s8 + $0x9c] sm:$0xff]
        %v1759 = vld [vmem:[%s8 + $0xa4] sm:$0xf]
        %v1760 = vld [vmem:[%s8 + $0xa8] sm:$0xff]
        %v1761 = vld [vmem:[%s8 + $0xb0] sm:$0xf]
        %v1762 = vld [vmem:[%s8 + $0xb4] sm:$0xff]
        %v1763 = vld [vmem:[%s8 + $0xbc] sm:$0xf]
        %v1764 = vld [vmem:[%s9] sm:$0xff]
        %v1765 = vld [vmem:[%s9 + $0x8] sm:$0xff]
        %v1766 = vld [vmem:[%s9 + $0x10] sm:$0xff]
        %v1767 = vld [vmem:[%s9 + $0x18] sm:$0xff]
        %v1768 = vld [vmem:[%s9 + $0x20] sm:$0xff]
        %v1769 = vld [vmem:[%s9 + $0x28] sm:$0xff]
        %v1770 = vld [vmem:[%s9 + $0x30] sm:$0xff]
        %v1771 = vld [vmem:[%s9 + $0x38] sm:$0xff]
        %v1772 = vld [vmem:[%s9 + $0x40] sm:$0xff]
        %v1773 = vld [vmem:[%s9 + $0x48] sm:$0xff]
        %v1774 = vld [vmem:[%s9 + $0x50] sm:$0xff]
        %v1775 = vld [vmem:[%s9 + $0x58] sm:$0xff]
        %v1776 = vld [vmem:[%s9 + $0x60] sm:$0xff]
        %v1777 = vld [vmem:[%s9 + $0x68] sm:$0xff]
        %v1778 = vld [vmem:[%s9 + $0x70] sm:$0xff]
        %v1779 = vld [vmem:[%s9 + $0x78] sm:$0xff]
        %v1780 = vld [vmem:[%s10] sm:$0x3]
        %v1781 = vld [vmem:[%s11] sm:$0xf]
        %v1782 = vld [vmem:[%s11 + $0x4] sm:$0xf]
        %v1783 = vld [vmem:[%s11 + $0x8] sm:$0xf]
        %v1784 = vld [vmem:[%s11 + $0xc] sm:$0xf]
        %v1785 = vld [vmem:[%s11 + $0x10] sm:$0xf]
        %v1786 = vld [vmem:[%s11 + $0x14] sm:$0xf]
        %v1787 = vld [vmem:[%s11 + $0x18] sm:$0xf]
        %v1788 = vld [vmem:[%s11 + $0x1c] sm:$0xf]
        %v1789 = vld [vmem:[%s11 + $0x20] sm:$0xf]
        %v1790 = vld [vmem:[%s11 + $0x24] sm:$0xf]
        %v1791 = vld [vmem:[%s11 + $0x28] sm:$0xf]
        %v1792 = vld [vmem:[%s11 + $0x2c] sm:$0xf]
        %v1793 = vld [vmem:[%s11 + $0x30] sm:$0xf]
        %v1794 = vld [vmem:[%s11 + $0x34] sm:$0xf]
        %v1795 = vld [vmem:[%s11 + $0x38] sm:$0xf]
        %v1796 = vld [vmem:[%s11 + $0x3c] sm:$0xf]
        %v1797 = vpack.c.bf16 %v1725, %v1724
        %v1798 = vpack.c.bf16 %v1727, %v1726
        %v1799 = vpack.c.bf16 %v1729, %v1728
        %v1832 = vunpack.c.l.b16 %v1732
        %v1833 = vunpack.c.h.b16 %v1732
        %v1834 = vunpack.c.l.b16 %v1733
        %v1835 = vunpack.c.l.b16 %v1734
        %v1836 = vunpack.c.h.b16 %v1734
        %v1837 = vunpack.c.l.b16 %v1735
        %v1838 = vunpack.c.l.b16 %v1736
        %v1839 = vunpack.c.h.b16 %v1736
        %v1840 = vunpack.c.l.b16 %v1737
        %v1841 = vunpack.c.l.b16 %v1738
        %v1842 = vunpack.c.h.b16 %v1738
        %v1843 = vunpack.c.l.b16 %v1739
        %v1844 = vunpack.c.l.b16 %v1740
        %v1845 = vunpack.c.h.b16 %v1740
        %v1846 = vunpack.c.l.b16 %v1741
        %v1847 = vunpack.c.l.b16 %v1742
        %v1848 = vunpack.c.h.b16 %v1742
        %v1849 = vunpack.c.l.b16 %v1743
        %v1850 = vunpack.c.l.b16 %v1744
        %v1851 = vunpack.c.h.b16 %v1744
        %v1852 = vunpack.c.l.b16 %v1745
        %v1853 = vunpack.c.l.b16 %v1746
        %v1854 = vunpack.c.h.b16 %v1746
        %v1855 = vunpack.c.l.b16 %v1747
        %v1856 = vunpack.c.l.b16 %v1748
        %v1857 = vunpack.c.h.b16 %v1748
        %v1858 = vunpack.c.l.b16 %v1749
        %v1859 = vunpack.c.l.b16 %v1750
        %v1860 = vunpack.c.h.b16 %v1750
        %v1861 = vunpack.c.l.b16 %v1751
        %v1862 = vunpack.c.l.b16 %v1752
        %v1863 = vunpack.c.h.b16 %v1752
        %v1864 = vunpack.c.l.b16 %v1753
        %v1865 = vunpack.c.l.b16 %v1754
        %v1866 = vunpack.c.h.b16 %v1754
        %v1867 = vunpack.c.l.b16 %v1755
        %v1868 = vunpack.c.l.b16 %v1756
        %v1869 = vunpack.c.h.b16 %v1756
        %v1870 = vunpack.c.l.b16 %v1757
        %v1871 = vunpack.c.l.b16 %v1758
        %v1872 = vunpack.c.h.b16 %v1758
        %v1873 = vunpack.c.l.b16 %v1759
        %v1874 = vunpack.c.l.b16 %v1760
        %v1875 = vunpack.c.h.b16 %v1760
        %v1876 = vunpack.c.l.b16 %v1761
        %v1877 = vunpack.c.l.b16 %v1762
        %v1878 = vunpack.c.h.b16 %v1762
        %v1879 = vunpack.c.l.b16 %v1763
        %v1880 = vpack.c.b16 %v1835, %v1832
        %v1881 = vpack.c.b16 %v1836, %v1833
        %v1882 = vpack.c.b16 %v1837, %v1834
        %v1883 = vpack.c.b16 %v1841, %v1838
        %v1884 = vpack.c.b16 %v1842, %v1839
        %v1885 = vpack.c.b16 %v1843, %v1840
        %v1886 = vpack.c.b16 %v1847, %v1844
        %v1887 = vpack.c.b16 %v1848, %v1845
        %v1888 = vpack.c.b16 %v1849, %v1846
        %v1889 = vpack.c.b16 %v1853, %v1850
        %v1890 = vpack.c.b16 %v1854, %v1851
        %v1891 = vpack.c.b16 %v1855, %v1852
        %v1892 = vpack.c.b16 %v1859, %v1856
        %v1893 = vpack.c.b16 %v1860, %v1857
        %v1894 = vpack.c.b16 %v1861, %v1858
        %v1895 = vpack.c.b16 %v1865, %v1862
        %v1896 = vpack.c.b16 %v1866, %v1863
        %v1897 = vpack.c.b16 %v1867, %v1864
        %v1898 = vpack.c.b16 %v1871, %v1868
        %v1899 = vpack.c.b16 %v1872, %v1869
        %v1900 = vpack.c.b16 %v1873, %v1870
        %v1901 = vpack.c.b16 %v1877, %v1874
        %v1902 = vpack.c.b16 %v1878, %v1875
        %v1903 = vpack.c.b16 %v1879, %v1876
        %1928 = vmatprep.subr.bf16.mxu0 %v1881
        %1929 = vmatpush1.bf16.msra.mxu0 %v1880
        %1930 = vmatprep.subr.bf16.mxu0 %v1884
        %1931 = vmatpush1.bf16.msra.mxu0 %v1883
        %1932 = vmatprep.subr.bf16.mxu0 %v1887
        %1933 = vmatpush1.bf16.msra.mxu0 %v1886
        %1934 = vmatprep.subr.bf16.mxu0 %v1890
        %1935 = vmatpush1.bf16.msra.mxu0 %v1889
        %1936 = vmatprep.subr.bf16.mxu0 %v1893
        %1937 = vmatpush1.bf16.msra.mxu0 %v1892
        %1938 = vmatprep.subr.bf16.mxu0 %v1896
        %1939 = vmatpush1.bf16.msra.mxu0 %v1895
        %1940 = vmatprep.subr.bf16.mxu0 %v1899
        %1941 = vmatpush1.bf16.msra.mxu0 %v1898
        %1942 = vmatprep.subr.bf16.mxu0 %v1902
        %1943 = vmatpush1.bf16.msra.mxu0 %v1901
        %1944 = vmatprep.subr.bf16.mxu0 0
        %1945 = vmatpush1.bf16.msra.mxu0 0
        %1946 = vmatprep.subr.bf16.mxu0 0
        %1947 = vmatpush1.bf16.msra.mxu0 0
        %1948 = vmatprep.subr.bf16.mxu0 0
        %1949 = vmatpush1.bf16.msra.mxu0 0
        %1950 = vmatprep.subr.bf16.mxu0 0
        %1951 = vmatpush1.bf16.msra.mxu0 0
        %1952 = vmatprep.subr.bf16.mxu0 0
        %1953 = vmatpush1.bf16.msra.mxu0 0
        %1954 = vmatprep.subr.bf16.mxu0 0
        %1955 = vmatpush1.bf16.msra.mxu0 0
        %1956 = vmatprep.subr.bf16.mxu0 0
        %1957 = vmatpush1.bf16.msra.mxu0 0
        %1958 = vmatprep.subr.bf16.mxu0 0
        %1959 = vmatpush1.bf16.msra.mxu0 0
        %1960 = vmatprep.mubr.bf16.mxu0 0
        %1961 = vmatmul.mubr.bf16.gmra.mrb[0].mxu0 %v1797
        %v1962 = vpop.f32.mrb[0].mxu0
        %v1963 = vadd.f32 0.0, %v1962
        %v1964 = vpop.f32.mrb[0].mxu0
        %v1965 = vadd.f32 0.0, %v1964
        %v1966 = vpop.f32.mrb[0].mxu0
        %v1967 = vadd.f32 0.0, %v1966
        %v1968 = vpop.f32.mrb[0].mxu0
        %v1969 = vadd.f32 0.0, %v1968
        %1970 = vmatprep.mubr.bf16.mxu0 0
        %1971 = vmatmul.mubr.bf16.gmra.mrb[0].mxu0 %v1798
        %v1972 = vpop.f32.mrb[0].mxu0
        %v1973 = vadd.f32 0.0, %v1972
        %v1974 = vpop.f32.mrb[0].mxu0
        %v1975 = vadd.f32 0.0, %v1974
        %v1976 = vpop.f32.mrb[0].mxu0
        %v1977 = vadd.f32 0.0, %v1976
        %v1978 = vpop.f32.mrb[0].mxu0
        %v1979 = vadd.f32 0.0, %v1978
        %1980 = vmatprep.mubr.bf16.mxu0 0
        %1981 = vmatmul.mubr.bf16.gmra.mrb[0].mxu0 %v1799
        %v1982 = vpop.f32.mrb[0].mxu0
        %v1983 = vadd.f32 0.0, %v1982
        %v1984 = vpop.f32.mrb[0].mxu0
        %v1985 = vadd.f32 0.0, %v1984
        %v1986 = vpop.f32.mrb[0].mxu0
        %v1987 = vadd.f32 0.0, %v1986
        %v1988 = vpop.f32.mrb[0].mxu0
        %v1989 = vadd.f32 0.0, %v1988
        %1990 = vdwg.mxu0
        %1991 = vmatprep.subr.bf16.mxu0 0
        %1992 = vmatpush1.bf16.msra.mxu0 %v1882
        %1993 = vmatprep.subr.bf16.mxu0 0
        %1994 = vmatpush1.bf16.msra.mxu0 %v1885
        %1995 = vmatprep.subr.bf16.mxu0 0
        %1996 = vmatpush1.bf16.msra.mxu0 %v1888
        %1997 = vmatprep.subr.bf16.mxu0 0
        %1998 = vmatpush1.bf16.msra.mxu0 %v1891
        %1999 = vmatprep.subr.bf16.mxu0 0
        %2000 = vmatpush1.bf16.msra.mxu0 %v1894
        %2001 = vmatprep.subr.bf16.mxu0 0
        %2002 = vmatpush1.bf16.msra.mxu0 %v1897
        %2003 = vmatprep.subr.bf16.mxu0 0
        %2004 = vmatpush1.bf16.msra.mxu0 %v1900
        %2005 = vmatprep.subr.bf16.mxu0 0
        %2006 = vmatpush1.bf16.msra.mxu0 %v1903
        %2007 = vmatprep.subr.bf16.mxu0 0
        %2008 = vmatpush1.bf16.msra.mxu0 0
        %2009 = vmatprep.subr.bf16.mxu0 0
        %2010 = vmatpush1.bf16.msra.mxu0 0
        %2011 = vmatprep.subr.bf16.mxu0 0
        %2012 = vmatpush1.bf16.msra.mxu0 0
        %2013 = vmatprep.subr.bf16.mxu0 0
        %2014 = vmatpush1.bf16.msra.mxu0 0
        %2015 = vmatprep.subr.bf16.mxu0 0
        %2016 = vmatpush1.bf16.msra.mxu0 0
        %2017 = vmatprep.subr.bf16.mxu0 0
        %2018 = vmatpush1.bf16.msra.mxu0 0
        %2019 = vmatprep.subr.bf16.mxu0 0
        %2020 = vmatpush1.bf16.msra.mxu0 0
        %2021 = vmatprep.subr.bf16.mxu0 0
        %2022 = vmatpush1.bf16.msra.mxu0 0
        %2023 = vmatprep.mubr.bf16.mxu0 0
        %2024 = vmatmul.mubr.bf16.gmra.mrb[0].mxu0 %v1797
        %v2025 = vpop.f32.mrb[0].mxu0
        %v2026 = vadd.f32 0.0, %v2025
        %v2027 = vpop.f32.mrb[0].mxu0
        %v2028 = vpop.f32.mrb[0].mxu0
        %v2029 = vadd.f32 0.0, %v2028
        %v2030 = vpop.f32.mrb[0].mxu0
        %2031 = vmatprep.mubr.bf16.mxu0 0
        %2032 = vmatmul.mubr.bf16.gmra.mrb[0].mxu0 %v1798
        %v2033 = vpop.f32.mrb[0].mxu0
        %v2034 = vadd.f32 0.0, %v2033
        %v2035 = vpop.f32.mrb[0].mxu0
        %v2036 = vpop.f32.mrb[0].mxu0
        %v2037 = vadd.f32 0.0, %v2036
        %v2038 = vpop.f32.mrb[0].mxu0
        %2039 = vmatprep.mubr.bf16.mxu0 0
        %2040 = vmatmul.mubr.bf16.gmra.mrb[0].mxu0 %v1799
        %v2041 = vpop.f32.mrb[0].mxu0
        %v2042 = vadd.f32 0.0, %v2041
        %v2043 = vpop.f32.mrb[0].mxu0
        %v2044 = vpop.f32.mrb[0].mxu0
        %v2045 = vadd.f32 0.0, %v2044
        %v2046 = vpop.f32.mrb[0].mxu0
        %2047 = vdwg.mxu0
        %v2048 = vpack.c.bf16 %v1731, %v1730
        %v2050 = vlaneseq
        %v2051 = vshrl.u32 %v2050, 7
        %v2052 = vsub.s32 0, %v2051
        %v2053 = vrot.slane %v1780, %v2052
        %v2054 = vlaneseq
        %v2055 = vshrl.u32 %v2054, 7
        %v2056 = vsub.s32 1, %v2055
        %v2057 = vrot.slane %v1780, %v2056
        %v2076 = vunpack.c.l.b16 %v1764
        %v2077 = vunpack.c.h.b16 %v1764
        %v2078 = vunpack.c.l.b16 %v1765
        %v2079 = vunpack.c.h.b16 %v1765
        %v2080 = vunpack.c.l.b16 %v1766
        %v2081 = vunpack.c.h.b16 %v1766
        %v2082 = vunpack.c.l.b16 %v1767
        %v2083 = vunpack.c.h.b16 %v1767
        %v2084 = vunpack.c.l.b16 %v1768
        %v2085 = vunpack.c.h.b16 %v1768
        %v2086 = vunpack.c.l.b16 %v1769
        %v2087 = vunpack.c.h.b16 %v1769
        %v2088 = vunpack.c.l.b16 %v1770
        %v2089 = vunpack.c.h.b16 %v1770
        %v2090 = vunpack.c.l.b16 %v1771
        %v2091 = vunpack.c.h.b16 %v1771
        %v2092 = vunpack.c.l.b16 %v1772
        %v2093 = vunpack.c.h.b16 %v1772
        %v2094 = vunpack.c.l.b16 %v1773
        %v2095 = vunpack.c.h.b16 %v1773
        %v2096 = vunpack.c.l.b16 %v1774
        %v2097 = vunpack.c.h.b16 %v1774
        %v2098 = vunpack.c.l.b16 %v1775
        %v2099 = vunpack.c.h.b16 %v1775
        %v2100 = vunpack.c.l.b16 %v1776
        %v2101 = vunpack.c.h.b16 %v1776
        %v2102 = vunpack.c.l.b16 %v1777
        %v2103 = vunpack.c.h.b16 %v1777
        %v2104 = vunpack.c.l.b16 %v1778
        %v2105 = vunpack.c.h.b16 %v1778
        %v2106 = vunpack.c.l.b16 %v1779
        %v2107 = vunpack.c.h.b16 %v1779
        %v2108 = vpack.c.b16 %v2078, %v2076
        %v2109 = vpack.c.b16 %v2079, %v2077
        %v2110 = vpack.c.b16 %v2082, %v2080
        %v2111 = vpack.c.b16 %v2083, %v2081
        %v2112 = vpack.c.b16 %v2086, %v2084
        %v2113 = vpack.c.b16 %v2087, %v2085
        %v2114 = vpack.c.b16 %v2090, %v2088
        %v2115 = vpack.c.b16 %v2091, %v2089
        %v2116 = vpack.c.b16 %v2094, %v2092
        %v2117 = vpack.c.b16 %v2095, %v2093
        %v2118 = vpack.c.b16 %v2098, %v2096
        %v2119 = vpack.c.b16 %v2099, %v2097
        %v2120 = vpack.c.b16 %v2102, %v2100
        %v2121 = vpack.c.b16 %v2103, %v2101
        %v2122 = vpack.c.b16 %v2106, %v2104
        %v2123 = vpack.c.b16 %v2107, %v2105
        %2140 = vmatprep.subr.bf16.mxu0 %v2109
        %2141 = vmatpush1.bf16.msra.mxu0 %v2108
        %2142 = vmatprep.subr.bf16.mxu0 %v2111
        %2143 = vmatpush1.bf16.msra.mxu0 %v2110
        %2144 = vmatprep.subr.bf16.mxu0 %v2113
        %2145 = vmatpush1.bf16.msra.mxu0 %v2112
        %2146 = vmatprep.subr.bf16.mxu0 %v2115
        %2147 = vmatpush1.bf16.msra.mxu0 %v2114
        %2148 = vmatprep.subr.bf16.mxu0 %v2117
        %2149 = vmatpush1.bf16.msra.mxu0 %v2116
        %2150 = vmatprep.subr.bf16.mxu0 %v2119
        %2151 = vmatpush1.bf16.msra.mxu0 %v2118
        %2152 = vmatprep.subr.bf16.mxu0 %v2121
        %2153 = vmatpush1.bf16.msra.mxu0 %v2120
        %2154 = vmatprep.subr.bf16.mxu0 %v2123
        %2155 = vmatpush1.bf16.msra.mxu0 %v2122
        %2156 = vmatprep.subr.bf16.mxu0 0
        %2157 = vmatpush1.bf16.msra.mxu0 0
        %2158 = vmatprep.subr.bf16.mxu0 0
        %2159 = vmatpush1.bf16.msra.mxu0 0
        %2160 = vmatprep.subr.bf16.mxu0 0
        %2161 = vmatpush1.bf16.msra.mxu0 0
        %2162 = vmatprep.subr.bf16.mxu0 0
        %2163 = vmatpush1.bf16.msra.mxu0 0
        %2164 = vmatprep.subr.bf16.mxu0 0
        %2165 = vmatpush1.bf16.msra.mxu0 0
        %2166 = vmatprep.subr.bf16.mxu0 0
        %2167 = vmatpush1.bf16.msra.mxu0 0
        %2168 = vmatprep.subr.bf16.mxu0 0
        %2169 = vmatpush1.bf16.msra.mxu0 0
        %2170 = vmatprep.subr.bf16.mxu0 0
        %2171 = vmatpush1.bf16.msra.mxu0 0
        %2172 = vmatprep.mubr.bf16.mxu0 0
        %2173 = vmatmul.mubr.bf16.gmra.mrb[0].mxu0 %v2048
        %v2174 = vpop.f32.mrb[0].mxu0
        %v2175 = vadd.f32 %v2053, %v2174
        %v2176 = vpop.f32.mrb[0].mxu0
        %v2177 = vadd.f32 %v2057, %v2176
        %v2178 = vpop.f32.mrb[0].mxu0
        %v2179 = vadd.f32 %v2053, %v2178
        %v2180 = vpop.f32.mrb[0].mxu0
        %v2181 = vadd.f32 %v2057, %v2180
        %2182 = vdwg.mxu0
        %v2183 = vmul.f32 %v1965, %v2026
        %v2184 = vmul.f32 %v1969, %v2029
        %v2185 = vmul.f32 %v1975, %v2034
        %v2186 = vmul.f32 %v1979, %v2037
        %v2187 = vmul.f32 %v1985, %v2042
        %v2188 = vmul.f32 %v1989, %v2045
        %v2189 = vadd.f32 %v2183, %v2185
        %v2190 = vadd.f32 %v2184, %v2186
        %v2191 = vadd.f32 %v2189, %v2187
        %v2192 = vadd.f32 %v2190, %v2188
        %v2193 = vadd.f32 %v2191, %v2177
        %v2194 = vadd.f32 %v2192, %v2181
        %v2195 = vmul.f32 %v1963, %v2175
        %v2196 = vmul.f32 %v1967, %v2179
        %v2197 = vmul.f32 %v1973, %v2175
        %v2198 = vmul.f32 %v1977, %v2179
        %v2199 = vmul.f32 %v1983, %v2175
        %v2200 = vmul.f32 %v1987, %v2179
        %v2201 = vpack.c.bf16 %v2196, %v2195
        %v2202 = vpack.c.bf16 %v2198, %v2197
        %v2203 = vpack.c.bf16 %v2200, %v2199
        %v2220 = vunpack.c.l.b16 %v1781
        %v2221 = vunpack.c.l.b16 %v1782
        %v2222 = vunpack.c.l.b16 %v1783
        %v2223 = vunpack.c.l.b16 %v1784
        %v2224 = vunpack.c.l.b16 %v1785
        %v2225 = vunpack.c.l.b16 %v1786
        %v2226 = vunpack.c.l.b16 %v1787
        %v2227 = vunpack.c.l.b16 %v1788
        %v2228 = vunpack.c.l.b16 %v1789
        %v2229 = vunpack.c.l.b16 %v1790
        %v2230 = vunpack.c.l.b16 %v1791
        %v2231 = vunpack.c.l.b16 %v1792
        %v2232 = vunpack.c.l.b16 %v1793
        %v2233 = vunpack.c.l.b16 %v1794
        %v2234 = vunpack.c.l.b16 %v1795
        %v2235 = vunpack.c.l.b16 %v1796
        %v2236 = vpack.c.b16 %v2221, %v2220
        %v2237 = vpack.c.b16 %v2223, %v2222
        %v2238 = vpack.c.b16 %v2225, %v2224
        %v2239 = vpack.c.b16 %v2227, %v2226
        %v2240 = vpack.c.b16 %v2229, %v2228
        %v2241 = vpack.c.b16 %v2231, %v2230
        %v2242 = vpack.c.b16 %v2233, %v2232
        %v2243 = vpack.c.b16 %v2235, %v2234
        %2252 = vmatprep.subr.bf16.mxu0 0
        %2253 = vmatpush1.bf16.msra.mxu0 %v2236
        %2254 = vmatprep.subr.bf16.mxu0 0
        %2255 = vmatpush1.bf16.msra.mxu0 %v2237
        %2256 = vmatprep.subr.bf16.mxu0 0
        %2257 = vmatpush1.bf16.msra.mxu0 %v2238
        %2258 = vmatprep.subr.bf16.mxu0 0
        %2259 = vmatpush1.bf16.msra.mxu0 %v2239
        %2260 = vmatprep.subr.bf16.mxu0 0
        %2261 = vmatpush1.bf16.msra.mxu0 %v2240
        %2262 = vmatprep.subr.bf16.mxu0 0
        %2263 = vmatpush1.bf16.msra.mxu0 %v2241
        %2264 = vmatprep.subr.bf16.mxu0 0
        %2265 = vmatpush1.bf16.msra.mxu0 %v2242
        %2266 = vmatprep.subr.bf16.mxu0 0
        %2267 = vmatpush1.bf16.msra.mxu0 %v2243
        %2268 = vmatprep.subr.bf16.mxu0 0
        %2269 = vmatpush1.bf16.msra.mxu0 0
        %2270 = vmatprep.subr.bf16.mxu0 0
        %2271 = vmatpush1.bf16.msra.mxu0 0
        %2272 = vmatprep.subr.bf16.mxu0 0
        %2273 = vmatpush1.bf16.msra.mxu0 0
        %2274 = vmatprep.subr.bf16.mxu0 0
        %2275 = vmatpush1.bf16.msra.mxu0 0
        %2276 = vmatprep.subr.bf16.mxu0 0
        %2277 = vmatpush1.bf16.msra.mxu0 0
        %2278 = vmatprep.subr.bf16.mxu0 0
        %2279 = vmatpush1.bf16.msra.mxu0 0
        %2280 = vmatprep.subr.bf16.mxu0 0
        %2281 = vmatpush1.bf16.msra.mxu0 0
        %2282 = vmatprep.subr.bf16.mxu0 0
        %2283 = vmatpush1.bf16.msra.mxu0 0
        %2284 = vmatprep.mubr.bf16.mxu0 0
        %2285 = vmatmul.mubr.bf16.gmra.mrb[0].mxu0 %v2201
        %v2286 = vpop.f32.mrb[0].mxu0
        %v2287 = vadd.f32 0.0, %v2286
        %v2288 = vpop.f32.mrb[0].mxu0
        %v2289 = vpop.f32.mrb[0].mxu0
        %v2290 = vadd.f32 0.0, %v2289
        %v2291 = vpop.f32.mrb[0].mxu0
        %2292 = vmatprep.mubr.bf16.mxu0 0
        %2293 = vmatmul.mubr.bf16.gmra.mrb[0].mxu0 %v2202
        %v2294 = vpop.f32.mrb[0].mxu0
        %v2295 = vadd.f32 0.0, %v2294
        %v2296 = vpop.f32.mrb[0].mxu0
        %v2297 = vpop.f32.mrb[0].mxu0
        %v2298 = vadd.f32 0.0, %v2297
        %v2299 = vpop.f32.mrb[0].mxu0
        %2300 = vmatprep.mubr.bf16.mxu0 0
        %2301 = vmatmul.mubr.bf16.gmra.mrb[0].mxu0 %v2203
        %v2302 = vpop.f32.mrb[0].mxu0
        %v2303 = vadd.f32 0.0, %v2302
        %v2304 = vpop.f32.mrb[0].mxu0
        %v2305 = vpop.f32.mrb[0].mxu0
        %v2306 = vadd.f32 0.0, %v2305
        %v2307 = vpop.f32.mrb[0].mxu0
        %2308 = vdwg.mxu0
        %v2309 = vmul.f32 %v2287, %v2287
        %v2310 = vmul.f32 %v2290, %v2290
        %v2311 = vmul.f32 %v2295, %v2295
        %v2312 = vmul.f32 %v2298, %v2298
        %v2313 = vadd.f32 %v2309, %v2311
        %v2314 = vadd.f32 %v2310, %v2312
        %v2315 = vmul.f32 %v2303, %v2303
        %v2316 = vmul.f32 %v2306, %v2306
        %v2317 = vadd.f32 %v2313, %v2315
        %v2318 = vadd.f32 %v2314, %v2316
        %v2319 = vadd.f32 %v2317, 1e-06
        %v2320 = vadd.f32 %v2318, 1e-06
        %v2321 = vrsqrt.pop %v2319
        %v2322 = vrsqrt.pop %v2320
        %v2323 = vmul.f32 %v2195, %v2287
        %v2324 = vmul.f32 %v2196, %v2290
        %v2325 = vmul.f32 %v2197, %v2295
        %v2326 = vmul.f32 %v2198, %v2298
        %v2327 = vadd.f32 %v2323, %v2325
        %v2328 = vadd.f32 %v2324, %v2326
        %v2329 = vmul.f32 %v2199, %v2303
        %v2330 = vmul.f32 %v2200, %v2306
        %v2331 = vadd.f32 %v2327, %v2329
        %v2332 = vadd.f32 %v2328, %v2330
        %v2333 = vmul.f32 %v2331, %v2321
        %v2334 = vmul.f32 %v2332, %v2322
        %vm2335 = vcmp.ge.f32.partialorder %v2333, 0.0
        %vm2336 = vcmp.ge.f32.partialorder %v2334, 0.0
        %v2337 = vmul.f32 %v2333, 0.2
        %v2338 = vmul.f32 %v2334, 0.2
        %v2339 = vsel %vm2335, %v2333, %v2337
        %v2340 = vsel %vm2336, %v2334, %v2338
        %v2341 = vsub.f32 %v2339, %v2333
        %v2342 = vsub.f32 %v2340, %v2334
        %v2343 = vmul.f32 %v2341, %v2321
        %v2344 = vmul.f32 %v2342, %v2322
        %v2345 = vmul.f32 %v2343, %v2287
        %v2346 = vmul.f32 %v2344, %v2290
        %v2347 = vmul.f32 %v2343, %v2295
        %v2348 = vmul.f32 %v2344, %v2298
        %v2349 = vmul.f32 %v2343, %v2303
        %v2350 = vmul.f32 %v2344, %v2306
        %v2351 = vadd.f32 %v2195, %v2345
        %v2352 = vadd.f32 %v2196, %v2346
        %v2353 = vadd.f32 %v2197, %v2347
        %v2354 = vadd.f32 %v2198, %v2348
        %v2355 = vadd.f32 %v2199, %v2349
        %v2356 = vadd.f32 %v2200, %v2350
        %vm2357 = vcmp.ge.f32.partialorder %v2193, 0.0
        %vm2358 = vcmp.ge.f32.partialorder %v2194, 0.0
        %v2359 = vmul.f32 %v2193, 0.2
        %v2360 = vmul.f32 %v2194, 0.2
        %v2361 = vsel %vm2357, %v2193, %v2359
        %v2362 = vsel %vm2358, %v2194, %v2360
        %v2363 = vadd.f32 %v2351, %v1724
        %v2364 = vadd.f32 %v2352, %v1725
        %v2365 = vadd.f32 %v2353, %v1726
        %v2366 = vadd.f32 %v2354, %v1727
        %v2367 = vadd.f32 %v2355, %v1728
        %v2368 = vadd.f32 %v2356, %v1729
        %v2369 = vadd.f32 %v2361, %v1730
        %v2370 = vadd.f32 %v2362, %v1731
        %v2371 = vld [vmem:[%s12] sm:$0xff]
        %v2372 = vld [vmem:[%s12 + $0x8] sm:$0xf]
        %v2373 = vld [vmem:[%s12 + $0xc] sm:$0xff]
        %v2374 = vld [vmem:[%s12 + $0x14] sm:$0xf]
        %v2375 = vld [vmem:[%s12 + $0x18] sm:$0xff]
        %v2376 = vld [vmem:[%s12 + $0x20] sm:$0xf]
        %v2377 = vld [vmem:[%s12 + $0x24] sm:$0xff]
        %v2378 = vld [vmem:[%s12 + $0x2c] sm:$0xf]
        %v2379 = vld [vmem:[%s12 + $0x30] sm:$0xff]
        %v2380 = vld [vmem:[%s12 + $0x38] sm:$0xf]
        %v2381 = vld [vmem:[%s12 + $0x3c] sm:$0xff]
        %v2382 = vld [vmem:[%s12 + $0x44] sm:$0xf]
        %v2383 = vld [vmem:[%s12 + $0x48] sm:$0xff]
        %v2384 = vld [vmem:[%s12 + $0x50] sm:$0xf]
        %v2385 = vld [vmem:[%s12 + $0x54] sm:$0xff]
        %v2386 = vld [vmem:[%s12 + $0x5c] sm:$0xf]
        %v2387 = vld [vmem:[%s12 + $0x60] sm:$0xff]
        %v2388 = vld [vmem:[%s12 + $0x68] sm:$0xf]
        %v2389 = vld [vmem:[%s12 + $0x6c] sm:$0xff]
        %v2390 = vld [vmem:[%s12 + $0x74] sm:$0xf]
        %v2391 = vld [vmem:[%s12 + $0x78] sm:$0xff]
        %v2392 = vld [vmem:[%s12 + $0x80] sm:$0xf]
        %v2393 = vld [vmem:[%s12 + $0x84] sm:$0xff]
        %v2394 = vld [vmem:[%s12 + $0x8c] sm:$0xf]
        %v2395 = vld [vmem:[%s12 + $0x90] sm:$0xff]
        %v2396 = vld [vmem:[%s12 + $0x98] sm:$0xf]
        %v2397 = vld [vmem:[%s12 + $0x9c] sm:$0xff]
        %v2398 = vld [vmem:[%s12 + $0xa4] sm:$0xf]
        %v2399 = vld [vmem:[%s12 + $0xa8] sm:$0xff]
        %v2400 = vld [vmem:[%s12 + $0xb0] sm:$0xf]
        %v2401 = vld [vmem:[%s12 + $0xb4] sm:$0xff]
        %v2402 = vld [vmem:[%s12 + $0xbc] sm:$0xf]
        %v2403 = vld [vmem:[%s13] sm:$0xff]
        %v2404 = vld [vmem:[%s13 + $0x8] sm:$0xff]
        %v2405 = vld [vmem:[%s13 + $0x10] sm:$0xff]
        %v2406 = vld [vmem:[%s13 + $0x18] sm:$0xff]
        %v2407 = vld [vmem:[%s13 + $0x20] sm:$0xff]
        %v2408 = vld [vmem:[%s13 + $0x28] sm:$0xff]
        %v2409 = vld [vmem:[%s13 + $0x30] sm:$0xff]
        %v2410 = vld [vmem:[%s13 + $0x38] sm:$0xff]
        %v2411 = vld [vmem:[%s13 + $0x40] sm:$0xff]
        %v2412 = vld [vmem:[%s13 + $0x48] sm:$0xff]
        %v2413 = vld [vmem:[%s13 + $0x50] sm:$0xff]
        %v2414 = vld [vmem:[%s13 + $0x58] sm:$0xff]
        %v2415 = vld [vmem:[%s13 + $0x60] sm:$0xff]
        %v2416 = vld [vmem:[%s13 + $0x68] sm:$0xff]
        %v2417 = vld [vmem:[%s13 + $0x70] sm:$0xff]
        %v2418 = vld [vmem:[%s13 + $0x78] sm:$0xff]
        %v2419 = vld [vmem:[%s14] sm:$0x3]
        %v2420 = vpack.c.bf16 %v2364, %v2363
        %v2421 = vpack.c.bf16 %v2366, %v2365
        %v2422 = vpack.c.bf16 %v2368, %v2367
        %v2455 = vunpack.c.l.b16 %v2371
        %v2456 = vunpack.c.h.b16 %v2371
        %v2457 = vunpack.c.l.b16 %v2372
        %v2458 = vunpack.c.l.b16 %v2373
        %v2459 = vunpack.c.h.b16 %v2373
        %v2460 = vunpack.c.l.b16 %v2374
        %v2461 = vunpack.c.l.b16 %v2375
        %v2462 = vunpack.c.h.b16 %v2375
        %v2463 = vunpack.c.l.b16 %v2376
        %v2464 = vunpack.c.l.b16 %v2377
        %v2465 = vunpack.c.h.b16 %v2377
        %v2466 = vunpack.c.l.b16 %v2378
        %v2467 = vunpack.c.l.b16 %v2379
        %v2468 = vunpack.c.h.b16 %v2379
        %v2469 = vunpack.c.l.b16 %v2380
        %v2470 = vunpack.c.l.b16 %v2381
        %v2471 = vunpack.c.h.b16 %v2381
        %v2472 = vunpack.c.l.b16 %v2382
        %v2473 = vunpack.c.l.b16 %v2383
        %v2474 = vunpack.c.h.b16 %v2383
        %v2475 = vunpack.c.l.b16 %v2384
        %v2476 = vunpack.c.l.b16 %v2385
        %v2477 = vunpack.c.h.b16 %v2385
        %v2478 = vunpack.c.l.b16 %v2386
        %v2479 = vunpack.c.l.b16 %v2387
        %v2480 = vunpack.c.h.b16 %v2387
        %v2481 = vunpack.c.l.b16 %v2388
        %v2482 = vunpack.c.l.b16 %v2389
        %v2483 = vunpack.c.h.b16 %v2389
        %v2484 = vunpack.c.l.b16 %v2390
        %v2485 = vunpack.c.l.b16 %v2391
        %v2486 = vunpack.c.h.b16 %v2391
        %v2487 = vunpack.c.l.b16 %v2392
        %v2488 = vunpack.c.l.b16 %v2393
        %v2489 = vunpack.c.h.b16 %v2393
        %v2490 = vunpack.c.l.b16 %v2394
        %v2491 = vunpack.c.l.b16 %v2395
        %v2492 = vunpack.c.h.b16 %v2395
        %v2493 = vunpack.c.l.b16 %v2396
        %v2494 = vunpack.c.l.b16 %v2397
        %v2495 = vunpack.c.h.b16 %v2397
        %v2496 = vunpack.c.l.b16 %v2398
        %v2497 = vunpack.c.l.b16 %v2399
        %v2498 = vunpack.c.h.b16 %v2399
        %v2499 = vunpack.c.l.b16 %v2400
        %v2500 = vunpack.c.l.b16 %v2401
        %v2501 = vunpack.c.h.b16 %v2401
        %v2502 = vunpack.c.l.b16 %v2402
        %v2503 = vpack.c.b16 %v2458, %v2455
        %v2504 = vpack.c.b16 %v2459, %v2456
        %v2505 = vpack.c.b16 %v2460, %v2457
        %v2506 = vpack.c.b16 %v2464, %v2461
        %v2507 = vpack.c.b16 %v2465, %v2462
        %v2508 = vpack.c.b16 %v2466, %v2463
        %v2509 = vpack.c.b16 %v2470, %v2467
        %v2510 = vpack.c.b16 %v2471, %v2468
        %v2511 = vpack.c.b16 %v2472, %v2469
        %v2512 = vpack.c.b16 %v2476, %v2473
        %v2513 = vpack.c.b16 %v2477, %v2474
        %v2514 = vpack.c.b16 %v2478, %v2475
        %v2515 = vpack.c.b16 %v2482, %v2479
        %v2516 = vpack.c.b16 %v2483, %v2480
        %v2517 = vpack.c.b16 %v2484, %v2481
        %v2518 = vpack.c.b16 %v2488, %v2485
        %v2519 = vpack.c.b16 %v2489, %v2486
        %v2520 = vpack.c.b16 %v2490, %v2487
        %v2521 = vpack.c.b16 %v2494, %v2491
        %v2522 = vpack.c.b16 %v2495, %v2492
        %v2523 = vpack.c.b16 %v2496, %v2493
        %v2524 = vpack.c.b16 %v2500, %v2497
        %v2525 = vpack.c.b16 %v2501, %v2498
        %v2526 = vpack.c.b16 %v2502, %v2499
        %2551 = vmatprep.subr.bf16.mxu0 %v2504
        %2552 = vmatpush1.bf16.msra.mxu0 %v2503
        %2553 = vmatprep.subr.bf16.mxu0 %v2507
        %2554 = vmatpush1.bf16.msra.mxu0 %v2506
        %2555 = vmatprep.subr.bf16.mxu0 %v2510
        %2556 = vmatpush1.bf16.msra.mxu0 %v2509
        %2557 = vmatprep.subr.bf16.mxu0 %v2513
        %2558 = vmatpush1.bf16.msra.mxu0 %v2512
        %2559 = vmatprep.subr.bf16.mxu0 %v2516
        %2560 = vmatpush1.bf16.msra.mxu0 %v2515
        %2561 = vmatprep.subr.bf16.mxu0 %v2519
        %2562 = vmatpush1.bf16.msra.mxu0 %v2518
        %2563 = vmatprep.subr.bf16.mxu0 %v2522
        %2564 = vmatpush1.bf16.msra.mxu0 %v2521
        %2565 = vmatprep.subr.bf16.mxu0 %v2525
        %2566 = vmatpush1.bf16.msra.mxu0 %v2524
        %2567 = vmatprep.subr.bf16.mxu0 0
        %2568 = vmatpush1.bf16.msra.mxu0 0
        %2569 = vmatprep.subr.bf16.mxu0 0
        %2570 = vmatpush1.bf16.msra.mxu0 0
        %2571 = vmatprep.subr.bf16.mxu0 0
        %2572 = vmatpush1.bf16.msra.mxu0 0
        %2573 = vmatprep.subr.bf16.mxu0 0
        %2574 = vmatpush1.bf16.msra.mxu0 0
        %2575 = vmatprep.subr.bf16.mxu0 0
        %2576 = vmatpush1.bf16.msra.mxu0 0
        %2577 = vmatprep.subr.bf16.mxu0 0
        %2578 = vmatpush1.bf16.msra.mxu0 0
        %2579 = vmatprep.subr.bf16.mxu0 0
        %2580 = vmatpush1.bf16.msra.mxu0 0
        %2581 = vmatprep.subr.bf16.mxu0 0
        %2582 = vmatpush1.bf16.msra.mxu0 0
        %2583 = vmatprep.mubr.bf16.mxu0 0
        %2584 = vmatmul.mubr.bf16.gmra.mrb[0].mxu0 %v2420
        %v2585 = vpop.f32.mrb[0].mxu0
        %v2586 = vadd.f32 0.0, %v2585
        %v2587 = vpop.f32.mrb[0].mxu0
        %v2588 = vadd.f32 0.0, %v2587
        %v2589 = vpop.f32.mrb[0].mxu0
        %v2590 = vadd.f32 0.0, %v2589
        %v2591 = vpop.f32.mrb[0].mxu0
        %v2592 = vadd.f32 0.0, %v2591
        %2593 = vmatprep.mubr.bf16.mxu0 0
        %2594 = vmatmul.mubr.bf16.gmra.mrb[0].mxu0 %v2421
        %v2595 = vpop.f32.mrb[0].mxu0
        %v2596 = vadd.f32 0.0, %v2595
        %v2597 = vpop.f32.mrb[0].mxu0
        %v2598 = vadd.f32 0.0, %v2597
        %v2599 = vpop.f32.mrb[0].mxu0
        %v2600 = vadd.f32 0.0, %v2599
        %v2601 = vpop.f32.mrb[0].mxu0
        %v2602 = vadd.f32 0.0, %v2601
        %2603 = vmatprep.mubr.bf16.mxu0 0
        %2604 = vmatmul.mubr.bf16.gmra.mrb[0].mxu0 %v2422
        %v2605 = vpop.f32.mrb[0].mxu0
        %v2606 = vadd.f32 0.0, %v2605
        %v2607 = vpop.f32.mrb[0].mxu0
        %v2608 = vadd.f32 0.0, %v2607
        %v2609 = vpop.f32.mrb[0].mxu0
        %v2610 = vadd.f32 0.0, %v2609
        %v2611 = vpop.f32.mrb[0].mxu0
        %v2612 = vadd.f32 0.0, %v2611
        %2613 = vdwg.mxu0
        %2614 = vmatprep.subr.bf16.mxu0 0
        %2615 = vmatpush1.bf16.msra.mxu0 %v2505
        %2616 = vmatprep.subr.bf16.mxu0 0
        %2617 = vmatpush1.bf16.msra.mxu0 %v2508
        %2618 = vmatprep.subr.bf16.mxu0 0
        %2619 = vmatpush1.bf16.msra.mxu0 %v2511
        %2620 = vmatprep.subr.bf16.mxu0 0
        %2621 = vmatpush1.bf16.msra.mxu0 %v2514
        %2622 = vmatprep.subr.bf16.mxu0 0
        %2623 = vmatpush1.bf16.msra.mxu0 %v2517
        %2624 = vmatprep.subr.bf16.mxu0 0
        %2625 = vmatpush1.bf16.msra.mxu0 %v2520
        %2626 = vmatprep.subr.bf16.mxu0 0
        %2627 = vmatpush1.bf16.msra.mxu0 %v2523
        %2628 = vmatprep.subr.bf16.mxu0 0
        %2629 = vmatpush1.bf16.msra.mxu0 %v2526
        %2630 = vmatprep.subr.bf16.mxu0 0
        %2631 = vmatpush1.bf16.msra.mxu0 0
        %2632 = vmatprep.subr.bf16.mxu0 0
        %2633 = vmatpush1.bf16.msra.mxu0 0
        %2634 = vmatprep.subr.bf16.mxu0 0
        %2635 = vmatpush1.bf16.msra.mxu0 0
        %2636 = vmatprep.subr.bf16.mxu0 0
        %2637 = vmatpush1.bf16.msra.mxu0 0
        %2638 = vmatprep.subr.bf16.mxu0 0
        %2639 = vmatpush1.bf16.msra.mxu0 0
        %2640 = vmatprep.subr.bf16.mxu0 0
        %2641 = vmatpush1.bf16.msra.mxu0 0
        %2642 = vmatprep.subr.bf16.mxu0 0
        %2643 = vmatpush1.bf16.msra.mxu0 0
        %2644 = vmatprep.subr.bf16.mxu0 0
        %2645 = vmatpush1.bf16.msra.mxu0 0
        %2646 = vmatprep.mubr.bf16.mxu0 0
        %2647 = vmatmul.mubr.bf16.gmra.mrb[0].mxu0 %v2420
        %v2648 = vpop.f32.mrb[0].mxu0
        %v2649 = vadd.f32 0.0, %v2648
        %v2650 = vpop.f32.mrb[0].mxu0
        %v2651 = vpop.f32.mrb[0].mxu0
        %v2652 = vadd.f32 0.0, %v2651
        %v2653 = vpop.f32.mrb[0].mxu0
        %2654 = vmatprep.mubr.bf16.mxu0 0
        %2655 = vmatmul.mubr.bf16.gmra.mrb[0].mxu0 %v2421
        %v2656 = vpop.f32.mrb[0].mxu0
        %v2657 = vadd.f32 0.0, %v2656
        %v2658 = vpop.f32.mrb[0].mxu0
        %v2659 = vpop.f32.mrb[0].mxu0
        %v2660 = vadd.f32 0.0, %v2659
        %v2661 = vpop.f32.mrb[0].mxu0
        %2662 = vmatprep.mubr.bf16.mxu0 0
        %2663 = vmatmul.mubr.bf16.gmra.mrb[0].mxu0 %v2422
        %v2664 = vpop.f32.mrb[0].mxu0
        %v2665 = vadd.f32 0.0, %v2664
        %v2666 = vpop.f32.mrb[0].mxu0
        %v2667 = vpop.f32.mrb[0].mxu0
        %v2668 = vadd.f32 0.0, %v2667
        %v2669 = vpop.f32.mrb[0].mxu0
        %2670 = vdwg.mxu0
        %v2671 = vpack.c.bf16 %v2370, %v2369
        %v2673 = vlaneseq
        %v2674 = vshrl.u32 %v2673, 7
        %v2675 = vsub.s32 0, %v2674
        %v2676 = vrot.slane %v2419, %v2675
        %v2677 = vlaneseq
        %v2678 = vshrl.u32 %v2677, 7
        %v2679 = vsub.s32 1, %v2678
        %v2680 = vrot.slane %v2419, %v2679
        %v2699 = vunpack.c.l.b16 %v2403
        %v2700 = vunpack.c.h.b16 %v2403
        %v2701 = vunpack.c.l.b16 %v2404
        %v2702 = vunpack.c.h.b16 %v2404
        %v2703 = vunpack.c.l.b16 %v2405
        %v2704 = vunpack.c.h.b16 %v2405
        %v2705 = vunpack.c.l.b16 %v2406
        %v2706 = vunpack.c.h.b16 %v2406
        %v2707 = vunpack.c.l.b16 %v2407
        %v2708 = vunpack.c.h.b16 %v2407
        %v2709 = vunpack.c.l.b16 %v2408
        %v2710 = vunpack.c.h.b16 %v2408
        %v2711 = vunpack.c.l.b16 %v2409
        %v2712 = vunpack.c.h.b16 %v2409
        %v2713 = vunpack.c.l.b16 %v2410
        %v2714 = vunpack.c.h.b16 %v2410
        %v2715 = vunpack.c.l.b16 %v2411
        %v2716 = vunpack.c.h.b16 %v2411
        %v2717 = vunpack.c.l.b16 %v2412
        %v2718 = vunpack.c.h.b16 %v2412
        %v2719 = vunpack.c.l.b16 %v2413
        %v2720 = vunpack.c.h.b16 %v2413
        %v2721 = vunpack.c.l.b16 %v2414
        %v2722 = vunpack.c.h.b16 %v2414
        %v2723 = vunpack.c.l.b16 %v2415
        %v2724 = vunpack.c.h.b16 %v2415
        %v2725 = vunpack.c.l.b16 %v2416
        %v2726 = vunpack.c.h.b16 %v2416
        %v2727 = vunpack.c.l.b16 %v2417
        %v2728 = vunpack.c.h.b16 %v2417
        %v2729 = vunpack.c.l.b16 %v2418
        %v2730 = vunpack.c.h.b16 %v2418
        %v2731 = vpack.c.b16 %v2701, %v2699
        %v2732 = vpack.c.b16 %v2702, %v2700
        %v2733 = vpack.c.b16 %v2705, %v2703
        %v2734 = vpack.c.b16 %v2706, %v2704
        %v2735 = vpack.c.b16 %v2709, %v2707
        %v2736 = vpack.c.b16 %v2710, %v2708
        %v2737 = vpack.c.b16 %v2713, %v2711
        %v2738 = vpack.c.b16 %v2714, %v2712
        %v2739 = vpack.c.b16 %v2717, %v2715
        %v2740 = vpack.c.b16 %v2718, %v2716
        %v2741 = vpack.c.b16 %v2721, %v2719
        %v2742 = vpack.c.b16 %v2722, %v2720
        %v2743 = vpack.c.b16 %v2725, %v2723
        %v2744 = vpack.c.b16 %v2726, %v2724
        %v2745 = vpack.c.b16 %v2729, %v2727
        %v2746 = vpack.c.b16 %v2730, %v2728
        %2763 = vmatprep.subr.bf16.mxu0 %v2732
        %2764 = vmatpush1.bf16.msra.mxu0 %v2731
        %2765 = vmatprep.subr.bf16.mxu0 %v2734
        %2766 = vmatpush1.bf16.msra.mxu0 %v2733
        %2767 = vmatprep.subr.bf16.mxu0 %v2736
        %2768 = vmatpush1.bf16.msra.mxu0 %v2735
        %2769 = vmatprep.subr.bf16.mxu0 %v2738
        %2770 = vmatpush1.bf16.msra.mxu0 %v2737
        %2771 = vmatprep.subr.bf16.mxu0 %v2740
        %2772 = vmatpush1.bf16.msra.mxu0 %v2739
        %2773 = vmatprep.subr.bf16.mxu0 %v2742
        %2774 = vmatpush1.bf16.msra.mxu0 %v2741
        %2775 = vmatprep.subr.bf16.mxu0 %v2744
        %2776 = vmatpush1.bf16.msra.mxu0 %v2743
        %2777 = vmatprep.subr.bf16.mxu0 %v2746
        %2778 = vmatpush1.bf16.msra.mxu0 %v2745
        %2779 = vmatprep.subr.bf16.mxu0 0
        %2780 = vmatpush1.bf16.msra.mxu0 0
        %2781 = vmatprep.subr.bf16.mxu0 0
        %2782 = vmatpush1.bf16.msra.mxu0 0
        %2783 = vmatprep.subr.bf16.mxu0 0
        %2784 = vmatpush1.bf16.msra.mxu0 0
        %2785 = vmatprep.subr.bf16.mxu0 0
        %2786 = vmatpush1.bf16.msra.mxu0 0
        %2787 = vmatprep.subr.bf16.mxu0 0
        %2788 = vmatpush1.bf16.msra.mxu0 0
        %2789 = vmatprep.subr.bf16.mxu0 0
        %2790 = vmatpush1.bf16.msra.mxu0 0
        %2791 = vmatprep.subr.bf16.mxu0 0
        %2792 = vmatpush1.bf16.msra.mxu0 0
        %2793 = vmatprep.subr.bf16.mxu0 0
        %2794 = vmatpush1.bf16.msra.mxu0 0
        %2795 = vmatprep.mubr.bf16.mxu0 0
        %2796 = vmatmul.mubr.bf16.gmra.mrb[0].mxu0 %v2671
        %v2797 = vpop.f32.mrb[0].mxu0
        %v2798 = vadd.f32 %v2676, %v2797
        %v2799 = vpop.f32.mrb[0].mxu0
        %v2800 = vadd.f32 %v2680, %v2799
        %v2801 = vpop.f32.mrb[0].mxu0
        %v2802 = vadd.f32 %v2676, %v2801
        %v2803 = vpop.f32.mrb[0].mxu0
        %v2804 = vadd.f32 %v2680, %v2803
        %2805 = vdwg.mxu0
        %v2806 = vmul.f32 %v2588, %v2649
        %v2807 = vmul.f32 %v2592, %v2652
        %v2808 = vmul.f32 %v2598, %v2657
        %v2809 = vmul.f32 %v2602, %v2660
        %v2810 = vmul.f32 %v2608, %v2665
        %v2811 = vmul.f32 %v2612, %v2668
        %v2812 = vadd.f32 %v2806, %v2808
        %v2813 = vadd.f32 %v2807, %v2809
        %v2814 = vadd.f32 %v2812, %v2810
        %v2815 = vadd.f32 %v2813, %v2811
        %v2816 = vadd.f32 %v2814, %v2800
        %v2817 = vadd.f32 %v2815, %v2804
        %v2818 = vmul.f32 %v2586, %v2798
        %v2819 = vmul.f32 %v2590, %v2802
        %v2820 = vmul.f32 %v2596, %v2798
        %v2821 = vmul.f32 %v2600, %v2802
        %v2822 = vmul.f32 %v2606, %v2798
        %v2823 = vmul.f32 %v2610, %v2802
        %v2824 = vpack.c.bf16 %v2819, %v2818
        %v2825 = vpack.c.bf16 %v2821, %v2820
        %v2826 = vpack.c.bf16 %v2823, %v2822
        %v2830 = vunpack.c.l.b16 %v2824
        %v2831 = vunpack.c.h.b16 %v2824
        %v2832 = vunpack.c.l.b16 %v2825
        %v2833 = vunpack.c.h.b16 %v2825
        %v2834 = vunpack.c.l.b16 %v2826
        %v2835 = vunpack.c.h.b16 %v2826
        %v2836 = vpack.c.b16 %v2830, %v2830
        %v2837 = vpack.c.b16 %v2831, %v2831
        %v2838 = vpack.c.b16 %v2832, %v2832
        %v2839 = vpack.c.b16 %v2833, %v2833
        %v2840 = vpack.c.b16 %v2834, %v2834
        %v2841 = vpack.c.b16 %v2835, %v2835
        %2848 = vst [vmem:[%s603] sm:$0xf] %v2836
        %2849 = vst [vmem:[%s603 + $0x4] sm:$0xf] %v2837
        %2850 = vst [vmem:[%s603 + $0x8] sm:$0xf] %v2838
        %2851 = vst [vmem:[%s603 + $0xc] sm:$0xf] %v2839
        %2852 = vst [vmem:[%s603 + $0x10] sm:$0xf] %v2840
        %2853 = vst [vmem:[%s603 + $0x14] sm:$0xf] %v2841
        %v2854 = vpack.c.bf16 %v2817, %v2816
        %v2856 = vunpack.c.l.b16 %v2854
        %v2857 = vunpack.c.h.b16 %v2854
        %v2858 = vpack.c.b16 %v2856, %v2856
        %v2859 = vpack.c.b16 %v2857, %v2857
        %2862 = vst [vmem:[%s629] sm:$0xf] %v2858
        %2863 = vst [vmem:[%s629 + $0x4] sm:$0xf] %v2859
        %s2864 = sand.u32 %s366, 1
        %s2865 = sand.u32 %s366, 1
        %s2866 = smul.addr %s2865, 24
        %s2867 = scalar_lea.vmem [#allocation3], %s2866
        %s2868 = smul.u32 2, %s28
        %p2869 = scmp.lt.s32.totalorder %s2868, 3
        %s2870 = scalar_select %p2869, %s2868, 3
        %s2871 = smul.addr %s2870, 4
        %s2872 = scalar_lea.vmem %s16, %s2871
        // Predicated region
        $region119: #{fwd.1} parent=113 // pred_check
          %p2873 = pneg %p376
        $region120: #{fwd.1} parent=113 // pred_check_branch
          %2875 = sbr.rel (%p2873) target = $region122
        $region121: #{fwd.1} parent=113 // pred_region
          %s2876 = smul.u32 2, %s28
          %s2877 = smul.addr %s2876, 4
          %s2878 = scalar_lea.vmem %s15, %s2877
          // Predicated region
          $region123: #{fwd.1} parent=121 // pred_check
            _
          $region124: #{fwd.1} parent=121 // pred_check_branch
            %2880 = sbr.rel (0) target = $region126
          $region125: #{fwd.1} parent=121 // pred_region
            // Predicated region
            $region127: #{fwd.1} parent=125 // pred_check
              _
            $region128: #{fwd.1} parent=125 // pred_check_branch
              %2882 = sbr.rel target = $region130
            $region129: #{fwd.1} parent=125 // pred_region
              // Predicated region
              $region142: #{fwd.1} parent=129 // pred_check
                _
              $region143: #{fwd.1} parent=129 // pred_check_branch
                %2907 = sbr.rel (0) target = $region145
              $region144: #{fwd.1} parent=129 // pred_region
                loop: start=0, step=1, limit=1
                $region146: #{fwd.1} parent=144 // loop_pre_header
                  _
                $region147: #{fwd.1} parent=144 // loop_header
                  %s2909 = sphi 0, %s2913
                  %p2910 = scmp.ge.s32.totalorder %s2909, 1
                  %s2914 = sphi %s2867, %s2867
                  %s2915 = sphi %s2878, %s2878
                $region148: #{fwd.1} parent=144 // loop_header_branch
                  %2912 = sbr.rel (%p2910) target = $region152
                $region149: #{fwd.1} parent=144 // loop_body
                  _
                $region150: #{fwd.1} parent=144 // loop_footer
                  %s2913 = sadd.s32 1, %s2909
                $region151: #{fwd.1} parent=144 // loop_footer_branch
                  %2908 = sbr.rel target = $region147
                $region152: #{fwd.1} parent=144 // loop_exit
                  _
                loop: start=0, step=1, limit=1
                $region153: #{fwd.1} parent=144 // loop_pre_header
                  _
                $region154: #{fwd.1} parent=144 // loop_header
                  %s2918 = sphi 0, %s2922
                  %p2919 = scmp.ge.s32.totalorder %s2918, 1
                  %s2923 = sphi %s2867, %s2867
                  %s2924 = sphi %s2878, %s2878
                $region155: #{fwd.1} parent=144 // loop_header_branch
                  %2921 = sbr.rel (%p2919) target = $region159
                $region156: #{fwd.1} parent=144 // loop_body
                  %v2925 = vld [vmem:[%s2923] sm:$0xf]
                  %2926 = vst [vmem:[%s2924] sm:$0xf] %v2925
                  %v2927 = vld [vmem:[%s2923 + $0x4] sm:$0xf]
                  %2928 = vst [vmem:[%s2924 + $0x4] sm:$0xf] %v2927
                  %v2929 = vld [vmem:[%s2923 + $0x8] sm:$0xf]
                  %2930 = vst [vmem:[%s2924 + $0x10] sm:$0xf] %v2929
                  %v2931 = vld [vmem:[%s2923 + $0xc] sm:$0xf]
                  %2932 = vst [vmem:[%s2924 + $0x14] sm:$0xf] %v2931
                  %v2933 = vld [vmem:[%s2923 + $0x10] sm:$0xf]
                  %2934 = vst [vmem:[%s2924 + $0x20] sm:$0xf] %v2933
                  %v2935 = vld [vmem:[%s2923 + $0x14] sm:$0xf]
                  %2936 = vst [vmem:[%s2924 + $0x24] sm:$0xf] %v2935
                $region157: #{fwd.1} parent=144 // loop_footer
                  %s2922 = sadd.s32 1, %s2918
                $region158: #{fwd.1} parent=144 // loop_footer_branch
                  %2917 = sbr.rel target = $region154
                $region159: #{fwd.1} parent=144 // loop_exit
                  _
              $region145: #{fwd.1} parent=129 // pred_fallthru
                _
            $region130: #{fwd.1} parent=125 // pred_fallthru
              _
            // Predicated region
            $region131: #{fwd.1} parent=125 // pred_check
              _
            $region132: #{fwd.1} parent=125 // pred_check_branch
              %2884 = sbr.rel (0) target = $region134
            $region133: #{fwd.1} parent=125 // pred_region
              loop: start=0, step=1, limit=1
              $region135: #{fwd.1} parent=133 // loop_pre_header
                _
              $region136: #{fwd.1} parent=133 // loop_header
                %s2887 = sphi 0, %s2891
                %p2888 = scmp.ge.s32.totalorder %s2887, 1
                %s2892 = sphi %s2867, %s2867
                %s2893 = sphi %s2878, %s2878
              $region137: #{fwd.1} parent=133 // loop_header_branch
                %2890 = sbr.rel (%p2888) target = $region141
              $region138: #{fwd.1} parent=133 // loop_body
                %v2894 = vld [vmem:[%s2892] sm:$0xf]
                %2895 = vst [vmem:[%s2893] sm:$0xf] %v2894
                %v2896 = vld [vmem:[%s2892 + $0x4] sm:$0xf]
                %2897 = vst [vmem:[%s2893 + $0x4] sm:$0xf] %v2896
                %v2898 = vld [vmem:[%s2892 + $0x8] sm:$0xf]
                %2899 = vst [vmem:[%s2893 + $0x10] sm:$0xf] %v2898
                %v2900 = vld [vmem:[%s2892 + $0xc] sm:$0xf]
                %2901 = vst [vmem:[%s2893 + $0x14] sm:$0xf] %v2900
                %v2902 = vld [vmem:[%s2892 + $0x10] sm:$0xf]
                %2903 = vst [vmem:[%s2893 + $0x20] sm:$0xf] %v2902
                %v2904 = vld [vmem:[%s2892 + $0x14] sm:$0xf]
                %2905 = vst [vmem:[%s2893 + $0x24] sm:$0xf] %v2904
              $region139: #{fwd.1} parent=133 // loop_footer
                %s2891 = sadd.s32 1, %s2887
              $region140: #{fwd.1} parent=133 // loop_footer_branch
                %2886 = sbr.rel target = $region136
              $region141: #{fwd.1} parent=133 // loop_exit
                _
            $region134: #{fwd.1} parent=125 // pred_fallthru
              _
          $region126: #{fwd.1} parent=121 // pred_fallthru
            _
          %2937 = vnop
        $region122: #{fwd.1} parent=113 // pred_fallthru
          _
        // Predicated region
        $region160: #{fwd.1} parent=113 // pred_check
          %p2938 = pneg %p402
        $region161: #{fwd.1} parent=113 // pred_check_branch
          %2940 = sbr.rel (%p2938) target = $region163
        $region162: #{fwd.1} parent=113 // pred_region
          %s2941 = smul.u32 2, %s28
        $region163: #{fwd.1} parent=113 // pred_fallthru
          _
      $region114: #{fwd.1} parent=5 // pred_fallthru
        _
      %p2942 = scmp.le.s32.totalorder 2, %s23
      // Predicated region
      $region164: #{fwd.1} parent=5 // pred_check
        %p2943 = pneg %p2942
      $region165: #{fwd.1} parent=5 // pred_check_branch
        %2945 = sbr.rel (%p2943) target = $region167
      $region166: #{fwd.1} parent=5 // pred_region
        %s2946 = ssub.s32 %s23, 2
        // Predicated region
        $region168: #{fwd.1} parent=166 // pred_check
          %p2947 = pneg %p382
        $region169: #{fwd.1} parent=166 // pred_check_branch
          %2949 = sbr.rel (%p2947) target = $region171
        $region170: #{fwd.1} parent=166 // pred_region
          %s2950 = sand.u32 %s367, 1
          %s2951 = sand.u32 %s367, 1
          %s2952 = smul.addr %s2951, 24
          %s2953 = scalar_lea.vmem [#allocation3], %s2952
        $region171: #{fwd.1} parent=166 // pred_fallthru
          _
        // Predicated region
        $region172: #{fwd.1} parent=166 // pred_check
          %p2954 = pneg %p408
        $region173: #{fwd.1} parent=166 // pred_check_branch
          %2956 = sbr.rel (%p2954) target = $region175
        $region174: #{fwd.1} parent=166 // pred_region
          %s2957 = smul.u32 2, %s29
          %p2958 = scmp.lt.s32.totalorder %s2957, 3
          %s2959 = scalar_select %p2958, %s2957, 3
          %s2960 = smul.addr %s2959, 4
          %s2961 = scalar_lea.vmem %s16, %s2960
        $region175: #{fwd.1} parent=166 // pred_fallthru
          _
      $region167: #{fwd.1} parent=5 // pred_fallthru
        _
    $region6: #{fwd.1} parent=1 // loop_footer
      %s27 = sadd.s32 1, %s23
    $region7: #{fwd.1} parent=1 // loop_footer_branch
      %22 = sbr.rel target = $region3
    $region8: #{fwd.1} parent=1 // loop_exit
      _

</llo_original>
